<compile_context>
chip_gen: v6e
topology: v6e:2x2x1
jax: 0.10.0
libtpu: 0.0.40
codegen_flags: <defaults>
</compile_context>

<pallas_src>
import functools

import jax
import jax.numpy as jnp
from jax.experimental import pallas as pl
from jax.experimental.pallas import tpu as pltpu


# =============================================================================
# Weight prep (plain JAX, runs once): BN folding + lowering every layer to
# (vertical transform, stacked horizontal/channel matrix R, bias).
# =============================================================================
def fold_bn(conv, bn, eps=1e-5):
    """Fold eval-mode BatchNorm into the preceding conv's weight/bias."""
    scale = bn["gamma"] / jnp.sqrt(bn["var"] + eps)
    w = conv["w"] * scale[:, None, None, None]
    b = (conv["b"] - bn["mean"]) * scale + bn["beta"]
    return w, b


def _col_mix_conv(w, dy, w_in, w_out, stride, pad):
    # w: (cout, cin, k, k), PyTorch Conv2d layout (BN already folded).
    cout, cin, k, _ = w.shape
    wi = jnp.arange(w_in)[:, None]
    wo = jnp.arange(w_out)[None, :]
    dx = wi - stride * wo + pad                                        # (w_in, w_out)
    sel = (dx >= 0) & (dx < k)
    taps = jnp.transpose(w[:, :, dy, :], (2, 1, 0))                    # (k, cin, cout)
    r = taps[jnp.clip(dx, 0, k - 1)] * sel[:, :, None, None]           # (w_in, w_out, cin, cout)
    return jnp.transpose(r, (0, 2, 1, 3)).reshape(w_in * cin, w_out * cout)


def _col_mix_convt(w, dy, w_in, w_out):
    # w: (cin, cout, 2, 2), PyTorch ConvTranspose2d layout.
    cin, cout, k, _ = w.shape
    wi = jnp.arange(w_in)[:, None]
    wo = jnp.arange(w_out)[None, :]
    dx = wo - 2 * wi                                                   # (w_in, w_out)
    sel = (dx >= 0) & (dx < k)
    taps = jnp.transpose(w[:, :, dy, :], (2, 0, 1))                    # (k, cin, cout)
    r = taps[jnp.clip(dx, 0, k - 1)] * sel[:, :, None, None]
    return jnp.transpose(r, (0, 2, 1, 3)).reshape(w_in * cin, w_out * cout)


def prepare_model(params, n, h, w, cin_pad=8):
    """Fold BN, stack taps, build block-diag Sy, and pack weights into slabs."""
    layers = []

    def conv_r_bias(wt, b, w_in, stride, pad):
        cout, cin, k, _ = wt.shape
        w_out = (w_in + 2 * pad - k) // stride + 1
        r = jnp.concatenate(
            [_col_mix_conv(wt, dy, w_in, w_out, stride, pad) for dy in range(k)], axis=0)
        bias = jnp.tile(b, w_out)[None, :]
        return r, bias

    def convt_r_bias(wt, b, w_in):
        cin, cout, k, _ = wt.shape
        w_out = 2 * w_in
        r = jnp.concatenate(
            [_col_mix_convt(wt, dy, w_in, w_out) for dy in range(k)], axis=0)
        bias = jnp.tile(b, w_out)[None, :]
        return r, bias

    def sy_conv(k, h_in, stride, pad):
        # tap-stacked, block-diagonal (over the N batch images) row-selection matrix
        h_out = (h_in + 2 * pad - k) // stride + 1
        eye = jnp.eye(n, dtype=jnp.float32)
        mats = []
        for dy in range(k):
            ho = jnp.arange(h_out)[:, None]
            hi = jnp.arange(h_in)[None, :]
            m = (hi == stride * ho + dy - pad).astype(jnp.float32)
            mats.append(jnp.kron(eye, m))
        return jnp.concatenate(mats, axis=0), h_out                    # (k*n*h_out, n*h_in)

    def sy_convt(h_in):
        h_out = 2 * h_in
        eye = jnp.eye(n, dtype=jnp.float32)
        mats = []
        for dy in range(2):
            ho = jnp.arange(h_out)[:, None]
            hi = jnp.arange(h_in)[None, :]
            m = (2 * hi + dy == ho).astype(jnp.float32)
            mats.append(jnp.kron(eye, m))
        return jnp.concatenate(mats, axis=0), h_out

    def add_s1(wt, b, h_img, w_in, relu):                              # 3x3, stride 1, pad 1
        r, bias = conv_r_bias(wt, b, w_in, 1, 1)
        layers.append(dict(kind="s1", h_img=h_img, r=r, bias=bias, relu=relu))

    def add_id(wt, b, w_in, relu):                                     # 1x1, stride 1, pad 0
        r, bias = conv_r_bias(wt, b, w_in, 1, 0)
        layers.append(dict(kind="id", r=r, bias=bias, relu=relu))

    def add_sy_conv(wt, b, h_in, w_in, stride, pad, relu):             # 3x3, stride 2
        r, bias = conv_r_bias(wt, b, w_in, stride, pad)
        sy, h_out = sy_conv(wt.shape[-1], h_in, stride, pad)
        layers.append(dict(kind="sy", r=r, bias=bias, relu=relu, sy=sy,
                           taps=wt.shape[-1], nh_out=n * h_out, nh_in=n * h_in))

    def add_sy_convt(wt, b, h_in, w_in, relu):                         # ConvT, k=2, s=2
        r, bias = convt_r_bias(wt, b, w_in)
        sy, h_out = sy_convt(h_in)
        layers.append(dict(kind="sy", r=r, bias=bias, relu=relu, sy=sy,
                           taps=2, nh_out=n * h_out, nh_in=n * h_in))

    # ---- register the 13 layers in forward order (relu folded into each spec) ----
    wt, b = fold_bn(params["dc1_conv1"], params["dc1_bn1"])
    wt = jnp.pad(wt, ((0, 0), (0, cin_pad - wt.shape[1]), (0, 0), (0, 0)))   # cin 4 -> 8
    add_s1(wt, b, h, w, True)                                                # 0
    wt, b = fold_bn(params["dc1_conv2"], params["dc1_bn2"])
    add_s1(wt, b, h, w, True)                                                # 1
    add_sy_convt(params["up_ct"]["w"], params["up_ct"]["b"], h, w, True)     # 2
    add_s1(params["up_c1"]["w"], params["up_c1"]["b"], 2 * h, 2 * w, True)   # 3
    add_s1(params["up_c2"]["w"], params["up_c2"]["b"], 2 * h, 2 * w, True)   # 4
    add_sy_conv(params["up_c3"]["w"], params["up_c3"]["b"], 2 * h, 2 * w, 2, 1, True)  # 5
    wt, b = fold_bn(params["dc2_conv1"], params["dc2_bn1"])
    add_s1(wt, b, h, w, True)                                                # 6
    wt, b = fold_bn(params["dc2_conv2"], params["dc2_bn2"])
    add_s1(wt, b, h, w, True)                                                # 7
    add_sy_conv(params["dn_c1"]["w"], params["dn_c1"]["b"], h, w, 2, 1, True)       # 8
    add_s1(params["dn_c2"]["w"], params["dn_c2"]["b"], h // 2, w // 2, True)        # 9
    add_s1(params["dn_c3"]["w"], params["dn_c3"]["b"], h // 2, w // 2, True)        # 10
    add_sy_convt(params["dn_ct"]["w"], params["dn_ct"]["b"], h // 2, w // 2, True)  # 11
    add_id(params["fin"]["w"], params["fin"]["b"], w, False)                        # 12

    # ---- pack all R / bias into two lane-dense slabs; keep Sy as 4 tiny arrays ----
    out_lanes = max(int(l["r"].shape[1]) for l in layers)
    for l in layers[:-1]:               # interior layers must share the lane width
        assert int(l["r"].shape[1]) == out_lanes, (l["r"].shape, out_lanes)

    specs, r_parts, b_parts, sy_parts = [], [], [], []
    k_off = 0
    for l in layers:
        r, bias = l["r"], l["bias"]
        pad_c = out_lanes - int(r.shape[1])
        if pad_c:                       # only the final 1x1 conv -> lane-dense output
            r = jnp.pad(r, ((0, 0), (0, pad_c)))
            bias = jnp.pad(bias, ((0, 0), (0, pad_c)))
        spec = dict(kind=l["kind"], relu=l["relu"],
                    k_off=k_off, k_size=int(r.shape[0]), b_idx=len(b_parts),
                    h_img=l.get("h_img"), taps=l.get("taps"),
                    nh_out=l.get("nh_out"), nh_in=l.get("nh_in"),
                    sy_idx=len(sy_parts) if l["kind"] == "sy" else None)
        if l["kind"] == "sy":
            sy_parts.append(l["sy"])
        r_parts.append(r)
        b_parts.append(bias)
        k_off += int(r.shape[0])
        specs.append(spec)

    packed = dict(r_all=jnp.concatenate(r_parts, axis=0),     # (sum_K, 128)  ~2.2 MiB
                  b_all=jnp.concatenate(b_parts, axis=0),     # (13, 128)
                  sy=tuple(sy_parts))                         # 4 tiny tap-stacked Sy
    meta = dict(layers=tuple(specs), n=n, h=h, w=w,
                cin_pad=cin_pad, out_lanes=out_lanes)
    return meta, packed


# =============================================================================
# The single fused Pallas kernel: whole forward pass, both images, VMEM-resident.
# =============================================================================
def _sin1_fused_kernel(meta, *refs):
    layer_specs = meta["layers"]
    n_sy = sum(1 for s in layer_specs if s["kind"] == "sy")
    a_ref, r_ref, b_ref = refs[0], refs[1], refs[2]
    sy_refs = refs[3:3 + n_sy]
    out_ref = refs[-1]

    def vshift(x, delta, h_img):
        # out[r] = x[r + delta] if row r+delta lies inside the same image, else 0.
        n_rows = x.shape[0]
        shifted = pltpu.roll(x, (-delta) % n_rows, 0)          # sublane rotation (XLU)
        ridx = jax.lax.broadcasted_iota(jnp.int32, x.shape, 0)
        bad = 0 if delta < 0 else h_img - 1                    # image-boundary rows -> 0
        return jnp.where((ridx % h_img) == bad, 0.0, shifted)

    def run_layer(spec, x):
        kind = spec["kind"]
        if kind == "s1":                      # 3x3 stride-1 pad-1: taps via roll, no Sy matmul
            hi = spec["h_img"]
            rows = jnp.concatenate(
                [vshift(x, -1, hi), x, vshift(x, +1, hi)], axis=1)
        elif kind == "id":                    # final 1x1 conv: identity rows
            rows = x
        else:                                 # "sy": stride-2 conv / ConvTranspose
            sy = sy_refs[spec["sy_idx"]][...]                   # (taps*NHo, NHi), block-diag
            allr = jnp.dot(sy, x, preferred_element_type=jnp.float32)
            nho = spec["nh_out"]
            rows = jnp.concatenate(
                [allr[t * nho:(t + 1) * nho, :] for t in range(spec["taps"])], axis=1)
        rmat = r_ref[pl.ds(spec["k_off"], spec["k_size"]), :]   # static slice of the R slab
        y = jnp.dot(rows, rmat, preferred_element_type=jnp.float32)   # ONE matmul per layer
        y = y + b_ref[pl.ds(spec["b_idx"], 1), :]
        if spec["relu"]:
            y = jnp.maximum(y, 0.0)
        return y

    f = a_ref[...]                             # (N*H, 128) lane-dense input slab
    f = run_layer(layer_specs[0], f)           # doubleconv
    f = run_layer(layer_specs[1], f)
    u = run_layer(layer_specs[2], f)           # upconv branch (ConvT -> 2H x 2W)
    u = run_layer(layer_specs[3], u)
    u = run_layer(layer_specs[4], u)
    u = run_layer(layer_specs[5], u)           # stride-2 conv -> back to H x W
    f = f * u                                  # attention gate 1 (fused, VMEM)
    f = run_layer(layer_specs[6], f)           # doubleconv2
    f = run_layer(layer_specs[7], f)
    d = run_layer(layer_specs[8], f)           # downconv branch (-> H/2 x W/2)
    d = run_layer(layer_specs[9], d)
    d = run_layer(layer_specs[10], d)
    d = run_layer(layer_specs[11], d)          # ConvT -> back to H x W
    f = f * d                                  # attention gate 2 (fused, VMEM)
    out_ref[...] = run_layer(layer_specs[12], f)   # final 1x1 conv, no ReLU


def make_forward(meta):
    n, h, w = meta["n"], meta["h"], meta["w"]
    cin_pad, out_lanes = meta["cin_pad"], meta["out_lanes"]
    kernel = functools.partial(_sin1_fused_kernel, meta)
    n_inputs = 3 + 4                                           # a, r_all, b_all, 4x sy
    vmem = pl.BlockSpec(memory_space=pltpu.MemorySpace.VMEM)   # whole array, VMEM-resident

    @jax.jit
    def forward(packed, origin_nchw, coarse_nchw):
        x = jnp.concatenate([origin_nchw, coarse_nchw], axis=1)          # (N, 4, H, W)
        x = jnp.transpose(x, (0, 2, 3, 1)).astype(jnp.float32)           # NHWC
        x = jnp.pad(x, ((0, 0), (0, 0), (0, 0), (0, cin_pad - x.shape[-1])))
        a = x.reshape(n * h, w * cin_pad)                                # (N*H, 128) slab

        out = pl.pallas_call(
            kernel,
            out_shape=jax.ShapeDtypeStruct((n * h, out_lanes), jnp.float32),
            in_specs=[vmem] * n_inputs,
            out_specs=vmem,
        )(a, packed["r_all"], packed["b_all"], *packed["sy"])

        out = out.reshape(n, h, out_lanes)[:, :, :w]                     # (N, H, W)
        return out[:, None, :, :]                                        # NCHW (N, 1, H, W)

    return forward


# =============================================================================
# Pure-JAX reference (im2col formulation) used only for the correctness check.
# =============================================================================
def _im2col(x, ksize, stride, pad):
    n, h, w, c = x.shape
    xp = jnp.pad(x, ((0, 0), (pad, pad), (pad, pad), (0, 0)))
    ho = (h + 2 * pad - ksize) // stride + 1
    wo = (w + 2 * pad - ksize) // stride + 1
    cols = []
    for ky in range(ksize):
        for kx in range(ksize):
            cols.append(xp[:, ky:ky + stride * ho:stride, kx:kx + stride * wo:stride, :])
    patches = jnp.concatenate(cols, axis=-1)
    return patches.reshape(n * ho * wo, ksize * ksize * c), (n, ho, wo)


def _ref_conv2d(x, w, b, stride, pad, relu):
    k = w.shape[-1]
    patches, (n, ho, wo) = _im2col(x, k, stride, pad)
    wm = jnp.transpose(w, (2, 3, 1, 0)).reshape(k * k * w.shape[1], w.shape[0])
    y = patches @ wm + b
    if relu:
        y = jnp.maximum(y, 0.0)
    return y.reshape(n, ho, wo, w.shape[0])


def _ref_convt2d(x, w, b, relu):
    n, h, wd, cin = x.shape
    cout = w.shape[1]
    wm = jnp.transpose(w, (0, 2, 3, 1)).reshape(cin, 4 * cout)
    y = x.reshape(n * h * wd, cin) @ wm + jnp.tile(b, 4)
    if relu:
        y = jnp.maximum(y, 0.0)
    y = y.reshape(n, h, wd, 2, 2, cout).transpose(0, 1, 3, 2, 4, 5)
    return y.reshape(n, 2 * h, 2 * wd, cout)


def _ref_forward(params, origin, coarse):
    f = jnp.concatenate([origin, coarse], axis=1)
    f = jnp.transpose(f, (0, 2, 3, 1)).astype(jnp.float32)
    w, b = fold_bn(params["dc1_conv1"], params["dc1_bn1"]); f = _ref_conv2d(f, w, b, 1, 1, True)
    w, b = fold_bn(params["dc1_conv2"], params["dc1_bn2"]); f = _ref_conv2d(f, w, b, 1, 1, True)
    u = _ref_convt2d(f, params["up_ct"]["w"], params["up_ct"]["b"], True)
    u = _ref_conv2d(u, params["up_c1"]["w"], params["up_c1"]["b"], 1, 1, True)
    u = _ref_conv2d(u, params["up_c2"]["w"], params["up_c2"]["b"], 1, 1, True)
    u = _ref_conv2d(u, params["up_c3"]["w"], params["up_c3"]["b"], 2, 1, True)
    f = f * u
    w, b = fold_bn(params["dc2_conv1"], params["dc2_bn1"]); f = _ref_conv2d(f, w, b, 1, 1, True)
    w, b = fold_bn(params["dc2_conv2"], params["dc2_bn2"]); f = _ref_conv2d(f, w, b, 1, 1, True)
    d = _ref_conv2d(f, params["dn_c1"]["w"], params["dn_c1"]["b"], 2, 1, True)
    d = _ref_conv2d(d, params["dn_c2"]["w"], params["dn_c2"]["b"], 1, 1, True)
    d = _ref_conv2d(d, params["dn_c3"]["w"], params["dn_c3"]["b"], 1, 1, True)
    d = _ref_convt2d(d, params["dn_ct"]["w"], params["dn_ct"]["b"], True)
    f = f * d
    f = _ref_conv2d(f, params["fin"]["w"], params["fin"]["b"], 1, 0, False)
    return jnp.transpose(f, (0, 3, 1, 2))


# =============================================================================
# Parameter init (deterministic, synthetic)
# =============================================================================
def _normal(key, shape, scale=0.1):
    return scale * jax.random.normal(key, shape, dtype=jnp.float32)


def _conv_p(key, cin, cout, k):
    kw, kb = jax.random.split(key)
    return {"w": _normal(kw, (cout, cin, k, k)), "b": _normal(kb, (cout,))}


def _convt_p(key, cin, cout):
    kw, kb = jax.random.split(key)
    return {"w": _normal(kw, (cin, cout, 2, 2)), "b": _normal(kb, (cout,))}


def _bn_p(key, c):
    k1, k2, k3, k4 = jax.random.split(key, 4)
    return {
        "gamma": 1.0 + _normal(k1, (c,)),
        "beta": _normal(k2, (c,)),
        "mean": _normal(k3, (c,)),
        "var": jnp.abs(jax.random.normal(k4, (c,), jnp.float32)) + 0.5,
    }


def init_params(key, ch):
    ks = jax.random.split(key, 17)
    p = {}
    p["dc1_conv1"] = _conv_p(ks[0], 4, ch, 3);   p["dc1_bn1"] = _bn_p(ks[1], ch)
    p["dc1_conv2"] = _conv_p(ks[2], ch, ch, 3);  p["dc1_bn2"] = _bn_p(ks[3], ch)
    p["up_ct"] = _convt_p(ks[4], ch, ch // 2)
    p["up_c1"] = _conv_p(ks[5], ch // 2, ch // 2, 3)
    p["up_c2"] = _conv_p(ks[6], ch // 2, ch // 2, 3)
    p["up_c3"] = _conv_p(ks[7], ch // 2, ch, 3)
    p["dc2_conv1"] = _conv_p(ks[8], ch, ch, 3);  p["dc2_bn1"] = _bn_p(ks[9], ch)
    p["dc2_conv2"] = _conv_p(ks[10], ch, ch, 3); p["dc2_bn2"] = _bn_p(ks[11], ch)
    p["dn_c1"] = _conv_p(ks[12], ch, 2 * ch, 3)
    p["dn_c2"] = _conv_p(ks[13], 2 * ch, 2 * ch, 3)
    p["dn_c3"] = _conv_p(ks[14], 2 * ch, 2 * ch, 3)
    p["dn_ct"] = _convt_p(ks[15], 2 * ch, ch)
    p["fin"] = _conv_p(ks[16], ch, 1, 1)
    return p


if __name__ == "__main__":
    ch = 8
    key = jax.random.PRNGKey(0)
    k_params, k_o, k_c = jax.random.split(key, 3)
    params = init_params(k_params, ch)

    origin = jax.random.normal(k_o, (2, 3, 16, 16), dtype=jnp.float32)
    coarse = jax.random.normal(k_c, (2, 1, 16, 16), dtype=jnp.float32)

    # Weight prep (BN folding + tap stacking + slab packing) happens once, off the kernel path.
    meta, packed = prepare_model(params, n=2, h=16, w=16)
    forward = make_forward(meta)

    out = jax.block_until_ready(forward(packed, origin, coarse))

    assert out.shape == (2, 1, 16, 16), out.shape
    assert bool(jnp.all(jnp.isfinite(out)))

    # Numerical check of the fused Pallas kernel against a pure-JAX reference.
    ref = jax.block_until_ready(jax.jit(_ref_forward)(params, origin, coarse))
    max_err = float(jnp.max(jnp.abs(out - ref)))
    assert bool(jnp.allclose(out, ref, atol=1e-4, rtol=1e-3)), max_err

    print("KERNEL_OK")
</pallas_src>

<mosaic_0001>
module attributes {stable_mosaic.version = 11 : i64} {
  func.func @_sin1_fused_kernel(%arg0: memref<32x128xf32, #tpu.memory_space<vmem>>, %arg1: memref<4480x128xf32, #tpu.memory_space<vmem>>, %arg2: memref<13x128xf32, #tpu.memory_space<vmem>>, %arg3: memref<128x32xf32, #tpu.memory_space<vmem>>, %arg4: memref<96x64xf32, #tpu.memory_space<vmem>>, %arg5: memref<48x32xf32, #tpu.memory_space<vmem>>, %arg6: memref<64x16xf32, #tpu.memory_space<vmem>>, %arg7: memref<32x128xf32, #tpu.memory_space<vmem>>) attributes {dimension_semantics = [], scalar_prefetch = 0 : i64, scratch_operands = 0 : i64, tpu.core_type = #tpu.core_type<tc>} {
    %c0 = arith.constant 0 : index
    %c0_0 = arith.constant 0 : index
    %0 = vector.load %arg0[%c0, %c0_0] : memref<32x128xf32, #tpu.memory_space<vmem>>, vector<32x128xf32>
    %c1_i32 = arith.constant 1 : i32
    %1 = tpu.dynamic_rotate %0 by %c1_i32 dim 0 : vector<32x128xf32>, i32 -> vector<32x128xf32>
    %2 = tpu.iota {dimensions = array<i32: 0>} : vector<32x128xi32>
    %c16_i32 = arith.constant 16 : i32
    %c0_i32 = arith.constant 0 : i32
    %3 = arith.cmpi eq, %c16_i32, %c0_i32 : i32
    %c1_i32_1 = arith.constant 1 : i32
    %4 = arith.select %3, %c1_i32_1, %c16_i32 : i32
    %5 = vector.broadcast %4 : i32 to vector<32x128xi32>
    %6 = arith.remsi %2, %5 : vector<32x128xi32>
    %c0_i32_2 = arith.constant 0 : i32
    %7 = vector.broadcast %c0_i32_2 : i32 to vector<32x128xi32>
    %8 = arith.cmpi ne, %6, %7 : vector<32x128xi32>
    %c0_i32_3 = arith.constant 0 : i32
    %9 = vector.broadcast %c0_i32_3 : i32 to vector<32x128xi32>
    %10 = arith.cmpi slt, %6, %9 : vector<32x128xi32>
    %c0_i32_4 = arith.constant 0 : i32
    %11 = arith.cmpi slt, %4, %c0_i32_4 : i32
    %12 = vector.broadcast %11 : i1 to vector<32x128xi1>
    %13 = vector.broadcast %12 : vector<32x128xi1> to vector<32x128xi1>
    %14 = arith.xori %10, %13 : vector<32x128xi1>
    %15 = arith.andi %14, %8 : vector<32x128xi1>
    %16 = vector.broadcast %4 : i32 to vector<32x128xi32>
    %17 = arith.addi %6, %16 : vector<32x128xi32>
    %18 = arith.select %15, %17, %6 : vector<32x128xi1>, vector<32x128xi32>
    %c0_i32_5 = arith.constant 0 : i32
    %19 = vector.broadcast %c0_i32_5 : i32 to vector<32x128xi32>
    %20 = arith.cmpi eq, %18, %19 : vector<32x128xi32>
    %cst = arith.constant 0.000000e+00 : f32
    %21 = vector.broadcast %cst : f32 to vector<32x128xf32>
    %22 = arith.select %20, %21, %1 : vector<32x128xi1>, vector<32x128xf32>
    %c31_i32 = arith.constant 31 : i32
    %23 = tpu.dynamic_rotate %0 by %c31_i32 dim 0 : vector<32x128xf32>, i32 -> vector<32x128xf32>
    %24 = tpu.iota {dimensions = array<i32: 0>} : vector<32x128xi32>
    %c16_i32_6 = arith.constant 16 : i32
    %c0_i32_7 = arith.constant 0 : i32
    %25 = arith.cmpi eq, %c16_i32_6, %c0_i32_7 : i32
    %c1_i32_8 = arith.constant 1 : i32
    %26 = arith.select %25, %c1_i32_8, %c16_i32_6 : i32
    %27 = vector.broadcast %26 : i32 to vector<32x128xi32>
    %28 = arith.remsi %24, %27 : vector<32x128xi32>
    %c0_i32_9 = arith.constant 0 : i32
    %29 = vector.broadcast %c0_i32_9 : i32 to vector<32x128xi32>
    %30 = arith.cmpi ne, %28, %29 : vector<32x128xi32>
    %c0_i32_10 = arith.constant 0 : i32
    %31 = vector.broadcast %c0_i32_10 : i32 to vector<32x128xi32>
    %32 = arith.cmpi slt, %28, %31 : vector<32x128xi32>
    %c0_i32_11 = arith.constant 0 : i32
    %33 = arith.cmpi slt, %26, %c0_i32_11 : i32
    %34 = vector.broadcast %33 : i1 to vector<32x128xi1>
    %35 = vector.broadcast %34 : vector<32x128xi1> to vector<32x128xi1>
    %36 = arith.xori %32, %35 : vector<32x128xi1>
    %37 = arith.andi %36, %30 : vector<32x128xi1>
    %38 = vector.broadcast %26 : i32 to vector<32x128xi32>
    %39 = arith.addi %28, %38 : vector<32x128xi32>
    %40 = arith.select %37, %39, %28 : vector<32x128xi1>, vector<32x128xi32>
    %c15_i32 = arith.constant 15 : i32
    %41 = vector.broadcast %c15_i32 : i32 to vector<32x128xi32>
    %42 = arith.cmpi eq, %40, %41 : vector<32x128xi32>
    %cst_12 = arith.constant 0.000000e+00 : f32
    %43 = vector.broadcast %cst_12 : f32 to vector<32x128xf32>
    %44 = arith.select %42, %43, %23 : vector<32x128xi1>, vector<32x128xf32>
    %45 = tpu.concatenate %22, %0, %44 in 1 : vector<32x128xf32>, vector<32x128xf32>, vector<32x128xf32> -> vector<32x384xf32>
    %c0_13 = arith.constant 0 : index
    %c0_14 = arith.constant 0 : index
    %46 = vector.load %arg1[%c0_13, %c0_14] : memref<4480x128xf32, #tpu.memory_space<vmem>>, vector<384x128xf32>
    %cst_15 = arith.constant dense<0.000000e+00> : vector<32x128xf32>
    %47 = tpu.matmul %45, %46, %cst_15 {dimension_numbers = #tpu.dot_dimension_numbers<[1], [0], [0], [1], [0, 0, 1, 1], [], []>} : vector<32x384xf32>, vector<384x128xf32>, vector<32x128xf32> -> vector<32x128xf32>
    %c0_16 = arith.constant 0 : index
    %c0_17 = arith.constant 0 : index
    %48 = vector.load %arg2[%c0_16, %c0_17] : memref<13x128xf32, #tpu.memory_space<vmem>>, vector<1x128xf32>
    %49 = vector.broadcast %48 : vector<1x128xf32> to vector<32x128xf32>
    %50 = arith.addf %47, %49 : vector<32x128xf32>
    %cst_18 = arith.constant 0.000000e+00 : f32
    %51 = vector.broadcast %cst_18 : f32 to vector<32x128xf32>
    %52 = arith.maximumf %50, %51 : vector<32x128xf32>
    %c1_i32_19 = arith.constant 1 : i32
    %53 = tpu.dynamic_rotate %52 by %c1_i32_19 dim 0 : vector<32x128xf32>, i32 -> vector<32x128xf32>
    %54 = tpu.iota {dimensions = array<i32: 0>} : vector<32x128xi32>
    %c16_i32_20 = arith.constant 16 : i32
    %c0_i32_21 = arith.constant 0 : i32
    %55 = arith.cmpi eq, %c16_i32_20, %c0_i32_21 : i32
    %c1_i32_22 = arith.constant 1 : i32
    %56 = arith.select %55, %c1_i32_22, %c16_i32_20 : i32
    %57 = vector.broadcast %56 : i32 to vector<32x128xi32>
    %58 = arith.remsi %54, %57 : vector<32x128xi32>
    %c0_i32_23 = arith.constant 0 : i32
    %59 = vector.broadcast %c0_i32_23 : i32 to vector<32x128xi32>
    %60 = arith.cmpi ne, %58, %59 : vector<32x128xi32>
    %c0_i32_24 = arith.constant 0 : i32
    %61 = vector.broadcast %c0_i32_24 : i32 to vector<32x128xi32>
    %62 = arith.cmpi slt, %58, %61 : vector<32x128xi32>
    %c0_i32_25 = arith.constant 0 : i32
    %63 = arith.cmpi slt, %56, %c0_i32_25 : i32
    %64 = vector.broadcast %63 : i1 to vector<32x128xi1>
    %65 = vector.broadcast %64 : vector<32x128xi1> to vector<32x128xi1>
    %66 = arith.xori %62, %65 : vector<32x128xi1>
    %67 = arith.andi %66, %60 : vector<32x128xi1>
    %68 = vector.broadcast %56 : i32 to vector<32x128xi32>
    %69 = arith.addi %58, %68 : vector<32x128xi32>
    %70 = arith.select %67, %69, %58 : vector<32x128xi1>, vector<32x128xi32>
    %c0_i32_26 = arith.constant 0 : i32
    %71 = vector.broadcast %c0_i32_26 : i32 to vector<32x128xi32>
    %72 = arith.cmpi eq, %70, %71 : vector<32x128xi32>
    %cst_27 = arith.constant 0.000000e+00 : f32
    %73 = vector.broadcast %cst_27 : f32 to vector<32x128xf32>
    %74 = arith.select %72, %73, %53 : vector<32x128xi1>, vector<32x128xf32>
    %c31_i32_28 = arith.constant 31 : i32
    %75 = tpu.dynamic_rotate %52 by %c31_i32_28 dim 0 : vector<32x128xf32>, i32 -> vector<32x128xf32>
    %76 = tpu.iota {dimensions = array<i32: 0>} : vector<32x128xi32>
    %c16_i32_29 = arith.constant 16 : i32
    %c0_i32_30 = arith.constant 0 : i32
    %77 = arith.cmpi eq, %c16_i32_29, %c0_i32_30 : i32
    %c1_i32_31 = arith.constant 1 : i32
    %78 = arith.select %77, %c1_i32_31, %c16_i32_29 : i32
    %79 = vector.broadcast %78 : i32 to vector<32x128xi32>
    %80 = arith.remsi %76, %79 : vector<32x128xi32>
    %c0_i32_32 = arith.constant 0 : i32
    %81 = vector.broadcast %c0_i32_32 : i32 to vector<32x128xi32>
    %82 = arith.cmpi ne, %80, %81 : vector<32x128xi32>
    %c0_i32_33 = arith.constant 0 : i32
    %83 = vector.broadcast %c0_i32_33 : i32 to vector<32x128xi32>
    %84 = arith.cmpi slt, %80, %83 : vector<32x128xi32>
    %c0_i32_34 = arith.constant 0 : i32
    %85 = arith.cmpi slt, %78, %c0_i32_34 : i32
    %86 = vector.broadcast %85 : i1 to vector<32x128xi1>
    %87 = vector.broadcast %86 : vector<32x128xi1> to vector<32x128xi1>
    %88 = arith.xori %84, %87 : vector<32x128xi1>
    %89 = arith.andi %88, %82 : vector<32x128xi1>
    %90 = vector.broadcast %78 : i32 to vector<32x128xi32>
    %91 = arith.addi %80, %90 : vector<32x128xi32>
    %92 = arith.select %89, %91, %80 : vector<32x128xi1>, vector<32x128xi32>
    %c15_i32_35 = arith.constant 15 : i32
    %93 = vector.broadcast %c15_i32_35 : i32 to vector<32x128xi32>
    %94 = arith.cmpi eq, %92, %93 : vector<32x128xi32>
    %cst_36 = arith.constant 0.000000e+00 : f32
    %95 = vector.broadcast %cst_36 : f32 to vector<32x128xf32>
    %96 = arith.select %94, %95, %75 : vector<32x128xi1>, vector<32x128xf32>
    %97 = tpu.concatenate %74, %52, %96 in 1 : vector<32x128xf32>, vector<32x128xf32>, vector<32x128xf32> -> vector<32x384xf32>
    %c384 = arith.constant 384 : index
    %c0_37 = arith.constant 0 : index
    %98 = vector.load %arg1[%c384, %c0_37] : memref<4480x128xf32, #tpu.memory_space<vmem>>, vector<384x128xf32>
    %cst_38 = arith.constant dense<0.000000e+00> : vector<32x128xf32>
    %99 = tpu.matmul %97, %98, %cst_38 {dimension_numbers = #tpu.dot_dimension_numbers<[1], [0], [0], [1], [0, 0, 1, 1], [], []>} : vector<32x384xf32>, vector<384x128xf32>, vector<32x128xf32> -> vector<32x128xf32>
    %c1 = arith.constant 1 : index
    %c0_39 = arith.constant 0 : index
    %100 = vector.load %arg2[%c1, %c0_39] : memref<13x128xf32, #tpu.memory_space<vmem>>, vector<1x128xf32>
    %101 = vector.broadcast %100 : vector<1x128xf32> to vector<32x128xf32>
    %102 = arith.addf %99, %101 : vector<32x128xf32>
    %cst_40 = arith.constant 0.000000e+00 : f32
    %103 = vector.broadcast %cst_40 : f32 to vector<32x128xf32>
    %104 = arith.maximumf %102, %103 : vector<32x128xf32>
    %c0_41 = arith.constant 0 : index
    %c0_42 = arith.constant 0 : index
    %105 = vector.load %arg3[%c0_41, %c0_42] : memref<128x32xf32, #tpu.memory_space<vmem>>, vector<128x32xf32>
    %cst_43 = arith.constant dense<0.000000e+00> : vector<128x128xf32>
    %106 = tpu.matmul %105, %104, %cst_43 {dimension_numbers = #tpu.dot_dimension_numbers<[1], [0], [0], [1], [0, 0, 1, 1], [], []>} : vector<128x32xf32>, vector<32x128xf32>, vector<128x128xf32> -> vector<128x128xf32>
    %107 = vector.extract_strided_slice %106 {offsets = [0, 0], sizes = [64, 128], strides = [1, 1]} : vector<128x128xf32> to vector<64x128xf32>
    %108 = vector.extract_strided_slice %106 {offsets = [64, 0], sizes = [64, 128], strides = [1, 1]} : vector<128x128xf32> to vector<64x128xf32>
    %109 = tpu.concatenate %107, %108 in 1 : vector<64x128xf32>, vector<64x128xf32> -> vector<64x256xf32>
    %c768 = arith.constant 768 : index
    %c0_44 = arith.constant 0 : index
    %110 = vector.load %arg1[%c768, %c0_44] : memref<4480x128xf32, #tpu.memory_space<vmem>>, vector<256x128xf32>
    %cst_45 = arith.constant dense<0.000000e+00> : vector<64x128xf32>
    %111 = tpu.matmul %109, %110, %cst_45 {dimension_numbers = #tpu.dot_dimension_numbers<[1], [0], [0], [1], [0, 0, 1, 1], [], []>} : vector<64x256xf32>, vector<256x128xf32>, vector<64x128xf32> -> vector<64x128xf32>
    %c2 = arith.constant 2 : index
    %c0_46 = arith.constant 0 : index
    %112 = vector.load %arg2[%c2, %c0_46] : memref<13x128xf32, #tpu.memory_space<vmem>>, vector<1x128xf32>
    %113 = vector.broadcast %112 : vector<1x128xf32> to vector<64x128xf32>
    %114 = arith.addf %111, %113 : vector<64x128xf32>
    %cst_47 = arith.constant 0.000000e+00 : f32
    %115 = vector.broadcast %cst_47 : f32 to vector<64x128xf32>
    %116 = arith.maximumf %114, %115 : vector<64x128xf32>
    %c1_i32_48 = arith.constant 1 : i32
    %117 = tpu.dynamic_rotate %116 by %c1_i32_48 dim 0 : vector<64x128xf32>, i32 -> vector<64x128xf32>
    %118 = tpu.iota {dimensions = array<i32: 0>} : vector<64x128xi32>
    %c32_i32 = arith.constant 32 : i32
    %c0_i32_49 = arith.constant 0 : i32
    %119 = arith.cmpi eq, %c32_i32, %c0_i32_49 : i32
    %c1_i32_50 = arith.constant 1 : i32
    %120 = arith.select %119, %c1_i32_50, %c32_i32 : i32
    %121 = vector.broadcast %120 : i32 to vector<64x128xi32>
    %122 = arith.remsi %118, %121 : vector<64x128xi32>
    %c0_i32_51 = arith.constant 0 : i32
    %123 = vector.broadcast %c0_i32_51 : i32 to vector<64x128xi32>
    %124 = arith.cmpi ne, %122, %123 : vector<64x128xi32>
    %c0_i32_52 = arith.constant 0 : i32
    %125 = vector.broadcast %c0_i32_52 : i32 to vector<64x128xi32>
    %126 = arith.cmpi slt, %122, %125 : vector<64x128xi32>
    %c0_i32_53 = arith.constant 0 : i32
    %127 = arith.cmpi slt, %120, %c0_i32_53 : i32
    %128 = vector.broadcast %127 : i1 to vector<64x128xi1>
    %129 = vector.broadcast %128 : vector<64x128xi1> to vector<64x128xi1>
    %130 = arith.xori %126, %129 : vector<64x128xi1>
    %131 = arith.andi %130, %124 : vector<64x128xi1>
    %132 = vector.broadcast %120 : i32 to vector<64x128xi32>
    %133 = arith.addi %122, %132 : vector<64x128xi32>
    %134 = arith.select %131, %133, %122 : vector<64x128xi1>, vector<64x128xi32>
    %c0_i32_54 = arith.constant 0 : i32
    %135 = vector.broadcast %c0_i32_54 : i32 to vector<64x128xi32>
    %136 = arith.cmpi eq, %134, %135 : vector<64x128xi32>
    %cst_55 = arith.constant 0.000000e+00 : f32
    %137 = vector.broadcast %cst_55 : f32 to vector<64x128xf32>
    %138 = arith.select %136, %137, %117 : vector<64x128xi1>, vector<64x128xf32>
    %c63_i32 = arith.constant 63 : i32
    %139 = tpu.dynamic_rotate %116 by %c63_i32 dim 0 : vector<64x128xf32>, i32 -> vector<64x128xf32>
    %140 = tpu.iota {dimensions = array<i32: 0>} : vector<64x128xi32>
    %c32_i32_56 = arith.constant 32 : i32
    %c0_i32_57 = arith.constant 0 : i32
    %141 = arith.cmpi eq, %c32_i32_56, %c0_i32_57 : i32
    %c1_i32_58 = arith.constant 1 : i32
    %142 = arith.select %141, %c1_i32_58, %c32_i32_56 : i32
    %143 = vector.broadcast %142 : i32 to vector<64x128xi32>
    %144 = arith.remsi %140, %143 : vector<64x128xi32>
    %c0_i32_59 = arith.constant 0 : i32
    %145 = vector.broadcast %c0_i32_59 : i32 to vector<64x128xi32>
    %146 = arith.cmpi ne, %144, %145 : vector<64x128xi32>
    %c0_i32_60 = arith.constant 0 : i32
    %147 = vector.broadcast %c0_i32_60 : i32 to vector<64x128xi32>
    %148 = arith.cmpi slt, %144, %147 : vector<64x128xi32>
    %c0_i32_61 = arith.constant 0 : i32
    %149 = arith.cmpi slt, %142, %c0_i32_61 : i32
    %150 = vector.broadcast %149 : i1 to vector<64x128xi1>
    %151 = vector.broadcast %150 : vector<64x128xi1> to vector<64x128xi1>
    %152 = arith.xori %148, %151 : vector<64x128xi1>
    %153 = arith.andi %152, %146 : vector<64x128xi1>
    %154 = vector.broadcast %142 : i32 to vector<64x128xi32>
    %155 = arith.addi %144, %154 : vector<64x128xi32>
    %156 = arith.select %153, %155, %144 : vector<64x128xi1>, vector<64x128xi32>
    %c31_i32_62 = arith.constant 31 : i32
    %157 = vector.broadcast %c31_i32_62 : i32 to vector<64x128xi32>
    %158 = arith.cmpi eq, %156, %157 : vector<64x128xi32>
    %cst_63 = arith.constant 0.000000e+00 : f32
    %159 = vector.broadcast %cst_63 : f32 to vector<64x128xf32>
    %160 = arith.select %158, %159, %139 : vector<64x128xi1>, vector<64x128xf32>
    %161 = tpu.concatenate %138, %116, %160 in 1 : vector<64x128xf32>, vector<64x128xf32>, vector<64x128xf32> -> vector<64x384xf32>
    %c1024 = arith.constant 1024 : index
    %c0_64 = arith.constant 0 : index
    %162 = vector.load %arg1[%c1024, %c0_64] : memref<4480x128xf32, #tpu.memory_space<vmem>>, vector<384x128xf32>
    %cst_65 = arith.constant dense<0.000000e+00> : vector<64x128xf32>
    %163 = tpu.matmul %161, %162, %cst_65 {dimension_numbers = #tpu.dot_dimension_numbers<[1], [0], [0], [1], [0, 0, 1, 1], [], []>} : vector<64x384xf32>, vector<384x128xf32>, vector<64x128xf32> -> vector<64x128xf32>
    %c3 = arith.constant 3 : index
    %c0_66 = arith.constant 0 : index
    %164 = vector.load %arg2[%c3, %c0_66] : memref<13x128xf32, #tpu.memory_space<vmem>>, vector<1x128xf32>
    %165 = vector.broadcast %164 : vector<1x128xf32> to vector<64x128xf32>
    %166 = arith.addf %163, %165 : vector<64x128xf32>
    %cst_67 = arith.constant 0.000000e+00 : f32
    %167 = vector.broadcast %cst_67 : f32 to vector<64x128xf32>
    %168 = arith.maximumf %166, %167 : vector<64x128xf32>
    %c1_i32_68 = arith.constant 1 : i32
    %169 = tpu.dynamic_rotate %168 by %c1_i32_68 dim 0 : vector<64x128xf32>, i32 -> vector<64x128xf32>
    %170 = tpu.iota {dimensions = array<i32: 0>} : vector<64x128xi32>
    %c32_i32_69 = arith.constant 32 : i32
    %c0_i32_70 = arith.constant 0 : i32
    %171 = arith.cmpi eq, %c32_i32_69, %c0_i32_70 : i32
    %c1_i32_71 = arith.constant 1 : i32
    %172 = arith.select %171, %c1_i32_71, %c32_i32_69 : i32
    %173 = vector.broadcast %172 : i32 to vector<64x128xi32>
    %174 = arith.remsi %170, %173 : vector<64x128xi32>
    %c0_i32_72 = arith.constant 0 : i32
    %175 = vector.broadcast %c0_i32_72 : i32 to vector<64x128xi32>
    %176 = arith.cmpi ne, %174, %175 : vector<64x128xi32>
    %c0_i32_73 = arith.constant 0 : i32
    %177 = vector.broadcast %c0_i32_73 : i32 to vector<64x128xi32>
    %178 = arith.cmpi slt, %174, %177 : vector<64x128xi32>
    %c0_i32_74 = arith.constant 0 : i32
    %179 = arith.cmpi slt, %172, %c0_i32_74 : i32
    %180 = vector.broadcast %179 : i1 to vector<64x128xi1>
    %181 = vector.broadcast %180 : vector<64x128xi1> to vector<64x128xi1>
    %182 = arith.xori %178, %181 : vector<64x128xi1>
    %183 = arith.andi %182, %176 : vector<64x128xi1>
    %184 = vector.broadcast %172 : i32 to vector<64x128xi32>
    %185 = arith.addi %174, %184 : vector<64x128xi32>
    %186 = arith.select %183, %185, %174 : vector<64x128xi1>, vector<64x128xi32>
    %c0_i32_75 = arith.constant 0 : i32
    %187 = vector.broadcast %c0_i32_75 : i32 to vector<64x128xi32>
    %188 = arith.cmpi eq, %186, %187 : vector<64x128xi32>
    %cst_76 = arith.constant 0.000000e+00 : f32
    %189 = vector.broadcast %cst_76 : f32 to vector<64x128xf32>
    %190 = arith.select %188, %189, %169 : vector<64x128xi1>, vector<64x128xf32>
    %c63_i32_77 = arith.constant 63 : i32
    %191 = tpu.dynamic_rotate %168 by %c63_i32_77 dim 0 : vector<64x128xf32>, i32 -> vector<64x128xf32>
    %192 = tpu.iota {dimensions = array<i32: 0>} : vector<64x128xi32>
    %c32_i32_78 = arith.constant 32 : i32
    %c0_i32_79 = arith.constant 0 : i32
    %193 = arith.cmpi eq, %c32_i32_78, %c0_i32_79 : i32
    %c1_i32_80 = arith.constant 1 : i32
    %194 = arith.select %193, %c1_i32_80, %c32_i32_78 : i32
    %195 = vector.broadcast %194 : i32 to vector<64x128xi32>
    %196 = arith.remsi %192, %195 : vector<64x128xi32>
    %c0_i32_81 = arith.constant 0 : i32
    %197 = vector.broadcast %c0_i32_81 : i32 to vector<64x128xi32>
    %198 = arith.cmpi ne, %196, %197 : vector<64x128xi32>
    %c0_i32_82 = arith.constant 0 : i32
    %199 = vector.broadcast %c0_i32_82 : i32 to vector<64x128xi32>
    %200 = arith.cmpi slt, %196, %199 : vector<64x128xi32>
    %c0_i32_83 = arith.constant 0 : i32
    %201 = arith.cmpi slt, %194, %c0_i32_83 : i32
    %202 = vector.broadcast %201 : i1 to vector<64x128xi1>
    %203 = vector.broadcast %202 : vector<64x128xi1> to vector<64x128xi1>
    %204 = arith.xori %200, %203 : vector<64x128xi1>
    %205 = arith.andi %204, %198 : vector<64x128xi1>
    %206 = vector.broadcast %194 : i32 to vector<64x128xi32>
    %207 = arith.addi %196, %206 : vector<64x128xi32>
    %208 = arith.select %205, %207, %196 : vector<64x128xi1>, vector<64x128xi32>
    %c31_i32_84 = arith.constant 31 : i32
    %209 = vector.broadcast %c31_i32_84 : i32 to vector<64x128xi32>
    %210 = arith.cmpi eq, %208, %209 : vector<64x128xi32>
    %cst_85 = arith.constant 0.000000e+00 : f32
    %211 = vector.broadcast %cst_85 : f32 to vector<64x128xf32>
    %212 = arith.select %210, %211, %191 : vector<64x128xi1>, vector<64x128xf32>
    %213 = tpu.concatenate %190, %168, %212 in 1 : vector<64x128xf32>, vector<64x128xf32>, vector<64x128xf32> -> vector<64x384xf32>
    %c1408 = arith.constant 1408 : index
    %c0_86 = arith.constant 0 : index
    %214 = vector.load %arg1[%c1408, %c0_86] : memref<4480x128xf32, #tpu.memory_space<vmem>>, vector<384x128xf32>
    %cst_87 = arith.constant dense<0.000000e+00> : vector<64x128xf32>
    %215 = tpu.matmul %213, %214, %cst_87 {dimension_numbers = #tpu.dot_dimension_numbers<[1], [0], [0], [1], [0, 0, 1, 1], [], []>} : vector<64x384xf32>, vector<384x128xf32>, vector<64x128xf32> -> vector<64x128xf32>
    %c4 = arith.constant 4 : index
    %c0_88 = arith.constant 0 : index
    %216 = vector.load %arg2[%c4, %c0_88] : memref<13x128xf32, #tpu.memory_space<vmem>>, vector<1x128xf32>
    %217 = vector.broadcast %216 : vector<1x128xf32> to vector<64x128xf32>
    %218 = arith.addf %215, %217 : vector<64x128xf32>
    %cst_89 = arith.constant 0.000000e+00 : f32
    %219 = vector.broadcast %cst_89 : f32 to vector<64x128xf32>
    %220 = arith.maximumf %218, %219 : vector<64x128xf32>
    %c0_90 = arith.constant 0 : index
    %c0_91 = arith.constant 0 : index
    %221 = vector.load %arg4[%c0_90, %c0_91] : memref<96x64xf32, #tpu.memory_space<vmem>>, vector<96x64xf32>
    %cst_92 = arith.constant dense<0.000000e+00> : vector<96x128xf32>
    %222 = tpu.matmul %221, %220, %cst_92 {dimension_numbers = #tpu.dot_dimension_numbers<[1], [0], [0], [1], [0, 0, 1, 1], [], []>} : vector<96x64xf32>, vector<64x128xf32>, vector<96x128xf32> -> vector<96x128xf32>
    %223 = vector.extract_strided_slice %222 {offsets = [0, 0], sizes = [32, 128], strides = [1, 1]} : vector<96x128xf32> to vector<32x128xf32>
    %224 = vector.extract_strided_slice %222 {offsets = [32, 0], sizes = [32, 128], strides = [1, 1]} : vector<96x128xf32> to vector<32x128xf32>
    %225 = vector.extract_strided_slice %222 {offsets = [64, 0], sizes = [32, 128], strides = [1, 1]} : vector<96x128xf32> to vector<32x128xf32>
    %226 = tpu.concatenate %223, %224, %225 in 1 : vector<32x128xf32>, vector<32x128xf32>, vector<32x128xf32> -> vector<32x384xf32>
    %c1792 = arith.constant 1792 : index
    %c0_93 = arith.constant 0 : index
    %227 = vector.load %arg1[%c1792, %c0_93] : memref<4480x128xf32, #tpu.memory_space<vmem>>, vector<384x128xf32>
    %cst_94 = arith.constant dense<0.000000e+00> : vector<32x128xf32>
    %228 = tpu.matmul %226, %227, %cst_94 {dimension_numbers = #tpu.dot_dimension_numbers<[1], [0], [0], [1], [0, 0, 1, 1], [], []>} : vector<32x384xf32>, vector<384x128xf32>, vector<32x128xf32> -> vector<32x128xf32>
    %c5 = arith.constant 5 : index
    %c0_95 = arith.constant 0 : index
    %229 = vector.load %arg2[%c5, %c0_95] : memref<13x128xf32, #tpu.memory_space<vmem>>, vector<1x128xf32>
    %230 = vector.broadcast %229 : vector<1x128xf32> to vector<32x128xf32>
    %231 = arith.addf %228, %230 : vector<32x128xf32>
    %cst_96 = arith.constant 0.000000e+00 : f32
    %232 = vector.broadcast %cst_96 : f32 to vector<32x128xf32>
    %233 = arith.maximumf %231, %232 : vector<32x128xf32>
    %234 = arith.mulf %104, %233 : vector<32x128xf32>
    %c1_i32_97 = arith.constant 1 : i32
    %235 = tpu.dynamic_rotate %234 by %c1_i32_97 dim 0 : vector<32x128xf32>, i32 -> vector<32x128xf32>
    %236 = tpu.iota {dimensions = array<i32: 0>} : vector<32x128xi32>
    %c16_i32_98 = arith.constant 16 : i32
    %c0_i32_99 = arith.constant 0 : i32
    %237 = arith.cmpi eq, %c16_i32_98, %c0_i32_99 : i32
    %c1_i32_100 = arith.constant 1 : i32
    %238 = arith.select %237, %c1_i32_100, %c16_i32_98 : i32
    %239 = vector.broadcast %238 : i32 to vector<32x128xi32>
    %240 = arith.remsi %236, %239 : vector<32x128xi32>
    %c0_i32_101 = arith.constant 0 : i32
    %241 = vector.broadcast %c0_i32_101 : i32 to vector<32x128xi32>
    %242 = arith.cmpi ne, %240, %241 : vector<32x128xi32>
    %c0_i32_102 = arith.constant 0 : i32
    %243 = vector.broadcast %c0_i32_102 : i32 to vector<32x128xi32>
    %244 = arith.cmpi slt, %240, %243 : vector<32x128xi32>
    %c0_i32_103 = arith.constant 0 : i32
    %245 = arith.cmpi slt, %238, %c0_i32_103 : i32
    %246 = vector.broadcast %245 : i1 to vector<32x128xi1>
    %247 = vector.broadcast %246 : vector<32x128xi1> to vector<32x128xi1>
    %248 = arith.xori %244, %247 : vector<32x128xi1>
    %249 = arith.andi %248, %242 : vector<32x128xi1>
    %250 = vector.broadcast %238 : i32 to vector<32x128xi32>
    %251 = arith.addi %240, %250 : vector<32x128xi32>
    %252 = arith.select %249, %251, %240 : vector<32x128xi1>, vector<32x128xi32>
    %c0_i32_104 = arith.constant 0 : i32
    %253 = vector.broadcast %c0_i32_104 : i32 to vector<32x128xi32>
    %254 = arith.cmpi eq, %252, %253 : vector<32x128xi32>
    %cst_105 = arith.constant 0.000000e+00 : f32
    %255 = vector.broadcast %cst_105 : f32 to vector<32x128xf32>
    %256 = arith.select %254, %255, %235 : vector<32x128xi1>, vector<32x128xf32>
    %c31_i32_106 = arith.constant 31 : i32
    %257 = tpu.dynamic_rotate %234 by %c31_i32_106 dim 0 : vector<32x128xf32>, i32 -> vector<32x128xf32>
    %258 = tpu.iota {dimensions = array<i32: 0>} : vector<32x128xi32>
    %c16_i32_107 = arith.constant 16 : i32
    %c0_i32_108 = arith.constant 0 : i32
    %259 = arith.cmpi eq, %c16_i32_107, %c0_i32_108 : i32
    %c1_i32_109 = arith.constant 1 : i32
    %260 = arith.select %259, %c1_i32_109, %c16_i32_107 : i32
    %261 = vector.broadcast %260 : i32 to vector<32x128xi32>
    %262 = arith.remsi %258, %261 : vector<32x128xi32>
    %c0_i32_110 = arith.constant 0 : i32
    %263 = vector.broadcast %c0_i32_110 : i32 to vector<32x128xi32>
    %264 = arith.cmpi ne, %262, %263 : vector<32x128xi32>
    %c0_i32_111 = arith.constant 0 : i32
    %265 = vector.broadcast %c0_i32_111 : i32 to vector<32x128xi32>
    %266 = arith.cmpi slt, %262, %265 : vector<32x128xi32>
    %c0_i32_112 = arith.constant 0 : i32
    %267 = arith.cmpi slt, %260, %c0_i32_112 : i32
    %268 = vector.broadcast %267 : i1 to vector<32x128xi1>
    %269 = vector.broadcast %268 : vector<32x128xi1> to vector<32x128xi1>
    %270 = arith.xori %266, %269 : vector<32x128xi1>
    %271 = arith.andi %270, %264 : vector<32x128xi1>
    %272 = vector.broadcast %260 : i32 to vector<32x128xi32>
    %273 = arith.addi %262, %272 : vector<32x128xi32>
    %274 = arith.select %271, %273, %262 : vector<32x128xi1>, vector<32x128xi32>
    %c15_i32_113 = arith.constant 15 : i32
    %275 = vector.broadcast %c15_i32_113 : i32 to vector<32x128xi32>
    %276 = arith.cmpi eq, %274, %275 : vector<32x128xi32>
    %cst_114 = arith.constant 0.000000e+00 : f32
    %277 = vector.broadcast %cst_114 : f32 to vector<32x128xf32>
    %278 = arith.select %276, %277, %257 : vector<32x128xi1>, vector<32x128xf32>
    %279 = tpu.concatenate %256, %234, %278 in 1 : vector<32x128xf32>, vector<32x128xf32>, vector<32x128xf32> -> vector<32x384xf32>
    %c2176 = arith.constant 2176 : index
    %c0_115 = arith.constant 0 : index
    %280 = vector.load %arg1[%c2176, %c0_115] : memref<4480x128xf32, #tpu.memory_space<vmem>>, vector<384x128xf32>
    %cst_116 = arith.constant dense<0.000000e+00> : vector<32x128xf32>
    %281 = tpu.matmul %279, %280, %cst_116 {dimension_numbers = #tpu.dot_dimension_numbers<[1], [0], [0], [1], [0, 0, 1, 1], [], []>} : vector<32x384xf32>, vector<384x128xf32>, vector<32x128xf32> -> vector<32x128xf32>
    %c6 = arith.constant 6 : index
    %c0_117 = arith.constant 0 : index
    %282 = vector.load %arg2[%c6, %c0_117] : memref<13x128xf32, #tpu.memory_space<vmem>>, vector<1x128xf32>
    %283 = vector.broadcast %282 : vector<1x128xf32> to vector<32x128xf32>
    %284 = arith.addf %281, %283 : vector<32x128xf32>
    %cst_118 = arith.constant 0.000000e+00 : f32
    %285 = vector.broadcast %cst_118 : f32 to vector<32x128xf32>
    %286 = arith.maximumf %284, %285 : vector<32x128xf32>
    %c1_i32_119 = arith.constant 1 : i32
    %287 = tpu.dynamic_rotate %286 by %c1_i32_119 dim 0 : vector<32x128xf32>, i32 -> vector<32x128xf32>
    %288 = tpu.iota {dimensions = array<i32: 0>} : vector<32x128xi32>
    %c16_i32_120 = arith.constant 16 : i32
    %c0_i32_121 = arith.constant 0 : i32
    %289 = arith.cmpi eq, %c16_i32_120, %c0_i32_121 : i32
    %c1_i32_122 = arith.constant 1 : i32
    %290 = arith.select %289, %c1_i32_122, %c16_i32_120 : i32
    %291 = vector.broadcast %290 : i32 to vector<32x128xi32>
    %292 = arith.remsi %288, %291 : vector<32x128xi32>
    %c0_i32_123 = arith.constant 0 : i32
    %293 = vector.broadcast %c0_i32_123 : i32 to vector<32x128xi32>
    %294 = arith.cmpi ne, %292, %293 : vector<32x128xi32>
    %c0_i32_124 = arith.constant 0 : i32
    %295 = vector.broadcast %c0_i32_124 : i32 to vector<32x128xi32>
    %296 = arith.cmpi slt, %292, %295 : vector<32x128xi32>
    %c0_i32_125 = arith.constant 0 : i32
    %297 = arith.cmpi slt, %290, %c0_i32_125 : i32
    %298 = vector.broadcast %297 : i1 to vector<32x128xi1>
    %299 = vector.broadcast %298 : vector<32x128xi1> to vector<32x128xi1>
    %300 = arith.xori %296, %299 : vector<32x128xi1>
    %301 = arith.andi %300, %294 : vector<32x128xi1>
    %302 = vector.broadcast %290 : i32 to vector<32x128xi32>
    %303 = arith.addi %292, %302 : vector<32x128xi32>
    %304 = arith.select %301, %303, %292 : vector<32x128xi1>, vector<32x128xi32>
    %c0_i32_126 = arith.constant 0 : i32
    %305 = vector.broadcast %c0_i32_126 : i32 to vector<32x128xi32>
    %306 = arith.cmpi eq, %304, %305 : vector<32x128xi32>
    %cst_127 = arith.constant 0.000000e+00 : f32
    %307 = vector.broadcast %cst_127 : f32 to vector<32x128xf32>
    %308 = arith.select %306, %307, %287 : vector<32x128xi1>, vector<32x128xf32>
    %c31_i32_128 = arith.constant 31 : i32
    %309 = tpu.dynamic_rotate %286 by %c31_i32_128 dim 0 : vector<32x128xf32>, i32 -> vector<32x128xf32>
    %310 = tpu.iota {dimensions = array<i32: 0>} : vector<32x128xi32>
    %c16_i32_129 = arith.constant 16 : i32
    %c0_i32_130 = arith.constant 0 : i32
    %311 = arith.cmpi eq, %c16_i32_129, %c0_i32_130 : i32
    %c1_i32_131 = arith.constant 1 : i32
    %312 = arith.select %311, %c1_i32_131, %c16_i32_129 : i32
    %313 = vector.broadcast %312 : i32 to vector<32x128xi32>
    %314 = arith.remsi %310, %313 : vector<32x128xi32>
    %c0_i32_132 = arith.constant 0 : i32
    %315 = vector.broadcast %c0_i32_132 : i32 to vector<32x128xi32>
    %316 = arith.cmpi ne, %314, %315 : vector<32x128xi32>
    %c0_i32_133 = arith.constant 0 : i32
    %317 = vector.broadcast %c0_i32_133 : i32 to vector<32x128xi32>
    %318 = arith.cmpi slt, %314, %317 : vector<32x128xi32>
    %c0_i32_134 = arith.constant 0 : i32
    %319 = arith.cmpi slt, %312, %c0_i32_134 : i32
    %320 = vector.broadcast %319 : i1 to vector<32x128xi1>
    %321 = vector.broadcast %320 : vector<32x128xi1> to vector<32x128xi1>
    %322 = arith.xori %318, %321 : vector<32x128xi1>
    %323 = arith.andi %322, %316 : vector<32x128xi1>
    %324 = vector.broadcast %312 : i32 to vector<32x128xi32>
    %325 = arith.addi %314, %324 : vector<32x128xi32>
    %326 = arith.select %323, %325, %314 : vector<32x128xi1>, vector<32x128xi32>
    %c15_i32_135 = arith.constant 15 : i32
    %327 = vector.broadcast %c15_i32_135 : i32 to vector<32x128xi32>
    %328 = arith.cmpi eq, %326, %327 : vector<32x128xi32>
    %cst_136 = arith.constant 0.000000e+00 : f32
    %329 = vector.broadcast %cst_136 : f32 to vector<32x128xf32>
    %330 = arith.select %328, %329, %309 : vector<32x128xi1>, vector<32x128xf32>
    %331 = tpu.concatenate %308, %286, %330 in 1 : vector<32x128xf32>, vector<32x128xf32>, vector<32x128xf32> -> vector<32x384xf32>
    %c2560 = arith.constant 2560 : index
    %c0_137 = arith.constant 0 : index
    %332 = vector.load %arg1[%c2560, %c0_137] : memref<4480x128xf32, #tpu.memory_space<vmem>>, vector<384x128xf32>
    %cst_138 = arith.constant dense<0.000000e+00> : vector<32x128xf32>
    %333 = tpu.matmul %331, %332, %cst_138 {dimension_numbers = #tpu.dot_dimension_numbers<[1], [0], [0], [1], [0, 0, 1, 1], [], []>} : vector<32x384xf32>, vector<384x128xf32>, vector<32x128xf32> -> vector<32x128xf32>
    %c7 = arith.constant 7 : index
    %c0_139 = arith.constant 0 : index
    %334 = vector.load %arg2[%c7, %c0_139] : memref<13x128xf32, #tpu.memory_space<vmem>>, vector<1x128xf32>
    %335 = vector.broadcast %334 : vector<1x128xf32> to vector<32x128xf32>
    %336 = arith.addf %333, %335 : vector<32x128xf32>
    %cst_140 = arith.constant 0.000000e+00 : f32
    %337 = vector.broadcast %cst_140 : f32 to vector<32x128xf32>
    %338 = arith.maximumf %336, %337 : vector<32x128xf32>
    %c0_141 = arith.constant 0 : index
    %c0_142 = arith.constant 0 : index
    %339 = vector.load %arg5[%c0_141, %c0_142] : memref<48x32xf32, #tpu.memory_space<vmem>>, vector<48x32xf32>
    %cst_143 = arith.constant dense<0.000000e+00> : vector<48x128xf32>
    %340 = tpu.matmul %339, %338, %cst_143 {dimension_numbers = #tpu.dot_dimension_numbers<[1], [0], [0], [1], [0, 0, 1, 1], [], []>} : vector<48x32xf32>, vector<32x128xf32>, vector<48x128xf32> -> vector<48x128xf32>
    %341 = vector.extract_strided_slice %340 {offsets = [0, 0], sizes = [16, 128], strides = [1, 1]} : vector<48x128xf32> to vector<16x128xf32>
    %342 = vector.extract_strided_slice %340 {offsets = [16, 0], sizes = [16, 128], strides = [1, 1]} : vector<48x128xf32> to vector<16x128xf32>
    %343 = vector.extract_strided_slice %340 {offsets = [32, 0], sizes = [16, 128], strides = [1, 1]} : vector<48x128xf32> to vector<16x128xf32>
    %344 = tpu.concatenate %341, %342, %343 in 1 : vector<16x128xf32>, vector<16x128xf32>, vector<16x128xf32> -> vector<16x384xf32>
    %c2944 = arith.constant 2944 : index
    %c0_144 = arith.constant 0 : index
    %345 = vector.load %arg1[%c2944, %c0_144] : memref<4480x128xf32, #tpu.memory_space<vmem>>, vector<384x128xf32>
    %cst_145 = arith.constant dense<0.000000e+00> : vector<16x128xf32>
    %346 = tpu.matmul %344, %345, %cst_145 {dimension_numbers = #tpu.dot_dimension_numbers<[1], [0], [0], [1], [0, 0, 1, 1], [], []>} : vector<16x384xf32>, vector<384x128xf32>, vector<16x128xf32> -> vector<16x128xf32>
    %c8 = arith.constant 8 : index
    %c0_146 = arith.constant 0 : index
    %347 = vector.load %arg2[%c8, %c0_146] : memref<13x128xf32, #tpu.memory_space<vmem>>, vector<1x128xf32>
    %348 = vector.broadcast %347 : vector<1x128xf32> to vector<16x128xf32>
    %349 = arith.addf %346, %348 : vector<16x128xf32>
    %cst_147 = arith.constant 0.000000e+00 : f32
    %350 = vector.broadcast %cst_147 : f32 to vector<16x128xf32>
    %351 = arith.maximumf %349, %350 : vector<16x128xf32>
    %c1_i32_148 = arith.constant 1 : i32
    %352 = tpu.dynamic_rotate %351 by %c1_i32_148 dim 0 : vector<16x128xf32>, i32 -> vector<16x128xf32>
    %353 = tpu.iota {dimensions = array<i32: 0>} : vector<16x128xi32>
    %c8_i32 = arith.constant 8 : i32
    %c0_i32_149 = arith.constant 0 : i32
    %354 = arith.cmpi eq, %c8_i32, %c0_i32_149 : i32
    %c1_i32_150 = arith.constant 1 : i32
    %355 = arith.select %354, %c1_i32_150, %c8_i32 : i32
    %356 = vector.broadcast %355 : i32 to vector<16x128xi32>
    %357 = arith.remsi %353, %356 : vector<16x128xi32>
    %c0_i32_151 = arith.constant 0 : i32
    %358 = vector.broadcast %c0_i32_151 : i32 to vector<16x128xi32>
    %359 = arith.cmpi ne, %357, %358 : vector<16x128xi32>
    %c0_i32_152 = arith.constant 0 : i32
    %360 = vector.broadcast %c0_i32_152 : i32 to vector<16x128xi32>
    %361 = arith.cmpi slt, %357, %360 : vector<16x128xi32>
    %c0_i32_153 = arith.constant 0 : i32
    %362 = arith.cmpi slt, %355, %c0_i32_153 : i32
    %363 = vector.broadcast %362 : i1 to vector<16x128xi1>
    %364 = vector.broadcast %363 : vector<16x128xi1> to vector<16x128xi1>
    %365 = arith.xori %361, %364 : vector<16x128xi1>
    %366 = arith.andi %365, %359 : vector<16x128xi1>
    %367 = vector.broadcast %355 : i32 to vector<16x128xi32>
    %368 = arith.addi %357, %367 : vector<16x128xi32>
    %369 = arith.select %366, %368, %357 : vector<16x128xi1>, vector<16x128xi32>
    %c0_i32_154 = arith.constant 0 : i32
    %370 = vector.broadcast %c0_i32_154 : i32 to vector<16x128xi32>
    %371 = arith.cmpi eq, %369, %370 : vector<16x128xi32>
    %cst_155 = arith.constant 0.000000e+00 : f32
    %372 = vector.broadcast %cst_155 : f32 to vector<16x128xf32>
    %373 = arith.select %371, %372, %352 : vector<16x128xi1>, vector<16x128xf32>
    %c15_i32_156 = arith.constant 15 : i32
    %374 = tpu.dynamic_rotate %351 by %c15_i32_156 dim 0 : vector<16x128xf32>, i32 -> vector<16x128xf32>
    %375 = tpu.iota {dimensions = array<i32: 0>} : vector<16x128xi32>
    %c8_i32_157 = arith.constant 8 : i32
    %c0_i32_158 = arith.constant 0 : i32
    %376 = arith.cmpi eq, %c8_i32_157, %c0_i32_158 : i32
    %c1_i32_159 = arith.constant 1 : i32
    %377 = arith.select %376, %c1_i32_159, %c8_i32_157 : i32
    %378 = vector.broadcast %377 : i32 to vector<16x128xi32>
    %379 = arith.remsi %375, %378 : vector<16x128xi32>
    %c0_i32_160 = arith.constant 0 : i32
    %380 = vector.broadcast %c0_i32_160 : i32 to vector<16x128xi32>
    %381 = arith.cmpi ne, %379, %380 : vector<16x128xi32>
    %c0_i32_161 = arith.constant 0 : i32
    %382 = vector.broadcast %c0_i32_161 : i32 to vector<16x128xi32>
    %383 = arith.cmpi slt, %379, %382 : vector<16x128xi32>
    %c0_i32_162 = arith.constant 0 : i32
    %384 = arith.cmpi slt, %377, %c0_i32_162 : i32
    %385 = vector.broadcast %384 : i1 to vector<16x128xi1>
    %386 = vector.broadcast %385 : vector<16x128xi1> to vector<16x128xi1>
    %387 = arith.xori %383, %386 : vector<16x128xi1>
    %388 = arith.andi %387, %381 : vector<16x128xi1>
    %389 = vector.broadcast %377 : i32 to vector<16x128xi32>
    %390 = arith.addi %379, %389 : vector<16x128xi32>
    %391 = arith.select %388, %390, %379 : vector<16x128xi1>, vector<16x128xi32>
    %c7_i32 = arith.constant 7 : i32
    %392 = vector.broadcast %c7_i32 : i32 to vector<16x128xi32>
    %393 = arith.cmpi eq, %391, %392 : vector<16x128xi32>
    %cst_163 = arith.constant 0.000000e+00 : f32
    %394 = vector.broadcast %cst_163 : f32 to vector<16x128xf32>
    %395 = arith.select %393, %394, %374 : vector<16x128xi1>, vector<16x128xf32>
    %396 = tpu.concatenate %373, %351, %395 in 1 : vector<16x128xf32>, vector<16x128xf32>, vector<16x128xf32> -> vector<16x384xf32>
    %c3328 = arith.constant 3328 : index
    %c0_164 = arith.constant 0 : index
    %397 = vector.load %arg1[%c3328, %c0_164] : memref<4480x128xf32, #tpu.memory_space<vmem>>, vector<384x128xf32>
    %cst_165 = arith.constant dense<0.000000e+00> : vector<16x128xf32>
    %398 = tpu.matmul %396, %397, %cst_165 {dimension_numbers = #tpu.dot_dimension_numbers<[1], [0], [0], [1], [0, 0, 1, 1], [], []>} : vector<16x384xf32>, vector<384x128xf32>, vector<16x128xf32> -> vector<16x128xf32>
    %c9 = arith.constant 9 : index
    %c0_166 = arith.constant 0 : index
    %399 = vector.load %arg2[%c9, %c0_166] : memref<13x128xf32, #tpu.memory_space<vmem>>, vector<1x128xf32>
    %400 = vector.broadcast %399 : vector<1x128xf32> to vector<16x128xf32>
    %401 = arith.addf %398, %400 : vector<16x128xf32>
    %cst_167 = arith.constant 0.000000e+00 : f32
    %402 = vector.broadcast %cst_167 : f32 to vector<16x128xf32>
    %403 = arith.maximumf %401, %402 : vector<16x128xf32>
    %c1_i32_168 = arith.constant 1 : i32
    %404 = tpu.dynamic_rotate %403 by %c1_i32_168 dim 0 : vector<16x128xf32>, i32 -> vector<16x128xf32>
    %405 = tpu.iota {dimensions = array<i32: 0>} : vector<16x128xi32>
    %c8_i32_169 = arith.constant 8 : i32
    %c0_i32_170 = arith.constant 0 : i32
    %406 = arith.cmpi eq, %c8_i32_169, %c0_i32_170 : i32
    %c1_i32_171 = arith.constant 1 : i32
    %407 = arith.select %406, %c1_i32_171, %c8_i32_169 : i32
    %408 = vector.broadcast %407 : i32 to vector<16x128xi32>
    %409 = arith.remsi %405, %408 : vector<16x128xi32>
    %c0_i32_172 = arith.constant 0 : i32
    %410 = vector.broadcast %c0_i32_172 : i32 to vector<16x128xi32>
    %411 = arith.cmpi ne, %409, %410 : vector<16x128xi32>
    %c0_i32_173 = arith.constant 0 : i32
    %412 = vector.broadcast %c0_i32_173 : i32 to vector<16x128xi32>
    %413 = arith.cmpi slt, %409, %412 : vector<16x128xi32>
    %c0_i32_174 = arith.constant 0 : i32
    %414 = arith.cmpi slt, %407, %c0_i32_174 : i32
    %415 = vector.broadcast %414 : i1 to vector<16x128xi1>
    %416 = vector.broadcast %415 : vector<16x128xi1> to vector<16x128xi1>
    %417 = arith.xori %413, %416 : vector<16x128xi1>
    %418 = arith.andi %417, %411 : vector<16x128xi1>
    %419 = vector.broadcast %407 : i32 to vector<16x128xi32>
    %420 = arith.addi %409, %419 : vector<16x128xi32>
    %421 = arith.select %418, %420, %409 : vector<16x128xi1>, vector<16x128xi32>
    %c0_i32_175 = arith.constant 0 : i32
    %422 = vector.broadcast %c0_i32_175 : i32 to vector<16x128xi32>
    %423 = arith.cmpi eq, %421, %422 : vector<16x128xi32>
    %cst_176 = arith.constant 0.000000e+00 : f32
    %424 = vector.broadcast %cst_176 : f32 to vector<16x128xf32>
    %425 = arith.select %423, %424, %404 : vector<16x128xi1>, vector<16x128xf32>
    %c15_i32_177 = arith.constant 15 : i32
    %426 = tpu.dynamic_rotate %403 by %c15_i32_177 dim 0 : vector<16x128xf32>, i32 -> vector<16x128xf32>
    %427 = tpu.iota {dimensions = array<i32: 0>} : vector<16x128xi32>
    %c8_i32_178 = arith.constant 8 : i32
    %c0_i32_179 = arith.constant 0 : i32
    %428 = arith.cmpi eq, %c8_i32_178, %c0_i32_179 : i32
    %c1_i32_180 = arith.constant 1 : i32
    %429 = arith.select %428, %c1_i32_180, %c8_i32_178 : i32
    %430 = vector.broadcast %429 : i32 to vector<16x128xi32>
    %431 = arith.remsi %427, %430 : vector<16x128xi32>
    %c0_i32_181 = arith.constant 0 : i32
    %432 = vector.broadcast %c0_i32_181 : i32 to vector<16x128xi32>
    %433 = arith.cmpi ne, %431, %432 : vector<16x128xi32>
    %c0_i32_182 = arith.constant 0 : i32
    %434 = vector.broadcast %c0_i32_182 : i32 to vector<16x128xi32>
    %435 = arith.cmpi slt, %431, %434 : vector<16x128xi32>
    %c0_i32_183 = arith.constant 0 : i32
    %436 = arith.cmpi slt, %429, %c0_i32_183 : i32
    %437 = vector.broadcast %436 : i1 to vector<16x128xi1>
    %438 = vector.broadcast %437 : vector<16x128xi1> to vector<16x128xi1>
    %439 = arith.xori %435, %438 : vector<16x128xi1>
    %440 = arith.andi %439, %433 : vector<16x128xi1>
    %441 = vector.broadcast %429 : i32 to vector<16x128xi32>
    %442 = arith.addi %431, %441 : vector<16x128xi32>
    %443 = arith.select %440, %442, %431 : vector<16x128xi1>, vector<16x128xi32>
    %c7_i32_184 = arith.constant 7 : i32
    %444 = vector.broadcast %c7_i32_184 : i32 to vector<16x128xi32>
    %445 = arith.cmpi eq, %443, %444 : vector<16x128xi32>
    %cst_185 = arith.constant 0.000000e+00 : f32
    %446 = vector.broadcast %cst_185 : f32 to vector<16x128xf32>
    %447 = arith.select %445, %446, %426 : vector<16x128xi1>, vector<16x128xf32>
    %448 = tpu.concatenate %425, %403, %447 in 1 : vector<16x128xf32>, vector<16x128xf32>, vector<16x128xf32> -> vector<16x384xf32>
    %c3712 = arith.constant 3712 : index
    %c0_186 = arith.constant 0 : index
    %449 = vector.load %arg1[%c3712, %c0_186] : memref<4480x128xf32, #tpu.memory_space<vmem>>, vector<384x128xf32>
    %cst_187 = arith.constant dense<0.000000e+00> : vector<16x128xf32>
    %450 = tpu.matmul %448, %449, %cst_187 {dimension_numbers = #tpu.dot_dimension_numbers<[1], [0], [0], [1], [0, 0, 1, 1], [], []>} : vector<16x384xf32>, vector<384x128xf32>, vector<16x128xf32> -> vector<16x128xf32>
    %c10 = arith.constant 10 : index
    %c0_188 = arith.constant 0 : index
    %451 = vector.load %arg2[%c10, %c0_188] : memref<13x128xf32, #tpu.memory_space<vmem>>, vector<1x128xf32>
    %452 = vector.broadcast %451 : vector<1x128xf32> to vector<16x128xf32>
    %453 = arith.addf %450, %452 : vector<16x128xf32>
    %cst_189 = arith.constant 0.000000e+00 : f32
    %454 = vector.broadcast %cst_189 : f32 to vector<16x128xf32>
    %455 = arith.maximumf %453, %454 : vector<16x128xf32>
    %c0_190 = arith.constant 0 : index
    %c0_191 = arith.constant 0 : index
    %456 = vector.load %arg6[%c0_190, %c0_191] : memref<64x16xf32, #tpu.memory_space<vmem>>, vector<64x16xf32>
    %cst_192 = arith.constant dense<0.000000e+00> : vector<64x128xf32>
    %457 = tpu.matmul %456, %455, %cst_192 {dimension_numbers = #tpu.dot_dimension_numbers<[1], [0], [0], [1], [0, 0, 1, 1], [], []>} : vector<64x16xf32>, vector<16x128xf32>, vector<64x128xf32> -> vector<64x128xf32>
    %458 = vector.extract_strided_slice %457 {offsets = [0, 0], sizes = [32, 128], strides = [1, 1]} : vector<64x128xf32> to vector<32x128xf32>
    %459 = vector.extract_strided_slice %457 {offsets = [32, 0], sizes = [32, 128], strides = [1, 1]} : vector<64x128xf32> to vector<32x128xf32>
    %460 = tpu.concatenate %458, %459 in 1 : vector<32x128xf32>, vector<32x128xf32> -> vector<32x256xf32>
    %c4096 = arith.constant 4096 : index
    %c0_193 = arith.constant 0 : index
    %461 = vector.load %arg1[%c4096, %c0_193] : memref<4480x128xf32, #tpu.memory_space<vmem>>, vector<256x128xf32>
    %cst_194 = arith.constant dense<0.000000e+00> : vector<32x128xf32>
    %462 = tpu.matmul %460, %461, %cst_194 {dimension_numbers = #tpu.dot_dimension_numbers<[1], [0], [0], [1], [0, 0, 1, 1], [], []>} : vector<32x256xf32>, vector<256x128xf32>, vector<32x128xf32> -> vector<32x128xf32>
    %c11 = arith.constant 11 : index
    %c0_195 = arith.constant 0 : index
    %463 = vector.load %arg2[%c11, %c0_195] : memref<13x128xf32, #tpu.memory_space<vmem>>, vector<1x128xf32>
    %464 = vector.broadcast %463 : vector<1x128xf32> to vector<32x128xf32>
    %465 = arith.addf %462, %464 : vector<32x128xf32>
    %cst_196 = arith.constant 0.000000e+00 : f32
    %466 = vector.broadcast %cst_196 : f32 to vector<32x128xf32>
    %467 = arith.maximumf %465, %466 : vector<32x128xf32>
    %468 = arith.mulf %338, %467 : vector<32x128xf32>
    %c4352 = arith.constant 4352 : index
    %c0_197 = arith.constant 0 : index
    %469 = vector.load %arg1[%c4352, %c0_197] : memref<4480x128xf32, #tpu.memory_space<vmem>>, vector<128x128xf32>
    %cst_198 = arith.constant dense<0.000000e+00> : vector<32x128xf32>
    %470 = tpu.matmul %468, %469, %cst_198 {dimension_numbers = #tpu.dot_dimension_numbers<[1], [0], [0], [1], [0, 0, 1, 1], [], []>} : vector<32x128xf32>, vector<128x128xf32>, vector<32x128xf32> -> vector<32x128xf32>
    %c12 = arith.constant 12 : index
    %c0_199 = arith.constant 0 : index
    %471 = vector.load %arg2[%c12, %c0_199] : memref<13x128xf32, #tpu.memory_space<vmem>>, vector<1x128xf32>
    %472 = vector.broadcast %471 : vector<1x128xf32> to vector<32x128xf32>
    %473 = arith.addf %470, %472 : vector<32x128xf32>
    %c0_200 = arith.constant 0 : index
    %c0_201 = arith.constant 0 : index
    %474 = vector.load %arg7[%c0_200, %c0_201] : memref<32x128xf32, #tpu.memory_space<vmem>>, vector<32x128xf32>
    tpu.vector_store %arg7[%c0_200, %c0_201], %473 {strides = array<i32>} : memref<32x128xf32, #tpu.memory_space<vmem>>, vector<32x128xf32>,
    return
  }
}

</mosaic_0001>

<llo_original>
// kernel: forward.1
$region0: #{forward.1}
  #allocation0 [shape = 'u32[]', space=smem, size = 0x4, offset = 0x4, fixed_abs, tag = 'smem constant byte address 0x4 - core index']
  #allocation1 [shape = 'u32[144,128]{1,0:T(1,128)}', space=vmem, size = 0x12000, scoped, tag = 'internal scratch']
  %s0 = inlined_call_operand.vmem [shape: f32[32,128], index: 0, kind: input, shape index: {}]
  %s1 = inlined_call_operand.hbm [shape: f32[4480,128], index: 1, kind: input, shape index: {}]
  %s2 = inlined_call_operand.hbm [shape: f32[13,128], index: 2, kind: input, shape index: {}]
  %s3 = inlined_call_operand.vmem [shape: f32[128,32], index: 3, kind: input, shape index: {}]
  %s4 = inlined_call_operand.vmem [shape: f32[96,64], index: 4, kind: input, shape index: {}]
  %s5 = inlined_call_operand.vmem [shape: f32[48,32], index: 5, kind: input, shape index: {}]
  %s6 = inlined_call_operand.vmem [shape: f32[64,16], index: 6, kind: input, shape index: {}]
  %s7 = inlined_call_operand.vmem [shape: f32[32,128], index: 7, kind: output, shape index: {}]
  %s8 = sld [smem:[#allocation0]]
  $region46: #{forward.1} parent=0
    _
  %s10 = ssub.s32 1, %s8
  %s11 = scalar_select 0, %s10, %s8
  $region1: #{forward.1} parent=0
    #allocation2 [shape = 'u8[2293760]{0}', space=vmem, size = 0x230000, scoped, tag = 'input window, operand 1, single buffered']
    #allocation3 [shape = 's32[1]{0}', space=sflag, size = 0x4, scoped, tag = 'scoped memory for forward.1']
    #allocation4 [shape = 'u8[8192]{0}', space=vmem, size = 0x2000, scoped, tag = 'input window, operand 2, single buffered']
    #allocation5 [shape = 's32[1]{0}', space=sflag, size = 0x4, scoped, tag = 'scoped memory for forward.1']
    %12 = vsyncpa [#allocation3], 0
    %13 = vsyncpa [#allocation5], 0
    // Predicated region
    $region2: #{forward.1} parent=1 // pred_check
      _
    $region3: #{forward.1} parent=1 // pred_check_branch
      %15 = sbr.rel (0) target = $region5
    $region4: #{forward.1} parent=1 // pred_region
      _
    $region5: #{forward.1} parent=1 // pred_fallthru
      _
    // Predicated region
    $region6: #{forward.1} parent=1 // pred_check
      _
    $region7: #{forward.1} parent=1 // pred_check_branch
      %17 = sbr.rel (0) target = $region9
    $region8: #{forward.1} parent=1 // pred_region
      %s19 = ssub.s32 71680, 71680
      %20 = vsyncadd [#allocation3], %s19
      %s21 = sshll.u32 [#allocation2], 4
      %s22 = int_to_ptr.vmem [resolvable:$true] %s21
      %27 = dma.hbm_to_vmem [thread:$0]  %s1, 71680, %s22, [#allocation3], 128, 128, 8
    $region9: #{forward.1} parent=1 // pred_fallthru
      _
    // Predicated region
    $region10: #{forward.1} parent=1 // pred_check
      _
    $region11: #{forward.1} parent=1 // pred_check_branch
      %29 = sbr.rel (0) target = $region13
    $region12: #{forward.1} parent=1 // pred_region
      %s31 = ssub.s32 256, 256
      %32 = vsyncadd [#allocation5], %s31
      %s33 = sshll.u32 [#allocation4], 4
      %s34 = int_to_ptr.vmem [resolvable:$true] %s33
      %39 = dma.hbm_to_vmem [thread:$0]  %s2, 256, %s34, [#allocation5], 128, 128, 8
    $region13: #{forward.1} parent=1 // pred_fallthru
      _
    // Predicated region
    $region14: #{forward.1} parent=1 // pred_check
      _
    $region15: #{forward.1} parent=1 // pred_check_branch
      %41 = sbr.rel (0) target = $region17
    $region16: #{forward.1} parent=1 // pred_region
      _
    $region17: #{forward.1} parent=1 // pred_fallthru
      _
    // Predicated region
    $region18: #{forward.1} parent=1 // pred_check
      _
    $region19: #{forward.1} parent=1 // pred_check_branch
      %43 = sbr.rel (0) target = $region21
    $region20: #{forward.1} parent=1 // pred_region
      _
    $region21: #{forward.1} parent=1 // pred_fallthru
      _
    // Predicated region
    $region22: #{forward.1} parent=1 // pred_check
      _
    $region23: #{forward.1} parent=1 // pred_check_branch
      %45 = sbr.rel (0) target = $region25
    $region24: #{forward.1} parent=1 // pred_region
      _
    $region25: #{forward.1} parent=1 // pred_fallthru
      _
    // Predicated region
    $region26: #{forward.1} parent=1 // pred_check
      _
    $region27: #{forward.1} parent=1 // pred_check_branch
      %47 = sbr.rel (0) target = $region29
    $region28: #{forward.1} parent=1 // pred_region
      _
    $region29: #{forward.1} parent=1 // pred_fallthru
      _
    // Predicated region
    $region30: #{forward.1} parent=1 // pred_check
      _
    $region31: #{forward.1} parent=1 // pred_check_branch
      %49 = sbr.rel (0) target = $region33
    $region32: #{forward.1} parent=1 // pred_region
      %50 = dma.done [#allocation3], 71680
    $region33: #{forward.1} parent=1 // pred_fallthru
      _
    // Predicated region
    $region34: #{forward.1} parent=1 // pred_check
      _
    $region35: #{forward.1} parent=1 // pred_check_branch
      %52 = sbr.rel (0) target = $region37
    $region36: #{forward.1} parent=1 // pred_region
      %53 = dma.done [#allocation5], 256
    $region37: #{forward.1} parent=1 // pred_fallthru
      _
    %v54 = vld [vmem:[%s0] sm:$0xff]
    %v55 = vld [vmem:[%s0 + $0x8] sm:$0xff]
    %v56 = vld [vmem:[%s0 + $0x10] sm:$0xff]
    %v57 = vld [vmem:[%s0 + $0x18] sm:$0xff]
    %v58 = vrot.slane %v54, 7
    %v59 = vrot.slane %v55, 7
    %v60 = vrot.slane %v56, 7
    %v61 = vrot.slane %v57, 7
    %v62 = vlaneseq
    %v63 = vshrl.u32 %v62, 7
    %vm64 = vcmp.lt.s32.totalorder %v63, 1
    %v65 = vsel %vm64, %v60, %v61
    %v66 = vsel %vm64, %v59, %v60
    %v67 = vsel %vm64, %v58, %v59
    %v68 = vsel %vm64, %v61, %v58
    %v69 = vadd.s32 %v63, 8
    %v70 = vadd.s32 %v63, 16
    %v71 = vadd.s32 %v63, 24
    %vm72 = vcmp.lt.s32.totalorder %v63, 0
    %v73 = vsub.s32 0, %v63
    %v74 = vsel %vm72, %v73, %v63
    %v75 = vshrl.u32 %v74, 4
    %v76 = vand.u32 %v74, 15
    %v77 = vsub.s32 0, %v76
    %v78 = vsel %vm72, %v77, %v76
    %vm79 = vcmp.lt.s32.totalorder %v69, 0
    %v80 = vsub.s32 0, %v69
    %v81 = vsel %vm79, %v80, %v69
    %v82 = vshrl.u32 %v81, 4
    %v83 = vand.u32 %v81, 15
    %v84 = vsub.s32 0, %v83
    %v85 = vsel %vm79, %v84, %v83
    %vm86 = vcmp.lt.s32.totalorder %v70, 0
    %v87 = vsub.s32 0, %v70
    %v88 = vsel %vm86, %v87, %v70
    %v89 = vshrl.u32 %v88, 4
    %v90 = vand.u32 %v88, 15
    %v91 = vsub.s32 0, %v90
    %v92 = vsel %vm86, %v91, %v90
    %vm93 = vcmp.lt.s32.totalorder %v71, 0
    %v94 = vsub.s32 0, %v71
    %v95 = vsel %vm93, %v94, %v71
    %v96 = vshrl.u32 %v95, 4
    %v97 = vand.u32 %v95, 15
    %v98 = vsub.s32 0, %v97
    %v99 = vsel %vm93, %v98, %v97
    %vm100 = vcmp.ne.s32.totalorder %v78, 0
    %vm101 = vcmp.ne.s32.totalorder %v85, 0
    %vm102 = vcmp.ne.s32.totalorder %v92, 0
    %vm103 = vcmp.ne.s32.totalorder %v99, 0
    %vm104 = vcmp.lt.s32.totalorder %v78, 0
    %vm105 = vcmp.lt.s32.totalorder %v85, 0
    %vm106 = vcmp.lt.s32.totalorder %v92, 0
    %vm107 = vcmp.lt.s32.totalorder %v99, 0
    %vm108 = vmand %vm104, %vm100
    %vm109 = vmand %vm105, %vm101
    %vm110 = vmand %vm106, %vm102
    %vm111 = vmand %vm107, %vm103
    %v112 = vadd.s32 %v78, 16
    %v113 = vadd.s32 %v85, 16
    %v114 = vadd.s32 %v92, 16
    %v115 = vadd.s32 %v99, 16
    %v116 = vsel %vm108, %v112, %v78
    %v117 = vsel %vm109, %v113, %v85
    %v118 = vsel %vm110, %v114, %v92
    %v119 = vsel %vm111, %v115, %v99
    %vm120 = vcmp.eq.s32.totalorder %v116, 0
    %vm121 = vcmp.eq.s32.totalorder %v117, 0
    %vm122 = vcmp.eq.s32.totalorder %v118, 0
    %vm123 = vcmp.eq.s32.totalorder %v119, 0
    %v124 = vsel %vm120, 0.0, %v68
    %v125 = vsel %vm121, 0.0, %v67
    %v126 = vsel %vm122, 0.0, %v66
    %v127 = vsel %vm123, 0.0, %v65
    %v128 = vrot.slane %v54, 1
    %v129 = vrot.slane %v55, 1
    %v130 = vrot.slane %v56, 1
    %v131 = vrot.slane %v57, 1
    %vm132 = vcmp.lt.s32.totalorder %v63, 7
    %v133 = vsel %vm132, %v130, %v131
    %v134 = vsel %vm132, %v129, %v130
    %v135 = vsel %vm132, %v128, %v129
    %v136 = vsel %vm132, %v131, %v128
    %vm137 = vcmp.eq.s32.totalorder %v116, 15
    %vm138 = vcmp.eq.s32.totalorder %v117, 15
    %vm139 = vcmp.eq.s32.totalorder %v118, 15
    %vm140 = vcmp.eq.s32.totalorder %v119, 15
    %v141 = vsel %vm137, 0.0, %v135
    %v142 = vsel %vm138, 0.0, %v134
    %v143 = vsel %vm139, 0.0, %v133
    %v144 = vsel %vm140, 0.0, %v136
    %v145 = vld [vmem:[#allocation2] sm:$0xff]
    %v146 = vld [vmem:[#allocation2 + $0x8] sm:$0xff]
    %v147 = vld [vmem:[#allocation2 + $0x10] sm:$0xff]
    %v148 = vld [vmem:[#allocation2 + $0x18] sm:$0xff]
    %v149 = vld [vmem:[#allocation2 + $0x20] sm:$0xff]
    %v150 = vld [vmem:[#allocation2 + $0x28] sm:$0xff]
    %v151 = vld [vmem:[#allocation2 + $0x30] sm:$0xff]
    %v152 = vld [vmem:[#allocation2 + $0x38] sm:$0xff]
    %v153 = vld [vmem:[#allocation2 + $0x40] sm:$0xff]
    %v154 = vld [vmem:[#allocation2 + $0x48] sm:$0xff]
    %v155 = vld [vmem:[#allocation2 + $0x50] sm:$0xff]
    %v156 = vld [vmem:[#allocation2 + $0x58] sm:$0xff]
    %v157 = vld [vmem:[#allocation2 + $0x60] sm:$0xff]
    %v158 = vld [vmem:[#allocation2 + $0x68] sm:$0xff]
    %v159 = vld [vmem:[#allocation2 + $0x70] sm:$0xff]
    %v160 = vld [vmem:[#allocation2 + $0x78] sm:$0xff]
    %v161 = vld [vmem:[#allocation2 + $0x80] sm:$0xff]
    %v162 = vld [vmem:[#allocation2 + $0x88] sm:$0xff]
    %v163 = vld [vmem:[#allocation2 + $0x90] sm:$0xff]
    %v164 = vld [vmem:[#allocation2 + $0x98] sm:$0xff]
    %v165 = vld [vmem:[#allocation2 + $0xa0] sm:$0xff]
    %v166 = vld [vmem:[#allocation2 + $0xa8] sm:$0xff]
    %v167 = vld [vmem:[#allocation2 + $0xb0] sm:$0xff]
    %v168 = vld [vmem:[#allocation2 + $0xb8] sm:$0xff]
    %v169 = vld [vmem:[#allocation2 + $0xc0] sm:$0xff]
    %v170 = vld [vmem:[#allocation2 + $0xc8] sm:$0xff]
    %v171 = vld [vmem:[#allocation2 + $0xd0] sm:$0xff]
    %v172 = vld [vmem:[#allocation2 + $0xd8] sm:$0xff]
    %v173 = vld [vmem:[#allocation2 + $0xe0] sm:$0xff]
    %v174 = vld [vmem:[#allocation2 + $0xe8] sm:$0xff]
    %v175 = vld [vmem:[#allocation2 + $0xf0] sm:$0xff]
    %v176 = vld [vmem:[#allocation2 + $0xf8] sm:$0xff]
    %v177 = vld [vmem:[#allocation2 + $0x100] sm:$0xff]
    %v178 = vld [vmem:[#allocation2 + $0x108] sm:$0xff]
    %v179 = vld [vmem:[#allocation2 + $0x110] sm:$0xff]
    %v180 = vld [vmem:[#allocation2 + $0x118] sm:$0xff]
    %v181 = vld [vmem:[#allocation2 + $0x120] sm:$0xff]
    %v182 = vld [vmem:[#allocation2 + $0x128] sm:$0xff]
    %v183 = vld [vmem:[#allocation2 + $0x130] sm:$0xff]
    %v184 = vld [vmem:[#allocation2 + $0x138] sm:$0xff]
    %v185 = vld [vmem:[#allocation2 + $0x140] sm:$0xff]
    %v186 = vld [vmem:[#allocation2 + $0x148] sm:$0xff]
    %v187 = vld [vmem:[#allocation2 + $0x150] sm:$0xff]
    %v188 = vld [vmem:[#allocation2 + $0x158] sm:$0xff]
    %v189 = vld [vmem:[#allocation2 + $0x160] sm:$0xff]
    %v190 = vld [vmem:[#allocation2 + $0x168] sm:$0xff]
    %v191 = vld [vmem:[#allocation2 + $0x170] sm:$0xff]
    %v192 = vld [vmem:[#allocation2 + $0x178] sm:$0xff]
    %v193 = vld [vmem:[#allocation4] sm:$0x1]
    %v194 = vlaneseq
    %v195 = vshrl.u32 %v194, 7
    %v196 = vsub.s32 0, %v195
    %v197 = vrot.slane %v193, %v196
    %198 = vmatprep.subr.mxu0 0.0
    %199 = vmatpush1.msra.mxu0 %v160
    %200 = vmatprep.subr.mxu0 0.0
    %201 = vmatpush1.msra.mxu0 %v159
    %202 = vmatprep.subr.mxu0 0.0
    %203 = vmatpush1.msra.mxu0 %v158
    %204 = vmatprep.subr.mxu0 0.0
    %205 = vmatpush1.msra.mxu0 %v157
    %206 = vmatprep.subr.mxu0 0.0
    %207 = vmatpush1.msra.mxu0 %v156
    %208 = vmatprep.subr.mxu0 0.0
    %209 = vmatpush1.msra.mxu0 %v155
    %210 = vmatprep.subr.mxu0 0.0
    %211 = vmatpush1.msra.mxu0 %v154
    %212 = vmatprep.subr.mxu0 0.0
    %213 = vmatpush1.msra.mxu0 %v153
    %214 = vmatprep.subr.mxu0 0.0
    %215 = vmatpush1.msra.mxu0 %v152
    %216 = vmatprep.subr.mxu0 0.0
    %217 = vmatpush1.msra.mxu0 %v151
    %218 = vmatprep.subr.mxu0 0.0
    %219 = vmatpush1.msra.mxu0 %v150
    %220 = vmatprep.subr.mxu0 0.0
    %221 = vmatpush1.msra.mxu0 %v149
    %222 = vmatprep.subr.mxu0 0.0
    %223 = vmatpush1.msra.mxu0 %v148
    %224 = vmatprep.subr.mxu0 0.0
    %225 = vmatpush1.msra.mxu0 %v147
    %226 = vmatprep.subr.mxu0 0.0
    %227 = vmatpush1.msra.mxu0 %v146
    %228 = vmatprep.subr.mxu0 0.0
    %229 = vmatpush1.msra.mxu0 %v145
    %230 = vmatprep.subr.mxu0 0.0
    %231 = vmatpush2.msra.mxu0 %v176
    %232 = vmatprep.subr.mxu0 0.0
    %233 = vmatpush2.msra.mxu0 %v175
    %234 = vmatprep.subr.mxu0 0.0
    %235 = vmatpush2.msra.mxu0 %v174
    %236 = vmatprep.subr.mxu0 0.0
    %237 = vmatpush2.msra.mxu0 %v173
    %238 = vmatprep.subr.mxu0 0.0
    %239 = vmatpush2.msra.mxu0 %v172
    %240 = vmatprep.subr.mxu0 0.0
    %241 = vmatpush2.msra.mxu0 %v171
    %242 = vmatprep.subr.mxu0 0.0
    %243 = vmatpush2.msra.mxu0 %v170
    %244 = vmatprep.subr.mxu0 0.0
    %245 = vmatpush2.msra.mxu0 %v169
    %246 = vmatprep.subr.mxu0 0.0
    %247 = vmatpush2.msra.mxu0 %v168
    %248 = vmatprep.subr.mxu0 0.0
    %249 = vmatpush2.msra.mxu0 %v167
    %250 = vmatprep.subr.mxu0 0.0
    %251 = vmatpush2.msra.mxu0 %v166
    %252 = vmatprep.subr.mxu0 0.0
    %253 = vmatpush2.msra.mxu0 %v165
    %254 = vmatprep.subr.mxu0 0.0
    %255 = vmatpush2.msra.mxu0 %v164
    %256 = vmatprep.subr.mxu0 0.0
    %257 = vmatpush2.msra.mxu0 %v163
    %258 = vmatprep.subr.mxu0 0.0
    %259 = vmatpush2.msra.mxu0 %v162
    %260 = vmatprep.subr.mxu0 0.0
    %261 = vmatpush2.msra.mxu0 %v161
    %262 = vmatprep.mubr.f32.mxu0 %v54
    %263 = vmatmul.mubr.f32.gmra.mxu0 %v124
    %v264 = vpop.f32.mrf.mxu0
    %v265 = vadd.f32 %v197, %v264
    %v266 = vpop.f32.mrf.mxu0
    %267 = vmatprep.mubr.f32.mxu0 %v55
    %268 = vmatmul.mubr.f32.gmra.mxu0 %v125
    %v269 = vpop.f32.mrf.mxu0
    %v270 = vadd.f32 %v197, %v269
    %v271 = vpop.f32.mrf.mxu0
    %272 = vmatprep.mubr.f32.mxu0 %v56
    %273 = vmatmul.mubr.f32.gmra.mxu0 %v126
    %v274 = vpop.f32.mrf.mxu0
    %v275 = vadd.f32 %v197, %v274
    %v276 = vpop.f32.mrf.mxu0
    %277 = vmatprep.mubr.f32.mxu0 %v57
    %278 = vmatmul.mubr.f32.gmra.mxu0 %v127
    %v279 = vpop.f32.mrf.mxu0
    %v280 = vadd.f32 %v197, %v279
    %v281 = vpop.f32.mrf.mxu0
    %282 = vdwg.mxu0
    %283 = vmatprep.subr.mxu0 0.0
    %284 = vmatpush1.msra.mxu0 %v192
    %285 = vmatprep.subr.mxu0 0.0
    %286 = vmatpush1.msra.mxu0 %v191
    %287 = vmatprep.subr.mxu0 0.0
    %288 = vmatpush1.msra.mxu0 %v190
    %289 = vmatprep.subr.mxu0 0.0
    %290 = vmatpush1.msra.mxu0 %v189
    %291 = vmatprep.subr.mxu0 0.0
    %292 = vmatpush1.msra.mxu0 %v188
    %293 = vmatprep.subr.mxu0 0.0
    %294 = vmatpush1.msra.mxu0 %v187
    %295 = vmatprep.subr.mxu0 0.0
    %296 = vmatpush1.msra.mxu0 %v186
    %297 = vmatprep.subr.mxu0 0.0
    %298 = vmatpush1.msra.mxu0 %v185
    %299 = vmatprep.subr.mxu0 0.0
    %300 = vmatpush1.msra.mxu0 %v184
    %301 = vmatprep.subr.mxu0 0.0
    %302 = vmatpush1.msra.mxu0 %v183
    %303 = vmatprep.subr.mxu0 0.0
    %304 = vmatpush1.msra.mxu0 %v182
    %305 = vmatprep.subr.mxu0 0.0
    %306 = vmatpush1.msra.mxu0 %v181
    %307 = vmatprep.subr.mxu0 0.0
    %308 = vmatpush1.msra.mxu0 %v180
    %309 = vmatprep.subr.mxu0 0.0
    %310 = vmatpush1.msra.mxu0 %v179
    %311 = vmatprep.subr.mxu0 0.0
    %312 = vmatpush1.msra.mxu0 %v178
    %313 = vmatprep.subr.mxu0 0.0
    %314 = vmatpush1.msra.mxu0 %v177
    %315 = vmatprep.subr.mxu0 0.0
    %316 = vmatpush2.msra.mxu0 0.0
    %317 = vmatprep.subr.mxu0 0.0
    %318 = vmatpush2.msra.mxu0 0.0
    %319 = vmatprep.subr.mxu0 0.0
    %320 = vmatpush2.msra.mxu0 0.0
    %321 = vmatprep.subr.mxu0 0.0
    %322 = vmatpush2.msra.mxu0 0.0
    %323 = vmatprep.subr.mxu0 0.0
    %324 = vmatpush2.msra.mxu0 0.0
    %325 = vmatprep.subr.mxu0 0.0
    %326 = vmatpush2.msra.mxu0 0.0
    %327 = vmatprep.subr.mxu0 0.0
    %328 = vmatpush2.msra.mxu0 0.0
    %329 = vmatprep.subr.mxu0 0.0
    %330 = vmatpush2.msra.mxu0 0.0
    %331 = vmatprep.subr.mxu0 0.0
    %332 = vmatpush2.msra.mxu0 0.0
    %333 = vmatprep.subr.mxu0 0.0
    %334 = vmatpush2.msra.mxu0 0.0
    %335 = vmatprep.subr.mxu0 0.0
    %336 = vmatpush2.msra.mxu0 0.0
    %337 = vmatprep.subr.mxu0 0.0
    %338 = vmatpush2.msra.mxu0 0.0
    %339 = vmatprep.subr.mxu0 0.0
    %340 = vmatpush2.msra.mxu0 0.0
    %341 = vmatprep.subr.mxu0 0.0
    %342 = vmatpush2.msra.mxu0 0.0
    %343 = vmatprep.subr.mxu0 0.0
    %344 = vmatpush2.msra.mxu0 0.0
    %345 = vmatprep.subr.mxu0 0.0
    %346 = vmatpush2.msra.mxu0 0.0
    %347 = vmatprep.mubr.f32.mxu0 0.0
    %348 = vmatmul.mubr.f32.gmra.mxu0 %v141
    %v349 = vpop.f32.mrf.mxu0
    %v350 = vadd.f32 %v265, %v349
    %v351 = vpop.f32.mrf.mxu0
    %352 = vmatprep.mubr.f32.mxu0 0.0
    %353 = vmatmul.mubr.f32.gmra.mxu0 %v142
    %v354 = vpop.f32.mrf.mxu0
    %v355 = vadd.f32 %v270, %v354
    %v356 = vpop.f32.mrf.mxu0
    %357 = vmatprep.mubr.f32.mxu0 0.0
    %358 = vmatmul.mubr.f32.gmra.mxu0 %v143
    %v359 = vpop.f32.mrf.mxu0
    %v360 = vadd.f32 %v275, %v359
    %v361 = vpop.f32.mrf.mxu0
    %362 = vmatprep.mubr.f32.mxu0 0.0
    %363 = vmatmul.mubr.f32.gmra.mxu0 %v144
    %v364 = vpop.f32.mrf.mxu0
    %v365 = vadd.f32 %v280, %v364
    %v366 = vpop.f32.mrf.mxu0
    %367 = vdwg.mxu0
    %v368 = vmax.f32 %v350, 0.0
    %v369 = vmax.f32 %v355, 0.0
    %v370 = vmax.f32 %v360, 0.0
    %v371 = vmax.f32 %v365, 0.0
    %v372 = vrot.slane %v368, 7
    %v373 = vrot.slane %v369, 7
    %v374 = vrot.slane %v370, 7
    %v375 = vrot.slane %v371, 7
    %v376 = vsel %vm64, %v374, %v375
    %v377 = vsel %vm64, %v373, %v374
    %v378 = vsel %vm64, %v372, %v373
    %v379 = vsel %vm64, %v375, %v372
    %v380 = vsel %vm120, 0.0, %v379
    %v381 = vsel %vm121, 0.0, %v378
    %v382 = vsel %vm122, 0.0, %v377
    %v383 = vsel %vm123, 0.0, %v376
    %v384 = vrot.slane %v368, 1
    %v385 = vrot.slane %v369, 1
    %v386 = vrot.slane %v370, 1
    %v387 = vrot.slane %v371, 1
    %v388 = vsel %vm132, %v386, %v387
    %v389 = vsel %vm132, %v385, %v386
    %v390 = vsel %vm132, %v384, %v385
    %v391 = vsel %vm132, %v387, %v384
    %v392 = vsel %vm137, 0.0, %v390
    %v393 = vsel %vm138, 0.0, %v389
    %v394 = vsel %vm139, 0.0, %v388
    %v395 = vsel %vm140, 0.0, %v391
    %v396 = vld [vmem:[#allocation2 + $0x180] sm:$0xff]
    %v397 = vld [vmem:[#allocation2 + $0x188] sm:$0xff]
    %v398 = vld [vmem:[#allocation2 + $0x190] sm:$0xff]
    %v399 = vld [vmem:[#allocation2 + $0x198] sm:$0xff]
    %v400 = vld [vmem:[#allocation2 + $0x1a0] sm:$0xff]
    %v401 = vld [vmem:[#allocation2 + $0x1a8] sm:$0xff]
    %v402 = vld [vmem:[#allocation2 + $0x1b0] sm:$0xff]
    %v403 = vld [vmem:[#allocation2 + $0x1b8] sm:$0xff]
    %v404 = vld [vmem:[#allocation2 + $0x1c0] sm:$0xff]
    %v405 = vld [vmem:[#allocation2 + $0x1c8] sm:$0xff]
    %v406 = vld [vmem:[#allocation2 + $0x1d0] sm:$0xff]
    %v407 = vld [vmem:[#allocation2 + $0x1d8] sm:$0xff]
    %v408 = vld [vmem:[#allocation2 + $0x1e0] sm:$0xff]
    %v409 = vld [vmem:[#allocation2 + $0x1e8] sm:$0xff]
    %v410 = vld [vmem:[#allocation2 + $0x1f0] sm:$0xff]
    %v411 = vld [vmem:[#allocation2 + $0x1f8] sm:$0xff]
    %v412 = vld [vmem:[#allocation2 + $0x200] sm:$0xff]
    %v413 = vld [vmem:[#allocation2 + $0x208] sm:$0xff]
    %v414 = vld [vmem:[#allocation2 + $0x210] sm:$0xff]
    %v415 = vld [vmem:[#allocation2 + $0x218] sm:$0xff]
    %v416 = vld [vmem:[#allocation2 + $0x220] sm:$0xff]
    %v417 = vld [vmem:[#allocation2 + $0x228] sm:$0xff]
    %v418 = vld [vmem:[#allocation2 + $0x230] sm:$0xff]
    %v419 = vld [vmem:[#allocation2 + $0x238] sm:$0xff]
    %v420 = vld [vmem:[#allocation2 + $0x240] sm:$0xff]
    %v421 = vld [vmem:[#allocation2 + $0x248] sm:$0xff]
    %v422 = vld [vmem:[#allocation2 + $0x250] sm:$0xff]
    %v423 = vld [vmem:[#allocation2 + $0x258] sm:$0xff]
    %v424 = vld [vmem:[#allocation2 + $0x260] sm:$0xff]
    %v425 = vld [vmem:[#allocation2 + $0x268] sm:$0xff]
    %v426 = vld [vmem:[#allocation2 + $0x270] sm:$0xff]
    %v427 = vld [vmem:[#allocation2 + $0x278] sm:$0xff]
    %v428 = vld [vmem:[#allocation2 + $0x280] sm:$0xff]
    %v429 = vld [vmem:[#allocation2 + $0x288] sm:$0xff]
    %v430 = vld [vmem:[#allocation2 + $0x290] sm:$0xff]
    %v431 = vld [vmem:[#allocation2 + $0x298] sm:$0xff]
    %v432 = vld [vmem:[#allocation2 + $0x2a0] sm:$0xff]
    %v433 = vld [vmem:[#allocation2 + $0x2a8] sm:$0xff]
    %v434 = vld [vmem:[#allocation2 + $0x2b0] sm:$0xff]
    %v435 = vld [vmem:[#allocation2 + $0x2b8] sm:$0xff]
    %v436 = vld [vmem:[#allocation2 + $0x2c0] sm:$0xff]
    %v437 = vld [vmem:[#allocation2 + $0x2c8] sm:$0xff]
    %v438 = vld [vmem:[#allocation2 + $0x2d0] sm:$0xff]
    %v439 = vld [vmem:[#allocation2 + $0x2d8] sm:$0xff]
    %v440 = vld [vmem:[#allocation2 + $0x2e0] sm:$0xff]
    %v441 = vld [vmem:[#allocation2 + $0x2e8] sm:$0xff]
    %v442 = vld [vmem:[#allocation2 + $0x2f0] sm:$0xff]
    %v443 = vld [vmem:[#allocation2 + $0x2f8] sm:$0xff]
    %v444 = vld [vmem:[#allocation4 + $0x1] sm:$0x1]
    %v445 = vlaneseq
    %v446 = vshrl.u32 %v445, 7
    %v447 = vsub.s32 0, %v446
    %v448 = vrot.slane %v444, %v447
    %449 = vmatprep.subr.mxu0 0.0
    %450 = vmatpush1.msra.mxu0 %v411
    %451 = vmatprep.subr.mxu0 0.0
    %452 = vmatpush1.msra.mxu0 %v410
    %453 = vmatprep.subr.mxu0 0.0
    %454 = vmatpush1.msra.mxu0 %v409
    %455 = vmatprep.subr.mxu0 0.0
    %456 = vmatpush1.msra.mxu0 %v408
    %457 = vmatprep.subr.mxu0 0.0
    %458 = vmatpush1.msra.mxu0 %v407
    %459 = vmatprep.subr.mxu0 0.0
    %460 = vmatpush1.msra.mxu0 %v406
    %461 = vmatprep.subr.mxu0 0.0
    %462 = vmatpush1.msra.mxu0 %v405
    %463 = vmatprep.subr.mxu0 0.0
    %464 = vmatpush1.msra.mxu0 %v404
    %465 = vmatprep.subr.mxu0 0.0
    %466 = vmatpush1.msra.mxu0 %v403
    %467 = vmatprep.subr.mxu0 0.0
    %468 = vmatpush1.msra.mxu0 %v402
    %469 = vmatprep.subr.mxu0 0.0
    %470 = vmatpush1.msra.mxu0 %v401
    %471 = vmatprep.subr.mxu0 0.0
    %472 = vmatpush1.msra.mxu0 %v400
    %473 = vmatprep.subr.mxu0 0.0
    %474 = vmatpush1.msra.mxu0 %v399
    %475 = vmatprep.subr.mxu0 0.0
    %476 = vmatpush1.msra.mxu0 %v398
    %477 = vmatprep.subr.mxu0 0.0
    %478 = vmatpush1.msra.mxu0 %v397
    %479 = vmatprep.subr.mxu0 0.0
    %480 = vmatpush1.msra.mxu0 %v396
    %481 = vmatprep.subr.mxu0 0.0
    %482 = vmatpush2.msra.mxu0 %v427
    %483 = vmatprep.subr.mxu0 0.0
    %484 = vmatpush2.msra.mxu0 %v426
    %485 = vmatprep.subr.mxu0 0.0
    %486 = vmatpush2.msra.mxu0 %v425
    %487 = vmatprep.subr.mxu0 0.0
    %488 = vmatpush2.msra.mxu0 %v424
    %489 = vmatprep.subr.mxu0 0.0
    %490 = vmatpush2.msra.mxu0 %v423
    %491 = vmatprep.subr.mxu0 0.0
    %492 = vmatpush2.msra.mxu0 %v422
    %493 = vmatprep.subr.mxu0 0.0
    %494 = vmatpush2.msra.mxu0 %v421
    %495 = vmatprep.subr.mxu0 0.0
    %496 = vmatpush2.msra.mxu0 %v420
    %497 = vmatprep.subr.mxu0 0.0
    %498 = vmatpush2.msra.mxu0 %v419
    %499 = vmatprep.subr.mxu0 0.0
    %500 = vmatpush2.msra.mxu0 %v418
    %501 = vmatprep.subr.mxu0 0.0
    %502 = vmatpush2.msra.mxu0 %v417
    %503 = vmatprep.subr.mxu0 0.0
    %504 = vmatpush2.msra.mxu0 %v416
    %505 = vmatprep.subr.mxu0 0.0
    %506 = vmatpush2.msra.mxu0 %v415
    %507 = vmatprep.subr.mxu0 0.0
    %508 = vmatpush2.msra.mxu0 %v414
    %509 = vmatprep.subr.mxu0 0.0
    %510 = vmatpush2.msra.mxu0 %v413
    %511 = vmatprep.subr.mxu0 0.0
    %512 = vmatpush2.msra.mxu0 %v412
    %513 = vmatprep.mubr.f32.mxu0 %v368
    %514 = vmatmul.mubr.f32.gmra.mxu0 %v380
    %v515 = vpop.f32.mrf.mxu0
    %v516 = vadd.f32 %v448, %v515
    %v517 = vpop.f32.mrf.mxu0
    %518 = vmatprep.mubr.f32.mxu0 %v369
    %519 = vmatmul.mubr.f32.gmra.mxu0 %v381
    %v520 = vpop.f32.mrf.mxu0
    %v521 = vadd.f32 %v448, %v520
    %v522 = vpop.f32.mrf.mxu0
    %523 = vmatprep.mubr.f32.mxu0 %v370
    %524 = vmatmul.mubr.f32.gmra.mxu0 %v382
    %v525 = vpop.f32.mrf.mxu0
    %v526 = vadd.f32 %v448, %v525
    %v527 = vpop.f32.mrf.mxu0
    %528 = vmatprep.mubr.f32.mxu0 %v371
    %529 = vmatmul.mubr.f32.gmra.mxu0 %v383
    %v530 = vpop.f32.mrf.mxu0
    %v531 = vadd.f32 %v448, %v530
    %v532 = vpop.f32.mrf.mxu0
    %533 = vdwg.mxu0
    %534 = vmatprep.subr.mxu0 0.0
    %535 = vmatpush1.msra.mxu0 %v443
    %536 = vmatprep.subr.mxu0 0.0
    %537 = vmatpush1.msra.mxu0 %v442
    %538 = vmatprep.subr.mxu0 0.0
    %539 = vmatpush1.msra.mxu0 %v441
    %540 = vmatprep.subr.mxu0 0.0
    %541 = vmatpush1.msra.mxu0 %v440
    %542 = vmatprep.subr.mxu0 0.0
    %543 = vmatpush1.msra.mxu0 %v439
    %544 = vmatprep.subr.mxu0 0.0
    %545 = vmatpush1.msra.mxu0 %v438
    %546 = vmatprep.subr.mxu0 0.0
    %547 = vmatpush1.msra.mxu0 %v437
    %548 = vmatprep.subr.mxu0 0.0
    %549 = vmatpush1.msra.mxu0 %v436
    %550 = vmatprep.subr.mxu0 0.0
    %551 = vmatpush1.msra.mxu0 %v435
    %552 = vmatprep.subr.mxu0 0.0
    %553 = vmatpush1.msra.mxu0 %v434
    %554 = vmatprep.subr.mxu0 0.0
    %555 = vmatpush1.msra.mxu0 %v433
    %556 = vmatprep.subr.mxu0 0.0
    %557 = vmatpush1.msra.mxu0 %v432
    %558 = vmatprep.subr.mxu0 0.0
    %559 = vmatpush1.msra.mxu0 %v431
    %560 = vmatprep.subr.mxu0 0.0
    %561 = vmatpush1.msra.mxu0 %v430
    %562 = vmatprep.subr.mxu0 0.0
    %563 = vmatpush1.msra.mxu0 %v429
    %564 = vmatprep.subr.mxu0 0.0
    %565 = vmatpush1.msra.mxu0 %v428
    %566 = vmatprep.subr.mxu0 0.0
    %567 = vmatpush2.msra.mxu0 0.0
    %568 = vmatprep.subr.mxu0 0.0
    %569 = vmatpush2.msra.mxu0 0.0
    %570 = vmatprep.subr.mxu0 0.0
    %571 = vmatpush2.msra.mxu0 0.0
    %572 = vmatprep.subr.mxu0 0.0
    %573 = vmatpush2.msra.mxu0 0.0
    %574 = vmatprep.subr.mxu0 0.0
    %575 = vmatpush2.msra.mxu0 0.0
    %576 = vmatprep.subr.mxu0 0.0
    %577 = vmatpush2.msra.mxu0 0.0
    %578 = vmatprep.subr.mxu0 0.0
    %579 = vmatpush2.msra.mxu0 0.0
    %580 = vmatprep.subr.mxu0 0.0
    %581 = vmatpush2.msra.mxu0 0.0
    %582 = vmatprep.subr.mxu0 0.0
    %583 = vmatpush2.msra.mxu0 0.0
    %584 = vmatprep.subr.mxu0 0.0
    %585 = vmatpush2.msra.mxu0 0.0
    %586 = vmatprep.subr.mxu0 0.0
    %587 = vmatpush2.msra.mxu0 0.0
    %588 = vmatprep.subr.mxu0 0.0
    %589 = vmatpush2.msra.mxu0 0.0
    %590 = vmatprep.subr.mxu0 0.0
    %591 = vmatpush2.msra.mxu0 0.0
    %592 = vmatprep.subr.mxu0 0.0
    %593 = vmatpush2.msra.mxu0 0.0
    %594 = vmatprep.subr.mxu0 0.0
    %595 = vmatpush2.msra.mxu0 0.0
    %596 = vmatprep.subr.mxu0 0.0
    %597 = vmatpush2.msra.mxu0 0.0
    %598 = vmatprep.mubr.f32.mxu0 0.0
    %599 = vmatmul.mubr.f32.gmra.mxu0 %v392
    %v600 = vpop.f32.mrf.mxu0
    %v601 = vadd.f32 %v516, %v600
    %v602 = vpop.f32.mrf.mxu0
    %603 = vmatprep.mubr.f32.mxu0 0.0
    %604 = vmatmul.mubr.f32.gmra.mxu0 %v393
    %v605 = vpop.f32.mrf.mxu0
    %v606 = vadd.f32 %v521, %v605
    %v607 = vpop.f32.mrf.mxu0
    %608 = vmatprep.mubr.f32.mxu0 0.0
    %609 = vmatmul.mubr.f32.gmra.mxu0 %v394
    %v610 = vpop.f32.mrf.mxu0
    %v611 = vadd.f32 %v526, %v610
    %v612 = vpop.f32.mrf.mxu0
    %613 = vmatprep.mubr.f32.mxu0 0.0
    %614 = vmatmul.mubr.f32.gmra.mxu0 %v395
    %v615 = vpop.f32.mrf.mxu0
    %v616 = vadd.f32 %v531, %v615
    %v617 = vpop.f32.mrf.mxu0
    %618 = vdwg.mxu0
    %v619 = vmax.f32 %v601, 0.0
    %v620 = vmax.f32 %v606, 0.0
    %v621 = vmax.f32 %v611, 0.0
    %v622 = vmax.f32 %v616, 0.0
    %v623 = vld [vmem:[%s3] sm:$0xff]
    %v624 = vld [vmem:[%s3 + $0x8] sm:$0xff]
    %v625 = vld [vmem:[%s3 + $0x10] sm:$0xff]
    %v626 = vld [vmem:[%s3 + $0x18] sm:$0xff]
    %v627 = vld [vmem:[%s3 + $0x20] sm:$0xff]
    %v628 = vld [vmem:[%s3 + $0x28] sm:$0xff]
    %v629 = vld [vmem:[%s3 + $0x30] sm:$0xff]
    %v630 = vld [vmem:[%s3 + $0x38] sm:$0xff]
    %v631 = vld [vmem:[%s3 + $0x40] sm:$0xff]
    %v632 = vld [vmem:[%s3 + $0x48] sm:$0xff]
    %v633 = vld [vmem:[%s3 + $0x50] sm:$0xff]
    %v634 = vld [vmem:[%s3 + $0x58] sm:$0xff]
    %v635 = vld [vmem:[%s3 + $0x60] sm:$0xff]
    %v636 = vld [vmem:[%s3 + $0x68] sm:$0xff]
    %v637 = vld [vmem:[%s3 + $0x70] sm:$0xff]
    %v638 = vld [vmem:[%s3 + $0x78] sm:$0xff]
    %vm639 = vcmask 261120
    %v641 = vsel %vm639, %v623, 0
    %v644 = vsel %vm639, %v624, 0
    %v647 = vsel %vm639, %v625, 0
    %v650 = vsel %vm639, %v626, 0
    %v653 = vsel %vm639, %v627, 0
    %v656 = vsel %vm639, %v628, 0
    %v659 = vsel %vm639, %v629, 0
    %v662 = vsel %vm639, %v630, 0
    %v665 = vsel %vm639, %v631, 0
    %v668 = vsel %vm639, %v632, 0
    %v671 = vsel %vm639, %v633, 0
    %v674 = vsel %vm639, %v634, 0
    %v677 = vsel %vm639, %v635, 0
    %v680 = vsel %vm639, %v636, 0
    %v683 = vsel %vm639, %v637, 0
    %v686 = vsel %vm639, %v638, 0
    %688 = vmatprep.subr.mxu0 0.0
    %689 = vmatpush1.msra.mxu0 0.0
    %690 = vmatprep.subr.mxu0 0.0
    %691 = vmatpush1.msra.mxu0 0.0
    %692 = vmatprep.subr.mxu0 0.0
    %693 = vmatpush1.msra.mxu0 0.0
    %694 = vmatprep.subr.mxu0 0.0
    %695 = vmatpush1.msra.mxu0 0.0
    %696 = vmatprep.subr.mxu0 0.0
    %697 = vmatpush1.msra.mxu0 0.0
    %698 = vmatprep.subr.mxu0 0.0
    %699 = vmatpush1.msra.mxu0 0.0
    %700 = vmatprep.subr.mxu0 0.0
    %701 = vmatpush1.msra.mxu0 0.0
    %702 = vmatprep.subr.mxu0 0.0
    %703 = vmatpush1.msra.mxu0 0.0
    %704 = vmatprep.subr.mxu0 0.0
    %705 = vmatpush1.msra.mxu0 0.0
    %706 = vmatprep.subr.mxu0 0.0
    %707 = vmatpush1.msra.mxu0 0.0
    %708 = vmatprep.subr.mxu0 0.0
    %709 = vmatpush1.msra.mxu0 0.0
    %710 = vmatprep.subr.mxu0 0.0
    %711 = vmatpush1.msra.mxu0 0.0
    %712 = vmatprep.subr.mxu0 0.0
    %713 = vmatpush1.msra.mxu0 %v622
    %714 = vmatprep.subr.mxu0 0.0
    %715 = vmatpush1.msra.mxu0 %v621
    %716 = vmatprep.subr.mxu0 0.0
    %717 = vmatpush1.msra.mxu0 %v620
    %718 = vmatprep.subr.mxu0 0.0
    %719 = vmatpush1.msra.mxu0 %v619
    %720 = vmatprep.subr.mxu0 0.0
    %721 = vmatpush2.msra.mxu0 0.0
    %722 = vmatprep.subr.mxu0 0.0
    %723 = vmatpush2.msra.mxu0 0.0
    %724 = vmatprep.subr.mxu0 0.0
    %725 = vmatpush2.msra.mxu0 0.0
    %726 = vmatprep.subr.mxu0 0.0
    %727 = vmatpush2.msra.mxu0 0.0
    %728 = vmatprep.subr.mxu0 0.0
    %729 = vmatpush2.msra.mxu0 0.0
    %730 = vmatprep.subr.mxu0 0.0
    %731 = vmatpush2.msra.mxu0 0.0
    %732 = vmatprep.subr.mxu0 0.0
    %733 = vmatpush2.msra.mxu0 0.0
    %734 = vmatprep.subr.mxu0 0.0
    %735 = vmatpush2.msra.mxu0 0.0
    %736 = vmatprep.subr.mxu0 0.0
    %737 = vmatpush2.msra.mxu0 0.0
    %738 = vmatprep.subr.mxu0 0.0
    %739 = vmatpush2.msra.mxu0 0.0
    %740 = vmatprep.subr.mxu0 0.0
    %741 = vmatpush2.msra.mxu0 0.0
    %742 = vmatprep.subr.mxu0 0.0
    %743 = vmatpush2.msra.mxu0 0.0
    %744 = vmatprep.subr.mxu0 0.0
    %745 = vmatpush2.msra.mxu0 0.0
    %746 = vmatprep.subr.mxu0 0.0
    %747 = vmatpush2.msra.mxu0 0.0
    %748 = vmatprep.subr.mxu0 0.0
    %749 = vmatpush2.msra.mxu0 0.0
    %750 = vmatprep.subr.mxu0 0.0
    %751 = vmatpush2.msra.mxu0 0.0
    %752 = vmatprep.mubr.f32.mxu0 0.0
    %753 = vmatmul.mubr.f32.gmra.mxu0 %v641
    %v754 = vpop.f32.mrf.mxu0
    %v755 = vadd.f32 0.0, %v754
    %v756 = vpop.f32.mrf.mxu0
    %757 = vmatprep.mubr.f32.mxu0 0.0
    %758 = vmatmul.mubr.f32.gmra.mxu0 %v644
    %v759 = vpop.f32.mrf.mxu0
    %v760 = vadd.f32 0.0, %v759
    %v761 = vpop.f32.mrf.mxu0
    %762 = vmatprep.mubr.f32.mxu0 0.0
    %763 = vmatmul.mubr.f32.gmra.mxu0 %v647
    %v764 = vpop.f32.mrf.mxu0
    %v765 = vadd.f32 0.0, %v764
    %v766 = vpop.f32.mrf.mxu0
    %767 = vmatprep.mubr.f32.mxu0 0.0
    %768 = vmatmul.mubr.f32.gmra.mxu0 %v650
    %v769 = vpop.f32.mrf.mxu0
    %v770 = vadd.f32 0.0, %v769
    %v771 = vpop.f32.mrf.mxu0
    %772 = vmatprep.mubr.f32.mxu0 0.0
    %773 = vmatmul.mubr.f32.gmra.mxu0 %v653
    %v774 = vpop.f32.mrf.mxu0
    %v775 = vadd.f32 0.0, %v774
    %v776 = vpop.f32.mrf.mxu0
    %777 = vmatprep.mubr.f32.mxu0 0.0
    %778 = vmatmul.mubr.f32.gmra.mxu0 %v656
    %v779 = vpop.f32.mrf.mxu0
    %v780 = vadd.f32 0.0, %v779
    %v781 = vpop.f32.mrf.mxu0
    %782 = vmatprep.mubr.f32.mxu0 0.0
    %783 = vmatmul.mubr.f32.gmra.mxu0 %v659
    %v784 = vpop.f32.mrf.mxu0
    %v785 = vadd.f32 0.0, %v784
    %v786 = vpop.f32.mrf.mxu0
    %787 = vmatprep.mubr.f32.mxu0 0.0
    %788 = vmatmul.mubr.f32.gmra.mxu0 %v662
    %v789 = vpop.f32.mrf.mxu0
    %v790 = vadd.f32 0.0, %v789
    %v791 = vpop.f32.mrf.mxu0
    %792 = vmatprep.mubr.f32.mxu0 0.0
    %793 = vmatmul.mubr.f32.gmra.mxu0 %v665
    %v794 = vpop.f32.mrf.mxu0
    %v795 = vadd.f32 0.0, %v794
    %v796 = vpop.f32.mrf.mxu0
    %797 = vmatprep.mubr.f32.mxu0 0.0
    %798 = vmatmul.mubr.f32.gmra.mxu0 %v668
    %v799 = vpop.f32.mrf.mxu0
    %v800 = vadd.f32 0.0, %v799
    %v801 = vpop.f32.mrf.mxu0
    %802 = vmatprep.mubr.f32.mxu0 0.0
    %803 = vmatmul.mubr.f32.gmra.mxu0 %v671
    %v804 = vpop.f32.mrf.mxu0
    %v805 = vadd.f32 0.0, %v804
    %v806 = vpop.f32.mrf.mxu0
    %807 = vmatprep.mubr.f32.mxu0 0.0
    %808 = vmatmul.mubr.f32.gmra.mxu0 %v674
    %v809 = vpop.f32.mrf.mxu0
    %v810 = vadd.f32 0.0, %v809
    %v811 = vpop.f32.mrf.mxu0
    %812 = vmatprep.mubr.f32.mxu0 0.0
    %813 = vmatmul.mubr.f32.gmra.mxu0 %v677
    %v814 = vpop.f32.mrf.mxu0
    %v815 = vadd.f32 0.0, %v814
    %v816 = vpop.f32.mrf.mxu0
    %817 = vmatprep.mubr.f32.mxu0 0.0
    %818 = vmatmul.mubr.f32.gmra.mxu0 %v680
    %v819 = vpop.f32.mrf.mxu0
    %v820 = vadd.f32 0.0, %v819
    %v821 = vpop.f32.mrf.mxu0
    %822 = vmatprep.mubr.f32.mxu0 0.0
    %823 = vmatmul.mubr.f32.gmra.mxu0 %v683
    %v824 = vpop.f32.mrf.mxu0
    %v825 = vadd.f32 0.0, %v824
    %v826 = vpop.f32.mrf.mxu0
    %827 = vmatprep.mubr.f32.mxu0 0.0
    %828 = vmatmul.mubr.f32.gmra.mxu0 %v686
    %v829 = vpop.f32.mrf.mxu0
    %v830 = vadd.f32 0.0, %v829
    %v831 = vpop.f32.mrf.mxu0
    %832 = vdwg.mxu0
    %v833 = vld [vmem:[#allocation2 + $0x300] sm:$0xff]
    %v834 = vld [vmem:[#allocation2 + $0x308] sm:$0xff]
    %v835 = vld [vmem:[#allocation2 + $0x310] sm:$0xff]
    %v836 = vld [vmem:[#allocation2 + $0x318] sm:$0xff]
    %v837 = vld [vmem:[#allocation2 + $0x320] sm:$0xff]
    %v838 = vld [vmem:[#allocation2 + $0x328] sm:$0xff]
    %v839 = vld [vmem:[#allocation2 + $0x330] sm:$0xff]
    %v840 = vld [vmem:[#allocation2 + $0x338] sm:$0xff]
    %v841 = vld [vmem:[#allocation2 + $0x340] sm:$0xff]
    %v842 = vld [vmem:[#allocation2 + $0x348] sm:$0xff]
    %v843 = vld [vmem:[#allocation2 + $0x350] sm:$0xff]
    %v844 = vld [vmem:[#allocation2 + $0x358] sm:$0xff]
    %v845 = vld [vmem:[#allocation2 + $0x360] sm:$0xff]
    %v846 = vld [vmem:[#allocation2 + $0x368] sm:$0xff]
    %v847 = vld [vmem:[#allocation2 + $0x370] sm:$0xff]
    %v848 = vld [vmem:[#allocation2 + $0x378] sm:$0xff]
    %v849 = vld [vmem:[#allocation2 + $0x380] sm:$0xff]
    %v850 = vld [vmem:[#allocation2 + $0x388] sm:$0xff]
    %v851 = vld [vmem:[#allocation2 + $0x390] sm:$0xff]
    %v852 = vld [vmem:[#allocation2 + $0x398] sm:$0xff]
    %v853 = vld [vmem:[#allocation2 + $0x3a0] sm:$0xff]
    %v854 = vld [vmem:[#allocation2 + $0x3a8] sm:$0xff]
    %v855 = vld [vmem:[#allocation2 + $0x3b0] sm:$0xff]
    %v856 = vld [vmem:[#allocation2 + $0x3b8] sm:$0xff]
    %v857 = vld [vmem:[#allocation2 + $0x3c0] sm:$0xff]
    %v858 = vld [vmem:[#allocation2 + $0x3c8] sm:$0xff]
    %v859 = vld [vmem:[#allocation2 + $0x3d0] sm:$0xff]
    %v860 = vld [vmem:[#allocation2 + $0x3d8] sm:$0xff]
    %v861 = vld [vmem:[#allocation2 + $0x3e0] sm:$0xff]
    %v862 = vld [vmem:[#allocation2 + $0x3e8] sm:$0xff]
    %v863 = vld [vmem:[#allocation2 + $0x3f0] sm:$0xff]
    %v864 = vld [vmem:[#allocation2 + $0x3f8] sm:$0xff]
    %v865 = vld [vmem:[#allocation4 + $0x2] sm:$0x1]
    %v866 = vlaneseq
    %v867 = vshrl.u32 %v866, 7
    %v868 = vsub.s32 0, %v867
    %v869 = vrot.slane %v865, %v868
    %870 = vmatprep.subr.mxu0 0.0
    %871 = vmatpush1.msra.mxu0 %v848
    %872 = vmatprep.subr.mxu0 0.0
    %873 = vmatpush1.msra.mxu0 %v847
    %874 = vmatprep.subr.mxu0 0.0
    %875 = vmatpush1.msra.mxu0 %v846
    %876 = vmatprep.subr.mxu0 0.0
    %877 = vmatpush1.msra.mxu0 %v845
    %878 = vmatprep.subr.mxu0 0.0
    %879 = vmatpush1.msra.mxu0 %v844
    %880 = vmatprep.subr.mxu0 0.0
    %881 = vmatpush1.msra.mxu0 %v843
    %882 = vmatprep.subr.mxu0 0.0
    %883 = vmatpush1.msra.mxu0 %v842
    %884 = vmatprep.subr.mxu0 0.0
    %885 = vmatpush1.msra.mxu0 %v841
    %886 = vmatprep.subr.mxu0 0.0
    %887 = vmatpush1.msra.mxu0 %v840
    %888 = vmatprep.subr.mxu0 0.0
    %889 = vmatpush1.msra.mxu0 %v839
    %890 = vmatprep.subr.mxu0 0.0
    %891 = vmatpush1.msra.mxu0 %v838
    %892 = vmatprep.subr.mxu0 0.0
    %893 = vmatpush1.msra.mxu0 %v837
    %894 = vmatprep.subr.mxu0 0.0
    %895 = vmatpush1.msra.mxu0 %v836
    %896 = vmatprep.subr.mxu0 0.0
    %897 = vmatpush1.msra.mxu0 %v835
    %898 = vmatprep.subr.mxu0 0.0
    %899 = vmatpush1.msra.mxu0 %v834
    %900 = vmatprep.subr.mxu0 0.0
    %901 = vmatpush1.msra.mxu0 %v833
    %902 = vmatprep.subr.mxu0 0.0
    %903 = vmatpush2.msra.mxu0 %v864
    %904 = vmatprep.subr.mxu0 0.0
    %905 = vmatpush2.msra.mxu0 %v863
    %906 = vmatprep.subr.mxu0 0.0
    %907 = vmatpush2.msra.mxu0 %v862
    %908 = vmatprep.subr.mxu0 0.0
    %909 = vmatpush2.msra.mxu0 %v861
    %910 = vmatprep.subr.mxu0 0.0
    %911 = vmatpush2.msra.mxu0 %v860
    %912 = vmatprep.subr.mxu0 0.0
    %913 = vmatpush2.msra.mxu0 %v859
    %914 = vmatprep.subr.mxu0 0.0
    %915 = vmatpush2.msra.mxu0 %v858
    %916 = vmatprep.subr.mxu0 0.0
    %917 = vmatpush2.msra.mxu0 %v857
    %918 = vmatprep.subr.mxu0 0.0
    %919 = vmatpush2.msra.mxu0 %v856
    %920 = vmatprep.subr.mxu0 0.0
    %921 = vmatpush2.msra.mxu0 %v855
    %922 = vmatprep.subr.mxu0 0.0
    %923 = vmatpush2.msra.mxu0 %v854
    %924 = vmatprep.subr.mxu0 0.0
    %925 = vmatpush2.msra.mxu0 %v853
    %926 = vmatprep.subr.mxu0 0.0
    %927 = vmatpush2.msra.mxu0 %v852
    %928 = vmatprep.subr.mxu0 0.0
    %929 = vmatpush2.msra.mxu0 %v851
    %930 = vmatprep.subr.mxu0 0.0
    %931 = vmatpush2.msra.mxu0 %v850
    %932 = vmatprep.subr.mxu0 0.0
    %933 = vmatpush2.msra.mxu0 %v849
    %934 = vmatprep.mubr.f32.mxu0 %v795
    %935 = vmatmul.mubr.f32.gmra.mxu0 %v755
    %v936 = vpop.f32.mrf.mxu0
    %v937 = vadd.f32 %v869, %v936
    %v938 = vpop.f32.mrf.mxu0
    %939 = vmatprep.mubr.f32.mxu0 %v800
    %940 = vmatmul.mubr.f32.gmra.mxu0 %v760
    %v941 = vpop.f32.mrf.mxu0
    %v942 = vadd.f32 %v869, %v941
    %v943 = vpop.f32.mrf.mxu0
    %944 = vmatprep.mubr.f32.mxu0 %v805
    %945 = vmatmul.mubr.f32.gmra.mxu0 %v765
    %v946 = vpop.f32.mrf.mxu0
    %v947 = vadd.f32 %v869, %v946
    %v948 = vpop.f32.mrf.mxu0
    %949 = vmatprep.mubr.f32.mxu0 %v810
    %950 = vmatmul.mubr.f32.gmra.mxu0 %v770
    %v951 = vpop.f32.mrf.mxu0
    %v952 = vadd.f32 %v869, %v951
    %v953 = vpop.f32.mrf.mxu0
    %954 = vmatprep.mubr.f32.mxu0 %v815
    %955 = vmatmul.mubr.f32.gmra.mxu0 %v775
    %v956 = vpop.f32.mrf.mxu0
    %v957 = vadd.f32 %v869, %v956
    %v958 = vpop.f32.mrf.mxu0
    %959 = vmatprep.mubr.f32.mxu0 %v820
    %960 = vmatmul.mubr.f32.gmra.mxu0 %v780
    %v961 = vpop.f32.mrf.mxu0
    %v962 = vadd.f32 %v869, %v961
    %v963 = vpop.f32.mrf.mxu0
    %964 = vmatprep.mubr.f32.mxu0 %v825
    %965 = vmatmul.mubr.f32.gmra.mxu0 %v785
    %v966 = vpop.f32.mrf.mxu0
    %v967 = vadd.f32 %v869, %v966
    %v968 = vpop.f32.mrf.mxu0
    %969 = vmatprep.mubr.f32.mxu0 %v830
    %970 = vmatmul.mubr.f32.gmra.mxu0 %v790
    %v971 = vpop.f32.mrf.mxu0
    %v972 = vadd.f32 %v869, %v971
    %v973 = vpop.f32.mrf.mxu0
    %974 = vdwg.mxu0
    %v975 = vmax.f32 %v937, 0.0
    %v976 = vmax.f32 %v942, 0.0
    %v977 = vmax.f32 %v947, 0.0
    %v978 = vmax.f32 %v952, 0.0
    %v979 = vmax.f32 %v957, 0.0
    %v980 = vmax.f32 %v962, 0.0
    %v981 = vmax.f32 %v967, 0.0
    %v982 = vmax.f32 %v972, 0.0
    %v983 = vrot.slane %v975, 7
    %v984 = vrot.slane %v976, 7
    %v985 = vrot.slane %v977, 7
    %v986 = vrot.slane %v978, 7
    %v987 = vrot.slane %v979, 7
    %v988 = vrot.slane %v980, 7
    %v989 = vrot.slane %v981, 7
    %v990 = vrot.slane %v982, 7
    %v991 = vsel %vm64, %v989, %v990
    %v992 = vsel %vm64, %v988, %v989
    %v993 = vsel %vm64, %v987, %v988
    %v994 = vsel %vm64, %v986, %v987
    %v995 = vsel %vm64, %v985, %v986
    %v996 = vsel %vm64, %v984, %v985
    %v997 = vsel %vm64, %v983, %v984
    %v998 = vsel %vm64, %v990, %v983
    %v999 = vadd.s32 %v63, 32
    %v1000 = vadd.s32 %v63, 40
    %v1001 = vadd.s32 %v63, 48
    %v1002 = vadd.s32 %v63, 56
    %vm1003 = vcmp.lt.s32.totalorder %v63, 0
    %v1004 = vsub.s32 0, %v63
    %v1005 = vsel %vm1003, %v1004, %v63
    %v1006 = vshrl.u32 %v1005, 5
    %v1007 = vand.u32 %v1005, 31
    %v1008 = vsub.s32 0, %v1007
    %v1009 = vsel %vm1003, %v1008, %v1007
    %vm1010 = vcmp.lt.s32.totalorder %v69, 0
    %v1011 = vsub.s32 0, %v69
    %v1012 = vsel %vm1010, %v1011, %v69
    %v1013 = vshrl.u32 %v1012, 5
    %v1014 = vand.u32 %v1012, 31
    %v1015 = vsub.s32 0, %v1014
    %v1016 = vsel %vm1010, %v1015, %v1014
    %vm1017 = vcmp.lt.s32.totalorder %v70, 0
    %v1018 = vsub.s32 0, %v70
    %v1019 = vsel %vm1017, %v1018, %v70
    %v1020 = vshrl.u32 %v1019, 5
    %v1021 = vand.u32 %v1019, 31
    %v1022 = vsub.s32 0, %v1021
    %v1023 = vsel %vm1017, %v1022, %v1021
    %vm1024 = vcmp.lt.s32.totalorder %v71, 0
    %v1025 = vsub.s32 0, %v71
    %v1026 = vsel %vm1024, %v1025, %v71
    %v1027 = vshrl.u32 %v1026, 5
    %v1028 = vand.u32 %v1026, 31
    %v1029 = vsub.s32 0, %v1028
    %v1030 = vsel %vm1024, %v1029, %v1028
    %vm1031 = vcmp.lt.s32.totalorder %v999, 0
    %v1032 = vsub.s32 0, %v999
    %v1033 = vsel %vm1031, %v1032, %v999
    %v1034 = vshrl.u32 %v1033, 5
    %v1035 = vand.u32 %v1033, 31
    %v1036 = vsub.s32 0, %v1035
    %v1037 = vsel %vm1031, %v1036, %v1035
    %vm1038 = vcmp.lt.s32.totalorder %v1000, 0
    %v1039 = vsub.s32 0, %v1000
    %v1040 = vsel %vm1038, %v1039, %v1000
    %v1041 = vshrl.u32 %v1040, 5
    %v1042 = vand.u32 %v1040, 31
    %v1043 = vsub.s32 0, %v1042
    %v1044 = vsel %vm1038, %v1043, %v1042
    %vm1045 = vcmp.lt.s32.totalorder %v1001, 0
    %v1046 = vsub.s32 0, %v1001
    %v1047 = vsel %vm1045, %v1046, %v1001
    %v1048 = vshrl.u32 %v1047, 5
    %v1049 = vand.u32 %v1047, 31
    %v1050 = vsub.s32 0, %v1049
    %v1051 = vsel %vm1045, %v1050, %v1049
    %vm1052 = vcmp.lt.s32.totalorder %v1002, 0
    %v1053 = vsub.s32 0, %v1002
    %v1054 = vsel %vm1052, %v1053, %v1002
    %v1055 = vshrl.u32 %v1054, 5
    %v1056 = vand.u32 %v1054, 31
    %v1057 = vsub.s32 0, %v1056
    %v1058 = vsel %vm1052, %v1057, %v1056
    %vm1059 = vcmp.ne.s32.totalorder %v1009, 0
    %vm1060 = vcmp.ne.s32.totalorder %v1016, 0
    %vm1061 = vcmp.ne.s32.totalorder %v1023, 0
    %vm1062 = vcmp.ne.s32.totalorder %v1030, 0
    %vm1063 = vcmp.ne.s32.totalorder %v1037, 0
    %vm1064 = vcmp.ne.s32.totalorder %v1044, 0
    %vm1065 = vcmp.ne.s32.totalorder %v1051, 0
    %vm1066 = vcmp.ne.s32.totalorder %v1058, 0
    %vm1067 = vcmp.lt.s32.totalorder %v1009, 0
    %vm1068 = vcmp.lt.s32.totalorder %v1016, 0
    %vm1069 = vcmp.lt.s32.totalorder %v1023, 0
    %vm1070 = vcmp.lt.s32.totalorder %v1030, 0
    %vm1071 = vcmp.lt.s32.totalorder %v1037, 0
    %vm1072 = vcmp.lt.s32.totalorder %v1044, 0
    %vm1073 = vcmp.lt.s32.totalorder %v1051, 0
    %vm1074 = vcmp.lt.s32.totalorder %v1058, 0
    %vm1075 = vmand %vm1067, %vm1059
    %vm1076 = vmand %vm1068, %vm1060
    %vm1077 = vmand %vm1069, %vm1061
    %vm1078 = vmand %vm1070, %vm1062
    %vm1079 = vmand %vm1071, %vm1063
    %vm1080 = vmand %vm1072, %vm1064
    %vm1081 = vmand %vm1073, %vm1065
    %vm1082 = vmand %vm1074, %vm1066
    %v1083 = vadd.s32 %v1009, 32
    %v1084 = vadd.s32 %v1016, 32
    %v1085 = vadd.s32 %v1023, 32
    %v1086 = vadd.s32 %v1030, 32
    %v1087 = vadd.s32 %v1037, 32
    %v1088 = vadd.s32 %v1044, 32
    %v1089 = vadd.s32 %v1051, 32
    %v1090 = vadd.s32 %v1058, 32
    %v1091 = vsel %vm1075, %v1083, %v1009
    %v1092 = vsel %vm1076, %v1084, %v1016
    %v1093 = vsel %vm1077, %v1085, %v1023
    %v1094 = vsel %vm1078, %v1086, %v1030
    %v1095 = vsel %vm1079, %v1087, %v1037
    %v1096 = vsel %vm1080, %v1088, %v1044
    %v1097 = vsel %vm1081, %v1089, %v1051
    %v1098 = vsel %vm1082, %v1090, %v1058
    %vm1099 = vcmp.eq.s32.totalorder %v1091, 0
    %vm1100 = vcmp.eq.s32.totalorder %v1092, 0
    %vm1101 = vcmp.eq.s32.totalorder %v1093, 0
    %vm1102 = vcmp.eq.s32.totalorder %v1094, 0
    %vm1103 = vcmp.eq.s32.totalorder %v1095, 0
    %vm1104 = vcmp.eq.s32.totalorder %v1096, 0
    %vm1105 = vcmp.eq.s32.totalorder %v1097, 0
    %vm1106 = vcmp.eq.s32.totalorder %v1098, 0
    %v1107 = vsel %vm1099, 0.0, %v998
    %v1108 = vsel %vm1100, 0.0, %v997
    %v1109 = vsel %vm1101, 0.0, %v996
    %v1110 = vsel %vm1102, 0.0, %v995
    %v1111 = vsel %vm1103, 0.0, %v994
    %v1112 = vsel %vm1104, 0.0, %v993
    %v1113 = vsel %vm1105, 0.0, %v992
    %v1114 = vsel %vm1106, 0.0, %v991
    %v1115 = vrot.slane %v975, 1
    %v1116 = vrot.slane %v976, 1
    %v1117 = vrot.slane %v977, 1
    %v1118 = vrot.slane %v978, 1
    %v1119 = vrot.slane %v979, 1
    %v1120 = vrot.slane %v980, 1
    %v1121 = vrot.slane %v981, 1
    %v1122 = vrot.slane %v982, 1
    %v1123 = vsel %vm132, %v1121, %v1122
    %v1124 = vsel %vm132, %v1120, %v1121
    %v1125 = vsel %vm132, %v1119, %v1120
    %v1126 = vsel %vm132, %v1118, %v1119
    %v1127 = vsel %vm132, %v1117, %v1118
    %v1128 = vsel %vm132, %v1116, %v1117
    %v1129 = vsel %vm132, %v1115, %v1116
    %v1130 = vsel %vm132, %v1122, %v1115
    %vm1131 = vcmp.eq.s32.totalorder %v1091, 31
    %vm1132 = vcmp.eq.s32.totalorder %v1092, 31
    %vm1133 = vcmp.eq.s32.totalorder %v1093, 31
    %vm1134 = vcmp.eq.s32.totalorder %v1094, 31
    %vm1135 = vcmp.eq.s32.totalorder %v1095, 31
    %vm1136 = vcmp.eq.s32.totalorder %v1096, 31
    %vm1137 = vcmp.eq.s32.totalorder %v1097, 31
    %vm1138 = vcmp.eq.s32.totalorder %v1098, 31
    %v1139 = vsel %vm1131, 0.0, %v1129
    %v1140 = vsel %vm1132, 0.0, %v1128
    %v1141 = vsel %vm1133, 0.0, %v1127
    %v1142 = vsel %vm1134, 0.0, %v1126
    %v1143 = vsel %vm1135, 0.0, %v1125
    %v1144 = vsel %vm1136, 0.0, %v1124
    %v1145 = vsel %vm1137, 0.0, %v1123
    %v1146 = vsel %vm1138, 0.0, %v1130
    %v1147 = vld [vmem:[#allocation2 + $0x400] sm:$0xff]
    %v1148 = vld [vmem:[#allocation2 + $0x408] sm:$0xff]
    %v1149 = vld [vmem:[#allocation2 + $0x410] sm:$0xff]
    %v1150 = vld [vmem:[#allocation2 + $0x418] sm:$0xff]
    %v1151 = vld [vmem:[#allocation2 + $0x420] sm:$0xff]
    %v1152 = vld [vmem:[#allocation2 + $0x428] sm:$0xff]
    %v1153 = vld [vmem:[#allocation2 + $0x430] sm:$0xff]
    %v1154 = vld [vmem:[#allocation2 + $0x438] sm:$0xff]
    %v1155 = vld [vmem:[#allocation2 + $0x440] sm:$0xff]
    %v1156 = vld [vmem:[#allocation2 + $0x448] sm:$0xff]
    %v1157 = vld [vmem:[#allocation2 + $0x450] sm:$0xff]
    %v1158 = vld [vmem:[#allocation2 + $0x458] sm:$0xff]
    %v1159 = vld [vmem:[#allocation2 + $0x460] sm:$0xff]
    %v1160 = vld [vmem:[#allocation2 + $0x468] sm:$0xff]
    %v1161 = vld [vmem:[#allocation2 + $0x470] sm:$0xff]
    %v1162 = vld [vmem:[#allocation2 + $0x478] sm:$0xff]
    %v1163 = vld [vmem:[#allocation2 + $0x480] sm:$0xff]
    %v1164 = vld [vmem:[#allocation2 + $0x488] sm:$0xff]
    %v1165 = vld [vmem:[#allocation2 + $0x490] sm:$0xff]
    %v1166 = vld [vmem:[#allocation2 + $0x498] sm:$0xff]
    %v1167 = vld [vmem:[#allocation2 + $0x4a0] sm:$0xff]
    %v1168 = vld [vmem:[#allocation2 + $0x4a8] sm:$0xff]
    %v1169 = vld [vmem:[#allocation2 + $0x4b0] sm:$0xff]
    %v1170 = vld [vmem:[#allocation2 + $0x4b8] sm:$0xff]
    %v1171 = vld [vmem:[#allocation2 + $0x4c0] sm:$0xff]
    %v1172 = vld [vmem:[#allocation2 + $0x4c8] sm:$0xff]
    %v1173 = vld [vmem:[#allocation2 + $0x4d0] sm:$0xff]
    %v1174 = vld [vmem:[#allocation2 + $0x4d8] sm:$0xff]
    %v1175 = vld [vmem:[#allocation2 + $0x4e0] sm:$0xff]
    %v1176 = vld [vmem:[#allocation2 + $0x4e8] sm:$0xff]
    %v1177 = vld [vmem:[#allocation2 + $0x4f0] sm:$0xff]
    %v1178 = vld [vmem:[#allocation2 + $0x4f8] sm:$0xff]
    %v1179 = vld [vmem:[#allocation2 + $0x500] sm:$0xff]
    %v1180 = vld [vmem:[#allocation2 + $0x508] sm:$0xff]
    %v1181 = vld [vmem:[#allocation2 + $0x510] sm:$0xff]
    %v1182 = vld [vmem:[#allocation2 + $0x518] sm:$0xff]
    %v1183 = vld [vmem:[#allocation2 + $0x520] sm:$0xff]
    %v1184 = vld [vmem:[#allocation2 + $0x528] sm:$0xff]
    %v1185 = vld [vmem:[#allocation2 + $0x530] sm:$0xff]
    %v1186 = vld [vmem:[#allocation2 + $0x538] sm:$0xff]
    %v1187 = vld [vmem:[#allocation2 + $0x540] sm:$0xff]
    %v1188 = vld [vmem:[#allocation2 + $0x548] sm:$0xff]
    %v1189 = vld [vmem:[#allocation2 + $0x550] sm:$0xff]
    %v1190 = vld [vmem:[#allocation2 + $0x558] sm:$0xff]
    %v1191 = vld [vmem:[#allocation2 + $0x560] sm:$0xff]
    %v1192 = vld [vmem:[#allocation2 + $0x568] sm:$0xff]
    %v1193 = vld [vmem:[#allocation2 + $0x570] sm:$0xff]
    %v1194 = vld [vmem:[#allocation2 + $0x578] sm:$0xff]
    %v1195 = vld [vmem:[#allocation4 + $0x3] sm:$0x1]
    %v1196 = vlaneseq
    %v1197 = vshrl.u32 %v1196, 7
    %v1198 = vsub.s32 0, %v1197
    %v1199 = vrot.slane %v1195, %v1198
    %1200 = vmatprep.subr.mxu0 0.0
    %1201 = vmatpush1.msra.mxu0 %v1162
    %1202 = vmatprep.subr.mxu0 0.0
    %1203 = vmatpush1.msra.mxu0 %v1161
    %1204 = vmatprep.subr.mxu0 0.0
    %1205 = vmatpush1.msra.mxu0 %v1160
    %1206 = vmatprep.subr.mxu0 0.0
    %1207 = vmatpush1.msra.mxu0 %v1159
    %1208 = vmatprep.subr.mxu0 0.0
    %1209 = vmatpush1.msra.mxu0 %v1158
    %1210 = vmatprep.subr.mxu0 0.0
    %1211 = vmatpush1.msra.mxu0 %v1157
    %1212 = vmatprep.subr.mxu0 0.0
    %1213 = vmatpush1.msra.mxu0 %v1156
    %1214 = vmatprep.subr.mxu0 0.0
    %1215 = vmatpush1.msra.mxu0 %v1155
    %1216 = vmatprep.subr.mxu0 0.0
    %1217 = vmatpush1.msra.mxu0 %v1154
    %1218 = vmatprep.subr.mxu0 0.0
    %1219 = vmatpush1.msra.mxu0 %v1153
    %1220 = vmatprep.subr.mxu0 0.0
    %1221 = vmatpush1.msra.mxu0 %v1152
    %1222 = vmatprep.subr.mxu0 0.0
    %1223 = vmatpush1.msra.mxu0 %v1151
    %1224 = vmatprep.subr.mxu0 0.0
    %1225 = vmatpush1.msra.mxu0 %v1150
    %1226 = vmatprep.subr.mxu0 0.0
    %1227 = vmatpush1.msra.mxu0 %v1149
    %1228 = vmatprep.subr.mxu0 0.0
    %1229 = vmatpush1.msra.mxu0 %v1148
    %1230 = vmatprep.subr.mxu0 0.0
    %1231 = vmatpush1.msra.mxu0 %v1147
    %1232 = vmatprep.subr.mxu0 0.0
    %1233 = vmatpush2.msra.mxu0 %v1178
    %1234 = vmatprep.subr.mxu0 0.0
    %1235 = vmatpush2.msra.mxu0 %v1177
    %1236 = vmatprep.subr.mxu0 0.0
    %1237 = vmatpush2.msra.mxu0 %v1176
    %1238 = vmatprep.subr.mxu0 0.0
    %1239 = vmatpush2.msra.mxu0 %v1175
    %1240 = vmatprep.subr.mxu0 0.0
    %1241 = vmatpush2.msra.mxu0 %v1174
    %1242 = vmatprep.subr.mxu0 0.0
    %1243 = vmatpush2.msra.mxu0 %v1173
    %1244 = vmatprep.subr.mxu0 0.0
    %1245 = vmatpush2.msra.mxu0 %v1172
    %1246 = vmatprep.subr.mxu0 0.0
    %1247 = vmatpush2.msra.mxu0 %v1171
    %1248 = vmatprep.subr.mxu0 0.0
    %1249 = vmatpush2.msra.mxu0 %v1170
    %1250 = vmatprep.subr.mxu0 0.0
    %1251 = vmatpush2.msra.mxu0 %v1169
    %1252 = vmatprep.subr.mxu0 0.0
    %1253 = vmatpush2.msra.mxu0 %v1168
    %1254 = vmatprep.subr.mxu0 0.0
    %1255 = vmatpush2.msra.mxu0 %v1167
    %1256 = vmatprep.subr.mxu0 0.0
    %1257 = vmatpush2.msra.mxu0 %v1166
    %1258 = vmatprep.subr.mxu0 0.0
    %1259 = vmatpush2.msra.mxu0 %v1165
    %1260 = vmatprep.subr.mxu0 0.0
    %1261 = vmatpush2.msra.mxu0 %v1164
    %1262 = vmatprep.subr.mxu0 0.0
    %1263 = vmatpush2.msra.mxu0 %v1163
    %1264 = vmatprep.mubr.f32.mxu0 %v975
    %1265 = vmatmul.mubr.f32.gmra.mxu0 %v1107
    %v1266 = vpop.f32.mrf.mxu0
    %v1267 = vadd.f32 %v1199, %v1266
    %v1268 = vpop.f32.mrf.mxu0
    %1269 = vmatprep.mubr.f32.mxu0 %v976
    %1270 = vmatmul.mubr.f32.gmra.mxu0 %v1108
    %v1271 = vpop.f32.mrf.mxu0
    %v1272 = vadd.f32 %v1199, %v1271
    %v1273 = vpop.f32.mrf.mxu0
    %1274 = vmatprep.mubr.f32.mxu0 %v977
    %1275 = vmatmul.mubr.f32.gmra.mxu0 %v1109
    %v1276 = vpop.f32.mrf.mxu0
    %v1277 = vadd.f32 %v1199, %v1276
    %v1278 = vpop.f32.mrf.mxu0
    %1279 = vmatprep.mubr.f32.mxu0 %v978
    %1280 = vmatmul.mubr.f32.gmra.mxu0 %v1110
    %v1281 = vpop.f32.mrf.mxu0
    %v1282 = vadd.f32 %v1199, %v1281
    %v1283 = vpop.f32.mrf.mxu0
    %1284 = vmatprep.mubr.f32.mxu0 %v979
    %1285 = vmatmul.mubr.f32.gmra.mxu0 %v1111
    %v1286 = vpop.f32.mrf.mxu0
    %v1287 = vadd.f32 %v1199, %v1286
    %v1288 = vpop.f32.mrf.mxu0
    %1289 = vmatprep.mubr.f32.mxu0 %v980
    %1290 = vmatmul.mubr.f32.gmra.mxu0 %v1112
    %v1291 = vpop.f32.mrf.mxu0
    %v1292 = vadd.f32 %v1199, %v1291
    %v1293 = vpop.f32.mrf.mxu0
    %1294 = vmatprep.mubr.f32.mxu0 %v981
    %1295 = vmatmul.mubr.f32.gmra.mxu0 %v1113
    %v1296 = vpop.f32.mrf.mxu0
    %v1297 = vadd.f32 %v1199, %v1296
    %v1298 = vpop.f32.mrf.mxu0
    %1299 = vmatprep.mubr.f32.mxu0 %v982
    %1300 = vmatmul.mubr.f32.gmra.mxu0 %v1114
    %v1301 = vpop.f32.mrf.mxu0
    %v1302 = vadd.f32 %v1199, %v1301
    %v1303 = vpop.f32.mrf.mxu0
    %1304 = vdwg.mxu0
    %1305 = vmatprep.subr.mxu0 0.0
    %1306 = vmatpush1.msra.mxu0 %v1194
    %1307 = vmatprep.subr.mxu0 0.0
    %1308 = vmatpush1.msra.mxu0 %v1193
    %1309 = vmatprep.subr.mxu0 0.0
    %1310 = vmatpush1.msra.mxu0 %v1192
    %1311 = vmatprep.subr.mxu0 0.0
    %1312 = vmatpush1.msra.mxu0 %v1191
    %1313 = vmatprep.subr.mxu0 0.0
    %1314 = vmatpush1.msra.mxu0 %v1190
    %1315 = vmatprep.subr.mxu0 0.0
    %1316 = vmatpush1.msra.mxu0 %v1189
    %1317 = vmatprep.subr.mxu0 0.0
    %1318 = vmatpush1.msra.mxu0 %v1188
    %1319 = vmatprep.subr.mxu0 0.0
    %1320 = vmatpush1.msra.mxu0 %v1187
    %1321 = vmatprep.subr.mxu0 0.0
    %1322 = vmatpush1.msra.mxu0 %v1186
    %1323 = vmatprep.subr.mxu0 0.0
    %1324 = vmatpush1.msra.mxu0 %v1185
    %1325 = vmatprep.subr.mxu0 0.0
    %1326 = vmatpush1.msra.mxu0 %v1184
    %1327 = vmatprep.subr.mxu0 0.0
    %1328 = vmatpush1.msra.mxu0 %v1183
    %1329 = vmatprep.subr.mxu0 0.0
    %1330 = vmatpush1.msra.mxu0 %v1182
    %1331 = vmatprep.subr.mxu0 0.0
    %1332 = vmatpush1.msra.mxu0 %v1181
    %1333 = vmatprep.subr.mxu0 0.0
    %1334 = vmatpush1.msra.mxu0 %v1180
    %1335 = vmatprep.subr.mxu0 0.0
    %1336 = vmatpush1.msra.mxu0 %v1179
    %1337 = vmatprep.subr.mxu0 0.0
    %1338 = vmatpush2.msra.mxu0 0.0
    %1339 = vmatprep.subr.mxu0 0.0
    %1340 = vmatpush2.msra.mxu0 0.0
    %1341 = vmatprep.subr.mxu0 0.0
    %1342 = vmatpush2.msra.mxu0 0.0
    %1343 = vmatprep.subr.mxu0 0.0
    %1344 = vmatpush2.msra.mxu0 0.0
    %1345 = vmatprep.subr.mxu0 0.0
    %1346 = vmatpush2.msra.mxu0 0.0
    %1347 = vmatprep.subr.mxu0 0.0
    %1348 = vmatpush2.msra.mxu0 0.0
    %1349 = vmatprep.subr.mxu0 0.0
    %1350 = vmatpush2.msra.mxu0 0.0
    %1351 = vmatprep.subr.mxu0 0.0
    %1352 = vmatpush2.msra.mxu0 0.0
    %1353 = vmatprep.subr.mxu0 0.0
    %1354 = vmatpush2.msra.mxu0 0.0
    %1355 = vmatprep.subr.mxu0 0.0
    %1356 = vmatpush2.msra.mxu0 0.0
    %1357 = vmatprep.subr.mxu0 0.0
    %1358 = vmatpush2.msra.mxu0 0.0
    %1359 = vmatprep.subr.mxu0 0.0
    %1360 = vmatpush2.msra.mxu0 0.0
    %1361 = vmatprep.subr.mxu0 0.0
    %1362 = vmatpush2.msra.mxu0 0.0
    %1363 = vmatprep.subr.mxu0 0.0
    %1364 = vmatpush2.msra.mxu0 0.0
    %1365 = vmatprep.subr.mxu0 0.0
    %1366 = vmatpush2.msra.mxu0 0.0
    %1367 = vmatprep.subr.mxu0 0.0
    %1368 = vmatpush2.msra.mxu0 0.0
    %1369 = vmatprep.mubr.f32.mxu0 0.0
    %1370 = vmatmul.mubr.f32.gmra.mxu0 %v1139
    %v1371 = vpop.f32.mrf.mxu0
    %v1372 = vadd.f32 %v1267, %v1371
    %v1373 = vpop.f32.mrf.mxu0
    %1374 = vmatprep.mubr.f32.mxu0 0.0
    %1375 = vmatmul.mubr.f32.gmra.mxu0 %v1140
    %v1376 = vpop.f32.mrf.mxu0
    %v1377 = vadd.f32 %v1272, %v1376
    %v1378 = vpop.f32.mrf.mxu0
    %1379 = vmatprep.mubr.f32.mxu0 0.0
    %1380 = vmatmul.mubr.f32.gmra.mxu0 %v1141
    %v1381 = vpop.f32.mrf.mxu0
    %v1382 = vadd.f32 %v1277, %v1381
    %v1383 = vpop.f32.mrf.mxu0
    %1384 = vmatprep.mubr.f32.mxu0 0.0
    %1385 = vmatmul.mubr.f32.gmra.mxu0 %v1142
    %v1386 = vpop.f32.mrf.mxu0
    %v1387 = vadd.f32 %v1282, %v1386
    %v1388 = vpop.f32.mrf.mxu0
    %1389 = vmatprep.mubr.f32.mxu0 0.0
    %1390 = vmatmul.mubr.f32.gmra.mxu0 %v1143
    %v1391 = vpop.f32.mrf.mxu0
    %v1392 = vadd.f32 %v1287, %v1391
    %v1393 = vpop.f32.mrf.mxu0
    %1394 = vmatprep.mubr.f32.mxu0 0.0
    %1395 = vmatmul.mubr.f32.gmra.mxu0 %v1144
    %v1396 = vpop.f32.mrf.mxu0
    %v1397 = vadd.f32 %v1292, %v1396
    %v1398 = vpop.f32.mrf.mxu0
    %1399 = vmatprep.mubr.f32.mxu0 0.0
    %1400 = vmatmul.mubr.f32.gmra.mxu0 %v1145
    %v1401 = vpop.f32.mrf.mxu0
    %v1402 = vadd.f32 %v1297, %v1401
    %v1403 = vpop.f32.mrf.mxu0
    %1404 = vmatprep.mubr.f32.mxu0 0.0
    %1405 = vmatmul.mubr.f32.gmra.mxu0 %v1146
    %v1406 = vpop.f32.mrf.mxu0
    %v1407 = vadd.f32 %v1302, %v1406
    %v1408 = vpop.f32.mrf.mxu0
    %1409 = vdwg.mxu0
    %v1410 = vmax.f32 %v1372, 0.0
    %v1411 = vmax.f32 %v1377, 0.0
    %v1412 = vmax.f32 %v1382, 0.0
    %v1413 = vmax.f32 %v1387, 0.0
    %v1414 = vmax.f32 %v1392, 0.0
    %v1415 = vmax.f32 %v1397, 0.0
    %v1416 = vmax.f32 %v1402, 0.0
    %v1417 = vmax.f32 %v1407, 0.0
    %v1418 = vrot.slane %v1410, 7
    %v1419 = vrot.slane %v1411, 7
    %v1420 = vrot.slane %v1412, 7
    %v1421 = vrot.slane %v1413, 7
    %v1422 = vrot.slane %v1414, 7
    %v1423 = vrot.slane %v1415, 7
    %v1424 = vrot.slane %v1416, 7
    %v1425 = vrot.slane %v1417, 7
    %v1426 = vsel %vm64, %v1424, %v1425
    %v1427 = vsel %vm64, %v1423, %v1424
    %v1428 = vsel %vm64, %v1422, %v1423
    %v1429 = vsel %vm64, %v1421, %v1422
    %v1430 = vsel %vm64, %v1420, %v1421
    %v1431 = vsel %vm64, %v1419, %v1420
    %v1432 = vsel %vm64, %v1418, %v1419
    %v1433 = vsel %vm64, %v1425, %v1418
    %v1434 = vsel %vm1099, 0.0, %v1433
    %v1435 = vsel %vm1100, 0.0, %v1432
    %v1436 = vsel %vm1101, 0.0, %v1431
    %v1437 = vsel %vm1102, 0.0, %v1430
    %v1438 = vsel %vm1103, 0.0, %v1429
    %v1439 = vsel %vm1104, 0.0, %v1428
    %v1440 = vsel %vm1105, 0.0, %v1427
    %v1441 = vsel %vm1106, 0.0, %v1426
    %v1442 = vrot.slane %v1410, 1
    %v1443 = vrot.slane %v1411, 1
    %v1444 = vrot.slane %v1412, 1
    %v1445 = vrot.slane %v1413, 1
    %v1446 = vrot.slane %v1414, 1
    %v1447 = vrot.slane %v1415, 1
    %v1448 = vrot.slane %v1416, 1
    %v1449 = vrot.slane %v1417, 1
    %v1450 = vsel %vm132, %v1448, %v1449
    %v1451 = vsel %vm132, %v1447, %v1448
    %v1452 = vsel %vm132, %v1446, %v1447
    %v1453 = vsel %vm132, %v1445, %v1446
    %v1454 = vsel %vm132, %v1444, %v1445
    %v1455 = vsel %vm132, %v1443, %v1444
    %v1456 = vsel %vm132, %v1442, %v1443
    %v1457 = vsel %vm132, %v1449, %v1442
    %v1458 = vsel %vm1131, 0.0, %v1456
    %v1459 = vsel %vm1132, 0.0, %v1455
    %v1460 = vsel %vm1133, 0.0, %v1454
    %v1461 = vsel %vm1134, 0.0, %v1453
    %v1462 = vsel %vm1135, 0.0, %v1452
    %v1463 = vsel %vm1136, 0.0, %v1451
    %v1464 = vsel %vm1137, 0.0, %v1450
    %v1465 = vsel %vm1138, 0.0, %v1457
    %v1466 = vld [vmem:[#allocation2 + $0x580] sm:$0xff]
    %v1467 = vld [vmem:[#allocation2 + $0x588] sm:$0xff]
    %v1468 = vld [vmem:[#allocation2 + $0x590] sm:$0xff]
    %v1469 = vld [vmem:[#allocation2 + $0x598] sm:$0xff]
    %v1470 = vld [vmem:[#allocation2 + $0x5a0] sm:$0xff]
    %v1471 = vld [vmem:[#allocation2 + $0x5a8] sm:$0xff]
    %v1472 = vld [vmem:[#allocation2 + $0x5b0] sm:$0xff]
    %v1473 = vld [vmem:[#allocation2 + $0x5b8] sm:$0xff]
    %v1474 = vld [vmem:[#allocation2 + $0x5c0] sm:$0xff]
    %v1475 = vld [vmem:[#allocation2 + $0x5c8] sm:$0xff]
    %v1476 = vld [vmem:[#allocation2 + $0x5d0] sm:$0xff]
    %v1477 = vld [vmem:[#allocation2 + $0x5d8] sm:$0xff]
    %v1478 = vld [vmem:[#allocation2 + $0x5e0] sm:$0xff]
    %v1479 = vld [vmem:[#allocation2 + $0x5e8] sm:$0xff]
    %v1480 = vld [vmem:[#allocation2 + $0x5f0] sm:$0xff]
    %v1481 = vld [vmem:[#allocation2 + $0x5f8] sm:$0xff]
    %v1482 = vld [vmem:[#allocation2 + $0x600] sm:$0xff]
    %v1483 = vld [vmem:[#allocation2 + $0x608] sm:$0xff]
    %v1484 = vld [vmem:[#allocation2 + $0x610] sm:$0xff]
    %v1485 = vld [vmem:[#allocation2 + $0x618] sm:$0xff]
    %v1486 = vld [vmem:[#allocation2 + $0x620] sm:$0xff]
    %v1487 = vld [vmem:[#allocation2 + $0x628] sm:$0xff]
    %v1488 = vld [vmem:[#allocation2 + $0x630] sm:$0xff]
    %v1489 = vld [vmem:[#allocation2 + $0x638] sm:$0xff]
    %v1490 = vld [vmem:[#allocation2 + $0x640] sm:$0xff]
    %v1491 = vld [vmem:[#allocation2 + $0x648] sm:$0xff]
    %v1492 = vld [vmem:[#allocation2 + $0x650] sm:$0xff]
    %v1493 = vld [vmem:[#allocation2 + $0x658] sm:$0xff]
    %v1494 = vld [vmem:[#allocation2 + $0x660] sm:$0xff]
    %v1495 = vld [vmem:[#allocation2 + $0x668] sm:$0xff]
    %v1496 = vld [vmem:[#allocation2 + $0x670] sm:$0xff]
    %v1497 = vld [vmem:[#allocation2 + $0x678] sm:$0xff]
    %v1498 = vld [vmem:[#allocation2 + $0x680] sm:$0xff]
    %v1499 = vld [vmem:[#allocation2 + $0x688] sm:$0xff]
    %v1500 = vld [vmem:[#allocation2 + $0x690] sm:$0xff]
    %v1501 = vld [vmem:[#allocation2 + $0x698] sm:$0xff]
    %v1502 = vld [vmem:[#allocation2 + $0x6a0] sm:$0xff]
    %v1503 = vld [vmem:[#allocation2 + $0x6a8] sm:$0xff]
    %v1504 = vld [vmem:[#allocation2 + $0x6b0] sm:$0xff]
    %v1505 = vld [vmem:[#allocation2 + $0x6b8] sm:$0xff]
    %v1506 = vld [vmem:[#allocation2 + $0x6c0] sm:$0xff]
    %v1507 = vld [vmem:[#allocation2 + $0x6c8] sm:$0xff]
    %v1508 = vld [vmem:[#allocation2 + $0x6d0] sm:$0xff]
    %v1509 = vld [vmem:[#allocation2 + $0x6d8] sm:$0xff]
    %v1510 = vld [vmem:[#allocation2 + $0x6e0] sm:$0xff]
    %v1511 = vld [vmem:[#allocation2 + $0x6e8] sm:$0xff]
    %v1512 = vld [vmem:[#allocation2 + $0x6f0] sm:$0xff]
    %v1513 = vld [vmem:[#allocation2 + $0x6f8] sm:$0xff]
    %v1514 = vld [vmem:[#allocation4 + $0x4] sm:$0x1]
    %v1515 = vlaneseq
    %v1516 = vshrl.u32 %v1515, 7
    %v1517 = vsub.s32 0, %v1516
    %v1518 = vrot.slane %v1514, %v1517
    %1519 = vmatprep.subr.mxu0 0.0
    %1520 = vmatpush1.msra.mxu0 %v1481
    %1521 = vmatprep.subr.mxu0 0.0
    %1522 = vmatpush1.msra.mxu0 %v1480
    %1523 = vmatprep.subr.mxu0 0.0
    %1524 = vmatpush1.msra.mxu0 %v1479
    %1525 = vmatprep.subr.mxu0 0.0
    %1526 = vmatpush1.msra.mxu0 %v1478
    %1527 = vmatprep.subr.mxu0 0.0
    %1528 = vmatpush1.msra.mxu0 %v1477
    %1529 = vmatprep.subr.mxu0 0.0
    %1530 = vmatpush1.msra.mxu0 %v1476
    %1531 = vmatprep.subr.mxu0 0.0
    %1532 = vmatpush1.msra.mxu0 %v1475
    %1533 = vmatprep.subr.mxu0 0.0
    %1534 = vmatpush1.msra.mxu0 %v1474
    %1535 = vmatprep.subr.mxu0 0.0
    %1536 = vmatpush1.msra.mxu0 %v1473
    %1537 = vmatprep.subr.mxu0 0.0
    %1538 = vmatpush1.msra.mxu0 %v1472
    %1539 = vmatprep.subr.mxu0 0.0
    %1540 = vmatpush1.msra.mxu0 %v1471
    %1541 = vmatprep.subr.mxu0 0.0
    %1542 = vmatpush1.msra.mxu0 %v1470
    %1543 = vmatprep.subr.mxu0 0.0
    %1544 = vmatpush1.msra.mxu0 %v1469
    %1545 = vmatprep.subr.mxu0 0.0
    %1546 = vmatpush1.msra.mxu0 %v1468
    %1547 = vmatprep.subr.mxu0 0.0
    %1548 = vmatpush1.msra.mxu0 %v1467
    %1549 = vmatprep.subr.mxu0 0.0
    %1550 = vmatpush1.msra.mxu0 %v1466
    %1551 = vmatprep.subr.mxu0 0.0
    %1552 = vmatpush2.msra.mxu0 %v1497
    %1553 = vmatprep.subr.mxu0 0.0
    %1554 = vmatpush2.msra.mxu0 %v1496
    %1555 = vmatprep.subr.mxu0 0.0
    %1556 = vmatpush2.msra.mxu0 %v1495
    %1557 = vmatprep.subr.mxu0 0.0
    %1558 = vmatpush2.msra.mxu0 %v1494
    %1559 = vmatprep.subr.mxu0 0.0
    %1560 = vmatpush2.msra.mxu0 %v1493
    %1561 = vmatprep.subr.mxu0 0.0
    %1562 = vmatpush2.msra.mxu0 %v1492
    %1563 = vmatprep.subr.mxu0 0.0
    %1564 = vmatpush2.msra.mxu0 %v1491
    %1565 = vmatprep.subr.mxu0 0.0
    %1566 = vmatpush2.msra.mxu0 %v1490
    %1567 = vmatprep.subr.mxu0 0.0
    %1568 = vmatpush2.msra.mxu0 %v1489
    %1569 = vmatprep.subr.mxu0 0.0
    %1570 = vmatpush2.msra.mxu0 %v1488
    %1571 = vmatprep.subr.mxu0 0.0
    %1572 = vmatpush2.msra.mxu0 %v1487
    %1573 = vmatprep.subr.mxu0 0.0
    %1574 = vmatpush2.msra.mxu0 %v1486
    %1575 = vmatprep.subr.mxu0 0.0
    %1576 = vmatpush2.msra.mxu0 %v1485
    %1577 = vmatprep.subr.mxu0 0.0
    %1578 = vmatpush2.msra.mxu0 %v1484
    %1579 = vmatprep.subr.mxu0 0.0
    %1580 = vmatpush2.msra.mxu0 %v1483
    %1581 = vmatprep.subr.mxu0 0.0
    %1582 = vmatpush2.msra.mxu0 %v1482
    %1583 = vmatprep.mubr.f32.mxu0 %v1410
    %1584 = vmatmul.mubr.f32.gmra.mxu0 %v1434
    %v1585 = vpop.f32.mrf.mxu0
    %v1586 = vadd.f32 %v1518, %v1585
    %v1587 = vpop.f32.mrf.mxu0
    %1588 = vmatprep.mubr.f32.mxu0 %v1411
    %1589 = vmatmul.mubr.f32.gmra.mxu0 %v1435
    %v1590 = vpop.f32.mrf.mxu0
    %v1591 = vadd.f32 %v1518, %v1590
    %v1592 = vpop.f32.mrf.mxu0
    %1593 = vmatprep.mubr.f32.mxu0 %v1412
    %1594 = vmatmul.mubr.f32.gmra.mxu0 %v1436
    %v1595 = vpop.f32.mrf.mxu0
    %v1596 = vadd.f32 %v1518, %v1595
    %v1597 = vpop.f32.mrf.mxu0
    %1598 = vmatprep.mubr.f32.mxu0 %v1413
    %1599 = vmatmul.mubr.f32.gmra.mxu0 %v1437
    %v1600 = vpop.f32.mrf.mxu0
    %v1601 = vadd.f32 %v1518, %v1600
    %v1602 = vpop.f32.mrf.mxu0
    %1603 = vmatprep.mubr.f32.mxu0 %v1414
    %1604 = vmatmul.mubr.f32.gmra.mxu0 %v1438
    %v1605 = vpop.f32.mrf.mxu0
    %v1606 = vadd.f32 %v1518, %v1605
    %v1607 = vpop.f32.mrf.mxu0
    %1608 = vmatprep.mubr.f32.mxu0 %v1415
    %1609 = vmatmul.mubr.f32.gmra.mxu0 %v1439
    %v1610 = vpop.f32.mrf.mxu0
    %v1611 = vadd.f32 %v1518, %v1610
    %v1612 = vpop.f32.mrf.mxu0
    %1613 = vmatprep.mubr.f32.mxu0 %v1416
    %1614 = vmatmul.mubr.f32.gmra.mxu0 %v1440
    %v1615 = vpop.f32.mrf.mxu0
    %v1616 = vadd.f32 %v1518, %v1615
    %v1617 = vpop.f32.mrf.mxu0
    %1618 = vmatprep.mubr.f32.mxu0 %v1417
    %1619 = vmatmul.mubr.f32.gmra.mxu0 %v1441
    %v1620 = vpop.f32.mrf.mxu0
    %v1621 = vadd.f32 %v1518, %v1620
    %v1622 = vpop.f32.mrf.mxu0
    %1623 = vdwg.mxu0
    %1624 = vmatprep.subr.mxu0 0.0
    %1625 = vmatpush1.msra.mxu0 %v1513
    %1626 = vmatprep.subr.mxu0 0.0
    %1627 = vmatpush1.msra.mxu0 %v1512
    %1628 = vmatprep.subr.mxu0 0.0
    %1629 = vmatpush1.msra.mxu0 %v1511
    %1630 = vmatprep.subr.mxu0 0.0
    %1631 = vmatpush1.msra.mxu0 %v1510
    %1632 = vmatprep.subr.mxu0 0.0
    %1633 = vmatpush1.msra.mxu0 %v1509
    %1634 = vmatprep.subr.mxu0 0.0
    %1635 = vmatpush1.msra.mxu0 %v1508
    %1636 = vmatprep.subr.mxu0 0.0
    %1637 = vmatpush1.msra.mxu0 %v1507
    %1638 = vmatprep.subr.mxu0 0.0
    %1639 = vmatpush1.msra.mxu0 %v1506
    %1640 = vmatprep.subr.mxu0 0.0
    %1641 = vmatpush1.msra.mxu0 %v1505
    %1642 = vmatprep.subr.mxu0 0.0
    %1643 = vmatpush1.msra.mxu0 %v1504
    %1644 = vmatprep.subr.mxu0 0.0
    %1645 = vmatpush1.msra.mxu0 %v1503
    %1646 = vmatprep.subr.mxu0 0.0
    %1647 = vmatpush1.msra.mxu0 %v1502
    %1648 = vmatprep.subr.mxu0 0.0
    %1649 = vmatpush1.msra.mxu0 %v1501
    %1650 = vmatprep.subr.mxu0 0.0
    %1651 = vmatpush1.msra.mxu0 %v1500
    %1652 = vmatprep.subr.mxu0 0.0
    %1653 = vmatpush1.msra.mxu0 %v1499
    %1654 = vmatprep.subr.mxu0 0.0
    %1655 = vmatpush1.msra.mxu0 %v1498
    %1656 = vmatprep.subr.mxu0 0.0
    %1657 = vmatpush2.msra.mxu0 0.0
    %1658 = vmatprep.subr.mxu0 0.0
    %1659 = vmatpush2.msra.mxu0 0.0
    %1660 = vmatprep.subr.mxu0 0.0
    %1661 = vmatpush2.msra.mxu0 0.0
    %1662 = vmatprep.subr.mxu0 0.0
    %1663 = vmatpush2.msra.mxu0 0.0
    %1664 = vmatprep.subr.mxu0 0.0
    %1665 = vmatpush2.msra.mxu0 0.0
    %1666 = vmatprep.subr.mxu0 0.0
    %1667 = vmatpush2.msra.mxu0 0.0
    %1668 = vmatprep.subr.mxu0 0.0
    %1669 = vmatpush2.msra.mxu0 0.0
    %1670 = vmatprep.subr.mxu0 0.0
    %1671 = vmatpush2.msra.mxu0 0.0
    %1672 = vmatprep.subr.mxu0 0.0
    %1673 = vmatpush2.msra.mxu0 0.0
    %1674 = vmatprep.subr.mxu0 0.0
    %1675 = vmatpush2.msra.mxu0 0.0
    %1676 = vmatprep.subr.mxu0 0.0
    %1677 = vmatpush2.msra.mxu0 0.0
    %1678 = vmatprep.subr.mxu0 0.0
    %1679 = vmatpush2.msra.mxu0 0.0
    %1680 = vmatprep.subr.mxu0 0.0
    %1681 = vmatpush2.msra.mxu0 0.0
    %1682 = vmatprep.subr.mxu0 0.0
    %1683 = vmatpush2.msra.mxu0 0.0
    %1684 = vmatprep.subr.mxu0 0.0
    %1685 = vmatpush2.msra.mxu0 0.0
    %1686 = vmatprep.subr.mxu0 0.0
    %1687 = vmatpush2.msra.mxu0 0.0
    %1688 = vmatprep.mubr.f32.mxu0 0.0
    %1689 = vmatmul.mubr.f32.gmra.mxu0 %v1458
    %v1690 = vpop.f32.mrf.mxu0
    %v1691 = vadd.f32 %v1586, %v1690
    %v1692 = vpop.f32.mrf.mxu0
    %1693 = vmatprep.mubr.f32.mxu0 0.0
    %1694 = vmatmul.mubr.f32.gmra.mxu0 %v1459
    %v1695 = vpop.f32.mrf.mxu0
    %v1696 = vadd.f32 %v1591, %v1695
    %v1697 = vpop.f32.mrf.mxu0
    %1698 = vmatprep.mubr.f32.mxu0 0.0
    %1699 = vmatmul.mubr.f32.gmra.mxu0 %v1460
    %v1700 = vpop.f32.mrf.mxu0
    %v1701 = vadd.f32 %v1596, %v1700
    %v1702 = vpop.f32.mrf.mxu0
    %1703 = vmatprep.mubr.f32.mxu0 0.0
    %1704 = vmatmul.mubr.f32.gmra.mxu0 %v1461
    %v1705 = vpop.f32.mrf.mxu0
    %v1706 = vadd.f32 %v1601, %v1705
    %v1707 = vpop.f32.mrf.mxu0
    %1708 = vmatprep.mubr.f32.mxu0 0.0
    %1709 = vmatmul.mubr.f32.gmra.mxu0 %v1462
    %v1710 = vpop.f32.mrf.mxu0
    %v1711 = vadd.f32 %v1606, %v1710
    %v1712 = vpop.f32.mrf.mxu0
    %1713 = vmatprep.mubr.f32.mxu0 0.0
    %1714 = vmatmul.mubr.f32.gmra.mxu0 %v1463
    %v1715 = vpop.f32.mrf.mxu0
    %v1716 = vadd.f32 %v1611, %v1715
    %v1717 = vpop.f32.mrf.mxu0
    %1718 = vmatprep.mubr.f32.mxu0 0.0
    %1719 = vmatmul.mubr.f32.gmra.mxu0 %v1464
    %v1720 = vpop.f32.mrf.mxu0
    %v1721 = vadd.f32 %v1616, %v1720
    %v1722 = vpop.f32.mrf.mxu0
    %1723 = vmatprep.mubr.f32.mxu0 0.0
    %1724 = vmatmul.mubr.f32.gmra.mxu0 %v1465
    %v1725 = vpop.f32.mrf.mxu0
    %v1726 = vadd.f32 %v1621, %v1725
    %v1727 = vpop.f32.mrf.mxu0
    %1728 = vdwg.mxu0
    %v1729 = vmax.f32 %v1691, 0.0
    %v1730 = vmax.f32 %v1696, 0.0
    %v1731 = vmax.f32 %v1701, 0.0
    %v1732 = vmax.f32 %v1706, 0.0
    %v1733 = vmax.f32 %v1711, 0.0
    %v1734 = vmax.f32 %v1716, 0.0
    %v1735 = vmax.f32 %v1721, 0.0
    %v1736 = vmax.f32 %v1726, 0.0
    %v1737 = vld [vmem:[%s4] sm:$0xff]
    %v1738 = vld [vmem:[%s4 + $0x8] sm:$0xff]
    %v1739 = vld [vmem:[%s4 + $0x10] sm:$0xff]
    %v1740 = vld [vmem:[%s4 + $0x18] sm:$0xff]
    %v1741 = vld [vmem:[%s4 + $0x20] sm:$0xff]
    %v1742 = vld [vmem:[%s4 + $0x28] sm:$0xff]
    %v1743 = vld [vmem:[%s4 + $0x30] sm:$0xff]
    %v1744 = vld [vmem:[%s4 + $0x38] sm:$0xff]
    %v1745 = vld [vmem:[%s4 + $0x40] sm:$0xff]
    %v1746 = vld [vmem:[%s4 + $0x48] sm:$0xff]
    %v1747 = vld [vmem:[%s4 + $0x50] sm:$0xff]
    %v1748 = vld [vmem:[%s4 + $0x58] sm:$0xff]
    %vm1749 = vcmask 523264
    %v1751 = vsel %vm1749, %v1737, 0
    %v1754 = vsel %vm1749, %v1738, 0
    %v1757 = vsel %vm1749, %v1739, 0
    %v1760 = vsel %vm1749, %v1740, 0
    %v1763 = vsel %vm1749, %v1741, 0
    %v1766 = vsel %vm1749, %v1742, 0
    %v1769 = vsel %vm1749, %v1743, 0
    %v1772 = vsel %vm1749, %v1744, 0
    %v1775 = vsel %vm1749, %v1745, 0
    %v1778 = vsel %vm1749, %v1746, 0
    %v1781 = vsel %vm1749, %v1747, 0
    %v1784 = vsel %vm1749, %v1748, 0
    %1786 = vmatprep.subr.mxu0 0.0
    %1787 = vmatpush1.msra.mxu0 0.0
    %1788 = vmatprep.subr.mxu0 0.0
    %1789 = vmatpush1.msra.mxu0 0.0
    %1790 = vmatprep.subr.mxu0 0.0
    %1791 = vmatpush1.msra.mxu0 0.0
    %1792 = vmatprep.subr.mxu0 0.0
    %1793 = vmatpush1.msra.mxu0 0.0
    %1794 = vmatprep.subr.mxu0 0.0
    %1795 = vmatpush1.msra.mxu0 0.0
    %1796 = vmatprep.subr.mxu0 0.0
    %1797 = vmatpush1.msra.mxu0 0.0
    %1798 = vmatprep.subr.mxu0 0.0
    %1799 = vmatpush1.msra.mxu0 0.0
    %1800 = vmatprep.subr.mxu0 0.0
    %1801 = vmatpush1.msra.mxu0 0.0
    %1802 = vmatprep.subr.mxu0 0.0
    %1803 = vmatpush1.msra.mxu0 %v1736
    %1804 = vmatprep.subr.mxu0 0.0
    %1805 = vmatpush1.msra.mxu0 %v1735
    %1806 = vmatprep.subr.mxu0 0.0
    %1807 = vmatpush1.msra.mxu0 %v1734
    %1808 = vmatprep.subr.mxu0 0.0
    %1809 = vmatpush1.msra.mxu0 %v1733
    %1810 = vmatprep.subr.mxu0 0.0
    %1811 = vmatpush1.msra.mxu0 %v1732
    %1812 = vmatprep.subr.mxu0 0.0
    %1813 = vmatpush1.msra.mxu0 %v1731
    %1814 = vmatprep.subr.mxu0 0.0
    %1815 = vmatpush1.msra.mxu0 %v1730
    %1816 = vmatprep.subr.mxu0 0.0
    %1817 = vmatpush1.msra.mxu0 %v1729
    %1818 = vmatprep.subr.mxu0 0.0
    %1819 = vmatpush2.msra.mxu0 0.0
    %1820 = vmatprep.subr.mxu0 0.0
    %1821 = vmatpush2.msra.mxu0 0.0
    %1822 = vmatprep.subr.mxu0 0.0
    %1823 = vmatpush2.msra.mxu0 0.0
    %1824 = vmatprep.subr.mxu0 0.0
    %1825 = vmatpush2.msra.mxu0 0.0
    %1826 = vmatprep.subr.mxu0 0.0
    %1827 = vmatpush2.msra.mxu0 0.0
    %1828 = vmatprep.subr.mxu0 0.0
    %1829 = vmatpush2.msra.mxu0 0.0
    %1830 = vmatprep.subr.mxu0 0.0
    %1831 = vmatpush2.msra.mxu0 0.0
    %1832 = vmatprep.subr.mxu0 0.0
    %1833 = vmatpush2.msra.mxu0 0.0
    %1834 = vmatprep.subr.mxu0 0.0
    %1835 = vmatpush2.msra.mxu0 0.0
    %1836 = vmatprep.subr.mxu0 0.0
    %1837 = vmatpush2.msra.mxu0 0.0
    %1838 = vmatprep.subr.mxu0 0.0
    %1839 = vmatpush2.msra.mxu0 0.0
    %1840 = vmatprep.subr.mxu0 0.0
    %1841 = vmatpush2.msra.mxu0 0.0
    %1842 = vmatprep.subr.mxu0 0.0
    %1843 = vmatpush2.msra.mxu0 0.0
    %1844 = vmatprep.subr.mxu0 0.0
    %1845 = vmatpush2.msra.mxu0 0.0
    %1846 = vmatprep.subr.mxu0 0.0
    %1847 = vmatpush2.msra.mxu0 0.0
    %1848 = vmatprep.subr.mxu0 0.0
    %1849 = vmatpush2.msra.mxu0 0.0
    %1850 = vmatprep.mubr.f32.mxu0 0.0
    %1851 = vmatmul.mubr.f32.gmra.mxu0 %v1751
    %v1852 = vpop.f32.mrf.mxu0
    %v1853 = vadd.f32 0.0, %v1852
    %v1854 = vpop.f32.mrf.mxu0
    %1855 = vmatprep.mubr.f32.mxu0 0.0
    %1856 = vmatmul.mubr.f32.gmra.mxu0 %v1754
    %v1857 = vpop.f32.mrf.mxu0
    %v1858 = vadd.f32 0.0, %v1857
    %v1859 = vpop.f32.mrf.mxu0
    %1860 = vmatprep.mubr.f32.mxu0 0.0
    %1861 = vmatmul.mubr.f32.gmra.mxu0 %v1757
    %v1862 = vpop.f32.mrf.mxu0
    %v1863 = vadd.f32 0.0, %v1862
    %v1864 = vpop.f32.mrf.mxu0
    %1865 = vmatprep.mubr.f32.mxu0 0.0
    %1866 = vmatmul.mubr.f32.gmra.mxu0 %v1760
    %v1867 = vpop.f32.mrf.mxu0
    %v1868 = vadd.f32 0.0, %v1867
    %v1869 = vpop.f32.mrf.mxu0
    %1870 = vmatprep.mubr.f32.mxu0 0.0
    %1871 = vmatmul.mubr.f32.gmra.mxu0 %v1763
    %v1872 = vpop.f32.mrf.mxu0
    %v1873 = vadd.f32 0.0, %v1872
    %v1874 = vpop.f32.mrf.mxu0
    %1875 = vmatprep.mubr.f32.mxu0 0.0
    %1876 = vmatmul.mubr.f32.gmra.mxu0 %v1766
    %v1877 = vpop.f32.mrf.mxu0
    %v1878 = vadd.f32 0.0, %v1877
    %v1879 = vpop.f32.mrf.mxu0
    %1880 = vmatprep.mubr.f32.mxu0 0.0
    %1881 = vmatmul.mubr.f32.gmra.mxu0 %v1769
    %v1882 = vpop.f32.mrf.mxu0
    %v1883 = vadd.f32 0.0, %v1882
    %v1884 = vpop.f32.mrf.mxu0
    %1885 = vmatprep.mubr.f32.mxu0 0.0
    %1886 = vmatmul.mubr.f32.gmra.mxu0 %v1772
    %v1887 = vpop.f32.mrf.mxu0
    %v1888 = vadd.f32 0.0, %v1887
    %v1889 = vpop.f32.mrf.mxu0
    %1890 = vmatprep.mubr.f32.mxu0 0.0
    %1891 = vmatmul.mubr.f32.gmra.mxu0 %v1775
    %v1892 = vpop.f32.mrf.mxu0
    %v1893 = vadd.f32 0.0, %v1892
    %v1894 = vpop.f32.mrf.mxu0
    %1895 = vmatprep.mubr.f32.mxu0 0.0
    %1896 = vmatmul.mubr.f32.gmra.mxu0 %v1778
    %v1897 = vpop.f32.mrf.mxu0
    %v1898 = vadd.f32 0.0, %v1897
    %v1899 = vpop.f32.mrf.mxu0
    %1900 = vmatprep.mubr.f32.mxu0 0.0
    %1901 = vmatmul.mubr.f32.gmra.mxu0 %v1781
    %v1902 = vpop.f32.mrf.mxu0
    %v1903 = vadd.f32 0.0, %v1902
    %v1904 = vpop.f32.mrf.mxu0
    %1905 = vmatprep.mubr.f32.mxu0 0.0
    %1906 = vmatmul.mubr.f32.gmra.mxu0 %v1784
    %v1907 = vpop.f32.mrf.mxu0
    %v1908 = vadd.f32 0.0, %v1907
    %v1909 = vpop.f32.mrf.mxu0
    %1910 = vdwg.mxu0
    %v1911 = vld [vmem:[#allocation2 + $0x700] sm:$0xff]
    %v1912 = vld [vmem:[#allocation2 + $0x708] sm:$0xff]
    %v1913 = vld [vmem:[#allocation2 + $0x710] sm:$0xff]
    %v1914 = vld [vmem:[#allocation2 + $0x718] sm:$0xff]
    %v1915 = vld [vmem:[#allocation2 + $0x720] sm:$0xff]
    %v1916 = vld [vmem:[#allocation2 + $0x728] sm:$0xff]
    %v1917 = vld [vmem:[#allocation2 + $0x730] sm:$0xff]
    %v1918 = vld [vmem:[#allocation2 + $0x738] sm:$0xff]
    %v1919 = vld [vmem:[#allocation2 + $0x740] sm:$0xff]
    %v1920 = vld [vmem:[#allocation2 + $0x748] sm:$0xff]
    %v1921 = vld [vmem:[#allocation2 + $0x750] sm:$0xff]
    %v1922 = vld [vmem:[#allocation2 + $0x758] sm:$0xff]
    %v1923 = vld [vmem:[#allocation2 + $0x760] sm:$0xff]
    %v1924 = vld [vmem:[#allocation2 + $0x768] sm:$0xff]
    %v1925 = vld [vmem:[#allocation2 + $0x770] sm:$0xff]
    %v1926 = vld [vmem:[#allocation2 + $0x778] sm:$0xff]
    %v1927 = vld [vmem:[#allocation2 + $0x780] sm:$0xff]
    %v1928 = vld [vmem:[#allocation2 + $0x788] sm:$0xff]
    %v1929 = vld [vmem:[#allocation2 + $0x790] sm:$0xff]
    %v1930 = vld [vmem:[#allocation2 + $0x798] sm:$0xff]
    %v1931 = vld [vmem:[#allocation2 + $0x7a0] sm:$0xff]
    %v1932 = vld [vmem:[#allocation2 + $0x7a8] sm:$0xff]
    %v1933 = vld [vmem:[#allocation2 + $0x7b0] sm:$0xff]
    %v1934 = vld [vmem:[#allocation2 + $0x7b8] sm:$0xff]
    %v1935 = vld [vmem:[#allocation2 + $0x7c0] sm:$0xff]
    %v1936 = vld [vmem:[#allocation2 + $0x7c8] sm:$0xff]
    %v1937 = vld [vmem:[#allocation2 + $0x7d0] sm:$0xff]
    %v1938 = vld [vmem:[#allocation2 + $0x7d8] sm:$0xff]
    %v1939 = vld [vmem:[#allocation2 + $0x7e0] sm:$0xff]
    %v1940 = vld [vmem:[#allocation2 + $0x7e8] sm:$0xff]
    %v1941 = vld [vmem:[#allocation2 + $0x7f0] sm:$0xff]
    %v1942 = vld [vmem:[#allocation2 + $0x7f8] sm:$0xff]
    %v1943 = vld [vmem:[#allocation2 + $0x800] sm:$0xff]
    %v1944 = vld [vmem:[#allocation2 + $0x808] sm:$0xff]
    %v1945 = vld [vmem:[#allocation2 + $0x810] sm:$0xff]
    %v1946 = vld [vmem:[#allocation2 + $0x818] sm:$0xff]
    %v1947 = vld [vmem:[#allocation2 + $0x820] sm:$0xff]
    %v1948 = vld [vmem:[#allocation2 + $0x828] sm:$0xff]
    %v1949 = vld [vmem:[#allocation2 + $0x830] sm:$0xff]
    %v1950 = vld [vmem:[#allocation2 + $0x838] sm:$0xff]
    %v1951 = vld [vmem:[#allocation2 + $0x840] sm:$0xff]
    %v1952 = vld [vmem:[#allocation2 + $0x848] sm:$0xff]
    %v1953 = vld [vmem:[#allocation2 + $0x850] sm:$0xff]
    %v1954 = vld [vmem:[#allocation2 + $0x858] sm:$0xff]
    %v1955 = vld [vmem:[#allocation2 + $0x860] sm:$0xff]
    %v1956 = vld [vmem:[#allocation2 + $0x868] sm:$0xff]
    %v1957 = vld [vmem:[#allocation2 + $0x870] sm:$0xff]
    %v1958 = vld [vmem:[#allocation2 + $0x878] sm:$0xff]
    %v1959 = vld [vmem:[#allocation4 + $0x5] sm:$0x1]
    %v1960 = vlaneseq
    %v1961 = vshrl.u32 %v1960, 7
    %v1962 = vsub.s32 0, %v1961
    %v1963 = vrot.slane %v1959, %v1962
    %1964 = vmatprep.subr.mxu0 0.0
    %1965 = vmatpush1.msra.mxu0 %v1926
    %1966 = vmatprep.subr.mxu0 0.0
    %1967 = vmatpush1.msra.mxu0 %v1925
    %1968 = vmatprep.subr.mxu0 0.0
    %1969 = vmatpush1.msra.mxu0 %v1924
    %1970 = vmatprep.subr.mxu0 0.0
    %1971 = vmatpush1.msra.mxu0 %v1923
    %1972 = vmatprep.subr.mxu0 0.0
    %1973 = vmatpush1.msra.mxu0 %v1922
    %1974 = vmatprep.subr.mxu0 0.0
    %1975 = vmatpush1.msra.mxu0 %v1921
    %1976 = vmatprep.subr.mxu0 0.0
    %1977 = vmatpush1.msra.mxu0 %v1920
    %1978 = vmatprep.subr.mxu0 0.0
    %1979 = vmatpush1.msra.mxu0 %v1919
    %1980 = vmatprep.subr.mxu0 0.0
    %1981 = vmatpush1.msra.mxu0 %v1918
    %1982 = vmatprep.subr.mxu0 0.0
    %1983 = vmatpush1.msra.mxu0 %v1917
    %1984 = vmatprep.subr.mxu0 0.0
    %1985 = vmatpush1.msra.mxu0 %v1916
    %1986 = vmatprep.subr.mxu0 0.0
    %1987 = vmatpush1.msra.mxu0 %v1915
    %1988 = vmatprep.subr.mxu0 0.0
    %1989 = vmatpush1.msra.mxu0 %v1914
    %1990 = vmatprep.subr.mxu0 0.0
    %1991 = vmatpush1.msra.mxu0 %v1913
    %1992 = vmatprep.subr.mxu0 0.0
    %1993 = vmatpush1.msra.mxu0 %v1912
    %1994 = vmatprep.subr.mxu0 0.0
    %1995 = vmatpush1.msra.mxu0 %v1911
    %1996 = vmatprep.subr.mxu0 0.0
    %1997 = vmatpush2.msra.mxu0 %v1942
    %1998 = vmatprep.subr.mxu0 0.0
    %1999 = vmatpush2.msra.mxu0 %v1941
    %2000 = vmatprep.subr.mxu0 0.0
    %2001 = vmatpush2.msra.mxu0 %v1940
    %2002 = vmatprep.subr.mxu0 0.0
    %2003 = vmatpush2.msra.mxu0 %v1939
    %2004 = vmatprep.subr.mxu0 0.0
    %2005 = vmatpush2.msra.mxu0 %v1938
    %2006 = vmatprep.subr.mxu0 0.0
    %2007 = vmatpush2.msra.mxu0 %v1937
    %2008 = vmatprep.subr.mxu0 0.0
    %2009 = vmatpush2.msra.mxu0 %v1936
    %2010 = vmatprep.subr.mxu0 0.0
    %2011 = vmatpush2.msra.mxu0 %v1935
    %2012 = vmatprep.subr.mxu0 0.0
    %2013 = vmatpush2.msra.mxu0 %v1934
    %2014 = vmatprep.subr.mxu0 0.0
    %2015 = vmatpush2.msra.mxu0 %v1933
    %2016 = vmatprep.subr.mxu0 0.0
    %2017 = vmatpush2.msra.mxu0 %v1932
    %2018 = vmatprep.subr.mxu0 0.0
    %2019 = vmatpush2.msra.mxu0 %v1931
    %2020 = vmatprep.subr.mxu0 0.0
    %2021 = vmatpush2.msra.mxu0 %v1930
    %2022 = vmatprep.subr.mxu0 0.0
    %2023 = vmatpush2.msra.mxu0 %v1929
    %2024 = vmatprep.subr.mxu0 0.0
    %2025 = vmatpush2.msra.mxu0 %v1928
    %2026 = vmatprep.subr.mxu0 0.0
    %2027 = vmatpush2.msra.mxu0 %v1927
    %2028 = vmatprep.mubr.f32.mxu0 %v1873
    %2029 = vmatmul.mubr.f32.gmra.mxu0 %v1853
    %v2030 = vpop.f32.mrf.mxu0
    %v2031 = vadd.f32 %v1963, %v2030
    %v2032 = vpop.f32.mrf.mxu0
    %2033 = vmatprep.mubr.f32.mxu0 %v1878
    %2034 = vmatmul.mubr.f32.gmra.mxu0 %v1858
    %v2035 = vpop.f32.mrf.mxu0
    %v2036 = vadd.f32 %v1963, %v2035
    %v2037 = vpop.f32.mrf.mxu0
    %2038 = vmatprep.mubr.f32.mxu0 %v1883
    %2039 = vmatmul.mubr.f32.gmra.mxu0 %v1863
    %v2040 = vpop.f32.mrf.mxu0
    %v2041 = vadd.f32 %v1963, %v2040
    %v2042 = vpop.f32.mrf.mxu0
    %2043 = vmatprep.mubr.f32.mxu0 %v1888
    %2044 = vmatmul.mubr.f32.gmra.mxu0 %v1868
    %v2045 = vpop.f32.mrf.mxu0
    %v2046 = vadd.f32 %v1963, %v2045
    %v2047 = vpop.f32.mrf.mxu0
    %2048 = vdwg.mxu0
    %2049 = vmatprep.subr.mxu0 0.0
    %2050 = vmatpush1.msra.mxu0 %v1958
    %2051 = vmatprep.subr.mxu0 0.0
    %2052 = vmatpush1.msra.mxu0 %v1957
    %2053 = vmatprep.subr.mxu0 0.0
    %2054 = vmatpush1.msra.mxu0 %v1956
    %2055 = vmatprep.subr.mxu0 0.0
    %2056 = vmatpush1.msra.mxu0 %v1955
    %2057 = vmatprep.subr.mxu0 0.0
    %2058 = vmatpush1.msra.mxu0 %v1954
    %2059 = vmatprep.subr.mxu0 0.0
    %2060 = vmatpush1.msra.mxu0 %v1953
    %2061 = vmatprep.subr.mxu0 0.0
    %2062 = vmatpush1.msra.mxu0 %v1952
    %2063 = vmatprep.subr.mxu0 0.0
    %2064 = vmatpush1.msra.mxu0 %v1951
    %2065 = vmatprep.subr.mxu0 0.0
    %2066 = vmatpush1.msra.mxu0 %v1950
    %2067 = vmatprep.subr.mxu0 0.0
    %2068 = vmatpush1.msra.mxu0 %v1949
    %2069 = vmatprep.subr.mxu0 0.0
    %2070 = vmatpush1.msra.mxu0 %v1948
    %2071 = vmatprep.subr.mxu0 0.0
    %2072 = vmatpush1.msra.mxu0 %v1947
    %2073 = vmatprep.subr.mxu0 0.0
    %2074 = vmatpush1.msra.mxu0 %v1946
    %2075 = vmatprep.subr.mxu0 0.0
    %2076 = vmatpush1.msra.mxu0 %v1945
    %2077 = vmatprep.subr.mxu0 0.0
    %2078 = vmatpush1.msra.mxu0 %v1944
    %2079 = vmatprep.subr.mxu0 0.0
    %2080 = vmatpush1.msra.mxu0 %v1943
    %2081 = vmatprep.subr.mxu0 0.0
    %2082 = vmatpush2.msra.mxu0 0.0
    %2083 = vmatprep.subr.mxu0 0.0
    %2084 = vmatpush2.msra.mxu0 0.0
    %2085 = vmatprep.subr.mxu0 0.0
    %2086 = vmatpush2.msra.mxu0 0.0
    %2087 = vmatprep.subr.mxu0 0.0
    %2088 = vmatpush2.msra.mxu0 0.0
    %2089 = vmatprep.subr.mxu0 0.0
    %2090 = vmatpush2.msra.mxu0 0.0
    %2091 = vmatprep.subr.mxu0 0.0
    %2092 = vmatpush2.msra.mxu0 0.0
    %2093 = vmatprep.subr.mxu0 0.0
    %2094 = vmatpush2.msra.mxu0 0.0
    %2095 = vmatprep.subr.mxu0 0.0
    %2096 = vmatpush2.msra.mxu0 0.0
    %2097 = vmatprep.subr.mxu0 0.0
    %2098 = vmatpush2.msra.mxu0 0.0
    %2099 = vmatprep.subr.mxu0 0.0
    %2100 = vmatpush2.msra.mxu0 0.0
    %2101 = vmatprep.subr.mxu0 0.0
    %2102 = vmatpush2.msra.mxu0 0.0
    %2103 = vmatprep.subr.mxu0 0.0
    %2104 = vmatpush2.msra.mxu0 0.0
    %2105 = vmatprep.subr.mxu0 0.0
    %2106 = vmatpush2.msra.mxu0 0.0
    %2107 = vmatprep.subr.mxu0 0.0
    %2108 = vmatpush2.msra.mxu0 0.0
    %2109 = vmatprep.subr.mxu0 0.0
    %2110 = vmatpush2.msra.mxu0 0.0
    %2111 = vmatprep.subr.mxu0 0.0
    %2112 = vmatpush2.msra.mxu0 0.0
    %2113 = vmatprep.mubr.f32.mxu0 0.0
    %2114 = vmatmul.mubr.f32.gmra.mxu0 %v1893
    %v2115 = vpop.f32.mrf.mxu0
    %v2116 = vadd.f32 %v2031, %v2115
    %v2117 = vpop.f32.mrf.mxu0
    %2118 = vmatprep.mubr.f32.mxu0 0.0
    %2119 = vmatmul.mubr.f32.gmra.mxu0 %v1898
    %v2120 = vpop.f32.mrf.mxu0
    %v2121 = vadd.f32 %v2036, %v2120
    %v2122 = vpop.f32.mrf.mxu0
    %2123 = vmatprep.mubr.f32.mxu0 0.0
    %2124 = vmatmul.mubr.f32.gmra.mxu0 %v1903
    %v2125 = vpop.f32.mrf.mxu0
    %v2126 = vadd.f32 %v2041, %v2125
    %v2127 = vpop.f32.mrf.mxu0
    %2128 = vmatprep.mubr.f32.mxu0 0.0
    %2129 = vmatmul.mubr.f32.gmra.mxu0 %v1908
    %v2130 = vpop.f32.mrf.mxu0
    %v2131 = vadd.f32 %v2046, %v2130
    %v2132 = vpop.f32.mrf.mxu0
    %2133 = vdwg.mxu0
    %v2134 = vmax.f32 %v2116, 0.0
    %v2135 = vmax.f32 %v2121, 0.0
    %v2136 = vmax.f32 %v2126, 0.0
    %v2137 = vmax.f32 %v2131, 0.0
    %v2138 = vmul.f32 %v619, %v2134
    %v2139 = vmul.f32 %v620, %v2135
    %v2140 = vmul.f32 %v621, %v2136
    %v2141 = vmul.f32 %v622, %v2137
    %v2142 = vrot.slane %v2138, 7
    %v2143 = vrot.slane %v2139, 7
    %v2144 = vrot.slane %v2140, 7
    %v2145 = vrot.slane %v2141, 7
    %v2146 = vsel %vm64, %v2144, %v2145
    %v2147 = vsel %vm64, %v2143, %v2144
    %v2148 = vsel %vm64, %v2142, %v2143
    %v2149 = vsel %vm64, %v2145, %v2142
    %v2150 = vsel %vm120, 0.0, %v2149
    %v2151 = vsel %vm121, 0.0, %v2148
    %v2152 = vsel %vm122, 0.0, %v2147
    %v2153 = vsel %vm123, 0.0, %v2146
    %v2154 = vrot.slane %v2138, 1
    %v2155 = vrot.slane %v2139, 1
    %v2156 = vrot.slane %v2140, 1
    %v2157 = vrot.slane %v2141, 1
    %v2158 = vsel %vm132, %v2156, %v2157
    %v2159 = vsel %vm132, %v2155, %v2156
    %v2160 = vsel %vm132, %v2154, %v2155
    %v2161 = vsel %vm132, %v2157, %v2154
    %v2162 = vsel %vm137, 0.0, %v2160
    %v2163 = vsel %vm138, 0.0, %v2159
    %v2164 = vsel %vm139, 0.0, %v2158
    %v2165 = vsel %vm140, 0.0, %v2161
    %v2166 = vld [vmem:[#allocation2 + $0x880] sm:$0xff]
    %v2167 = vld [vmem:[#allocation2 + $0x888] sm:$0xff]
    %v2168 = vld [vmem:[#allocation2 + $0x890] sm:$0xff]
    %v2169 = vld [vmem:[#allocation2 + $0x898] sm:$0xff]
    %v2170 = vld [vmem:[#allocation2 + $0x8a0] sm:$0xff]
    %v2171 = vld [vmem:[#allocation2 + $0x8a8] sm:$0xff]
    %v2172 = vld [vmem:[#allocation2 + $0x8b0] sm:$0xff]
    %v2173 = vld [vmem:[#allocation2 + $0x8b8] sm:$0xff]
    %v2174 = vld [vmem:[#allocation2 + $0x8c0] sm:$0xff]
    %v2175 = vld [vmem:[#allocation2 + $0x8c8] sm:$0xff]
    %v2176 = vld [vmem:[#allocation2 + $0x8d0] sm:$0xff]
    %v2177 = vld [vmem:[#allocation2 + $0x8d8] sm:$0xff]
    %v2178 = vld [vmem:[#allocation2 + $0x8e0] sm:$0xff]
    %v2179 = vld [vmem:[#allocation2 + $0x8e8] sm:$0xff]
    %v2180 = vld [vmem:[#allocation2 + $0x8f0] sm:$0xff]
    %v2181 = vld [vmem:[#allocation2 + $0x8f8] sm:$0xff]
    %v2182 = vld [vmem:[#allocation2 + $0x900] sm:$0xff]
    %v2183 = vld [vmem:[#allocation2 + $0x908] sm:$0xff]
    %v2184 = vld [vmem:[#allocation2 + $0x910] sm:$0xff]
    %v2185 = vld [vmem:[#allocation2 + $0x918] sm:$0xff]
    %v2186 = vld [vmem:[#allocation2 + $0x920] sm:$0xff]
    %v2187 = vld [vmem:[#allocation2 + $0x928] sm:$0xff]
    %v2188 = vld [vmem:[#allocation2 + $0x930] sm:$0xff]
    %v2189 = vld [vmem:[#allocation2 + $0x938] sm:$0xff]
    %v2190 = vld [vmem:[#allocation2 + $0x940] sm:$0xff]
    %v2191 = vld [vmem:[#allocation2 + $0x948] sm:$0xff]
    %v2192 = vld [vmem:[#allocation2 + $0x950] sm:$0xff]
    %v2193 = vld [vmem:[#allocation2 + $0x958] sm:$0xff]
    %v2194 = vld [vmem:[#allocation2 + $0x960] sm:$0xff]
    %v2195 = vld [vmem:[#allocation2 + $0x968] sm:$0xff]
    %v2196 = vld [vmem:[#allocation2 + $0x970] sm:$0xff]
    %v2197 = vld [vmem:[#allocation2 + $0x978] sm:$0xff]
    %v2198 = vld [vmem:[#allocation2 + $0x980] sm:$0xff]
    %v2199 = vld [vmem:[#allocation2 + $0x988] sm:$0xff]
    %v2200 = vld [vmem:[#allocation2 + $0x990] sm:$0xff]
    %v2201 = vld [vmem:[#allocation2 + $0x998] sm:$0xff]
    %v2202 = vld [vmem:[#allocation2 + $0x9a0] sm:$0xff]
    %v2203 = vld [vmem:[#allocation2 + $0x9a8] sm:$0xff]
    %v2204 = vld [vmem:[#allocation2 + $0x9b0] sm:$0xff]
    %v2205 = vld [vmem:[#allocation2 + $0x9b8] sm:$0xff]
    %v2206 = vld [vmem:[#allocation2 + $0x9c0] sm:$0xff]
    %v2207 = vld [vmem:[#allocation2 + $0x9c8] sm:$0xff]
    %v2208 = vld [vmem:[#allocation2 + $0x9d0] sm:$0xff]
    %v2209 = vld [vmem:[#allocation2 + $0x9d8] sm:$0xff]
    %v2210 = vld [vmem:[#allocation2 + $0x9e0] sm:$0xff]
    %v2211 = vld [vmem:[#allocation2 + $0x9e8] sm:$0xff]
    %v2212 = vld [vmem:[#allocation2 + $0x9f0] sm:$0xff]
    %v2213 = vld [vmem:[#allocation2 + $0x9f8] sm:$0xff]
    %v2214 = vld [vmem:[#allocation4 + $0x6] sm:$0x1]
    %v2215 = vlaneseq
    %v2216 = vshrl.u32 %v2215, 7
    %v2217 = vsub.s32 0, %v2216
    %v2218 = vrot.slane %v2214, %v2217
    %2219 = vmatprep.subr.mxu0 0.0
    %2220 = vmatpush1.msra.mxu0 %v2181
    %2221 = vmatprep.subr.mxu0 0.0
    %2222 = vmatpush1.msra.mxu0 %v2180
    %2223 = vmatprep.subr.mxu0 0.0
    %2224 = vmatpush1.msra.mxu0 %v2179
    %2225 = vmatprep.subr.mxu0 0.0
    %2226 = vmatpush1.msra.mxu0 %v2178
    %2227 = vmatprep.subr.mxu0 0.0
    %2228 = vmatpush1.msra.mxu0 %v2177
    %2229 = vmatprep.subr.mxu0 0.0
    %2230 = vmatpush1.msra.mxu0 %v2176
    %2231 = vmatprep.subr.mxu0 0.0
    %2232 = vmatpush1.msra.mxu0 %v2175
    %2233 = vmatprep.subr.mxu0 0.0
    %2234 = vmatpush1.msra.mxu0 %v2174
    %2235 = vmatprep.subr.mxu0 0.0
    %2236 = vmatpush1.msra.mxu0 %v2173
    %2237 = vmatprep.subr.mxu0 0.0
    %2238 = vmatpush1.msra.mxu0 %v2172
    %2239 = vmatprep.subr.mxu0 0.0
    %2240 = vmatpush1.msra.mxu0 %v2171
    %2241 = vmatprep.subr.mxu0 0.0
    %2242 = vmatpush1.msra.mxu0 %v2170
    %2243 = vmatprep.subr.mxu0 0.0
    %2244 = vmatpush1.msra.mxu0 %v2169
    %2245 = vmatprep.subr.mxu0 0.0
    %2246 = vmatpush1.msra.mxu0 %v2168
    %2247 = vmatprep.subr.mxu0 0.0
    %2248 = vmatpush1.msra.mxu0 %v2167
    %2249 = vmatprep.subr.mxu0 0.0
    %2250 = vmatpush1.msra.mxu0 %v2166
    %2251 = vmatprep.subr.mxu0 0.0
    %2252 = vmatpush2.msra.mxu0 %v2197
    %2253 = vmatprep.subr.mxu0 0.0
    %2254 = vmatpush2.msra.mxu0 %v2196
    %2255 = vmatprep.subr.mxu0 0.0
    %2256 = vmatpush2.msra.mxu0 %v2195
    %2257 = vmatprep.subr.mxu0 0.0
    %2258 = vmatpush2.msra.mxu0 %v2194
    %2259 = vmatprep.subr.mxu0 0.0
    %2260 = vmatpush2.msra.mxu0 %v2193
    %2261 = vmatprep.subr.mxu0 0.0
    %2262 = vmatpush2.msra.mxu0 %v2192
    %2263 = vmatprep.subr.mxu0 0.0
    %2264 = vmatpush2.msra.mxu0 %v2191
    %2265 = vmatprep.subr.mxu0 0.0
    %2266 = vmatpush2.msra.mxu0 %v2190
    %2267 = vmatprep.subr.mxu0 0.0
    %2268 = vmatpush2.msra.mxu0 %v2189
    %2269 = vmatprep.subr.mxu0 0.0
    %2270 = vmatpush2.msra.mxu0 %v2188
    %2271 = vmatprep.subr.mxu0 0.0
    %2272 = vmatpush2.msra.mxu0 %v2187
    %2273 = vmatprep.subr.mxu0 0.0
    %2274 = vmatpush2.msra.mxu0 %v2186
    %2275 = vmatprep.subr.mxu0 0.0
    %2276 = vmatpush2.msra.mxu0 %v2185
    %2277 = vmatprep.subr.mxu0 0.0
    %2278 = vmatpush2.msra.mxu0 %v2184
    %2279 = vmatprep.subr.mxu0 0.0
    %2280 = vmatpush2.msra.mxu0 %v2183
    %2281 = vmatprep.subr.mxu0 0.0
    %2282 = vmatpush2.msra.mxu0 %v2182
    %2283 = vmatprep.mubr.f32.mxu0 %v2138
    %2284 = vmatmul.mubr.f32.gmra.mxu0 %v2150
    %v2285 = vpop.f32.mrf.mxu0
    %v2286 = vadd.f32 %v2218, %v2285
    %v2287 = vpop.f32.mrf.mxu0
    %2288 = vmatprep.mubr.f32.mxu0 %v2139
    %2289 = vmatmul.mubr.f32.gmra.mxu0 %v2151
    %v2290 = vpop.f32.mrf.mxu0
    %v2291 = vadd.f32 %v2218, %v2290
    %v2292 = vpop.f32.mrf.mxu0
    %2293 = vmatprep.mubr.f32.mxu0 %v2140
    %2294 = vmatmul.mubr.f32.gmra.mxu0 %v2152
    %v2295 = vpop.f32.mrf.mxu0
    %v2296 = vadd.f32 %v2218, %v2295
    %v2297 = vpop.f32.mrf.mxu0
    %2298 = vmatprep.mubr.f32.mxu0 %v2141
    %2299 = vmatmul.mubr.f32.gmra.mxu0 %v2153
    %v2300 = vpop.f32.mrf.mxu0
    %v2301 = vadd.f32 %v2218, %v2300
    %v2302 = vpop.f32.mrf.mxu0
    %2303 = vdwg.mxu0
    %2304 = vmatprep.subr.mxu0 0.0
    %2305 = vmatpush1.msra.mxu0 %v2213
    %2306 = vmatprep.subr.mxu0 0.0
    %2307 = vmatpush1.msra.mxu0 %v2212
    %2308 = vmatprep.subr.mxu0 0.0
    %2309 = vmatpush1.msra.mxu0 %v2211
    %2310 = vmatprep.subr.mxu0 0.0
    %2311 = vmatpush1.msra.mxu0 %v2210
    %2312 = vmatprep.subr.mxu0 0.0
    %2313 = vmatpush1.msra.mxu0 %v2209
    %2314 = vmatprep.subr.mxu0 0.0
    %2315 = vmatpush1.msra.mxu0 %v2208
    %2316 = vmatprep.subr.mxu0 0.0
    %2317 = vmatpush1.msra.mxu0 %v2207
    %2318 = vmatprep.subr.mxu0 0.0
    %2319 = vmatpush1.msra.mxu0 %v2206
    %2320 = vmatprep.subr.mxu0 0.0
    %2321 = vmatpush1.msra.mxu0 %v2205
    %2322 = vmatprep.subr.mxu0 0.0
    %2323 = vmatpush1.msra.mxu0 %v2204
    %2324 = vmatprep.subr.mxu0 0.0
    %2325 = vmatpush1.msra.mxu0 %v2203
    %2326 = vmatprep.subr.mxu0 0.0
    %2327 = vmatpush1.msra.mxu0 %v2202
    %2328 = vmatprep.subr.mxu0 0.0
    %2329 = vmatpush1.msra.mxu0 %v2201
    %2330 = vmatprep.subr.mxu0 0.0
    %2331 = vmatpush1.msra.mxu0 %v2200
    %2332 = vmatprep.subr.mxu0 0.0
    %2333 = vmatpush1.msra.mxu0 %v2199
    %2334 = vmatprep.subr.mxu0 0.0
    %2335 = vmatpush1.msra.mxu0 %v2198
    %2336 = vmatprep.subr.mxu0 0.0
    %2337 = vmatpush2.msra.mxu0 0.0
    %2338 = vmatprep.subr.mxu0 0.0
    %2339 = vmatpush2.msra.mxu0 0.0
    %2340 = vmatprep.subr.mxu0 0.0
    %2341 = vmatpush2.msra.mxu0 0.0
    %2342 = vmatprep.subr.mxu0 0.0
    %2343 = vmatpush2.msra.mxu0 0.0
    %2344 = vmatprep.subr.mxu0 0.0
    %2345 = vmatpush2.msra.mxu0 0.0
    %2346 = vmatprep.subr.mxu0 0.0
    %2347 = vmatpush2.msra.mxu0 0.0
    %2348 = vmatprep.subr.mxu0 0.0
    %2349 = vmatpush2.msra.mxu0 0.0
    %2350 = vmatprep.subr.mxu0 0.0
    %2351 = vmatpush2.msra.mxu0 0.0
    %2352 = vmatprep.subr.mxu0 0.0
    %2353 = vmatpush2.msra.mxu0 0.0
    %2354 = vmatprep.subr.mxu0 0.0
    %2355 = vmatpush2.msra.mxu0 0.0
    %2356 = vmatprep.subr.mxu0 0.0
    %2357 = vmatpush2.msra.mxu0 0.0
    %2358 = vmatprep.subr.mxu0 0.0
    %2359 = vmatpush2.msra.mxu0 0.0
    %2360 = vmatprep.subr.mxu0 0.0
    %2361 = vmatpush2.msra.mxu0 0.0
    %2362 = vmatprep.subr.mxu0 0.0
    %2363 = vmatpush2.msra.mxu0 0.0
    %2364 = vmatprep.subr.mxu0 0.0
    %2365 = vmatpush2.msra.mxu0 0.0
    %2366 = vmatprep.subr.mxu0 0.0
    %2367 = vmatpush2.msra.mxu0 0.0
    %2368 = vmatprep.mubr.f32.mxu0 0.0
    %2369 = vmatmul.mubr.f32.gmra.mxu0 %v2162
    %v2370 = vpop.f32.mrf.mxu0
    %v2371 = vadd.f32 %v2286, %v2370
    %v2372 = vpop.f32.mrf.mxu0
    %2373 = vmatprep.mubr.f32.mxu0 0.0
    %2374 = vmatmul.mubr.f32.gmra.mxu0 %v2163
    %v2375 = vpop.f32.mrf.mxu0
    %v2376 = vadd.f32 %v2291, %v2375
    %v2377 = vpop.f32.mrf.mxu0
    %2378 = vmatprep.mubr.f32.mxu0 0.0
    %2379 = vmatmul.mubr.f32.gmra.mxu0 %v2164
    %v2380 = vpop.f32.mrf.mxu0
    %v2381 = vadd.f32 %v2296, %v2380
    %v2382 = vpop.f32.mrf.mxu0
    %2383 = vmatprep.mubr.f32.mxu0 0.0
    %2384 = vmatmul.mubr.f32.gmra.mxu0 %v2165
    %v2385 = vpop.f32.mrf.mxu0
    %v2386 = vadd.f32 %v2301, %v2385
    %v2387 = vpop.f32.mrf.mxu0
    %2388 = vdwg.mxu0
    %v2389 = vmax.f32 %v2371, 0.0
    %v2390 = vmax.f32 %v2376, 0.0
    %v2391 = vmax.f32 %v2381, 0.0
    %v2392 = vmax.f32 %v2386, 0.0
    %v2393 = vrot.slane %v2389, 7
    %v2394 = vrot.slane %v2390, 7
    %v2395 = vrot.slane %v2391, 7
    %v2396 = vrot.slane %v2392, 7
    %v2397 = vsel %vm64, %v2395, %v2396
    %v2398 = vsel %vm64, %v2394, %v2395
    %v2399 = vsel %vm64, %v2393, %v2394
    %v2400 = vsel %vm64, %v2396, %v2393
    %v2401 = vsel %vm120, 0.0, %v2400
    %v2402 = vsel %vm121, 0.0, %v2399
    %v2403 = vsel %vm122, 0.0, %v2398
    %v2404 = vsel %vm123, 0.0, %v2397
    %v2405 = vrot.slane %v2389, 1
    %v2406 = vrot.slane %v2390, 1
    %v2407 = vrot.slane %v2391, 1
    %v2408 = vrot.slane %v2392, 1
    %v2409 = vsel %vm132, %v2407, %v2408
    %v2410 = vsel %vm132, %v2406, %v2407
    %v2411 = vsel %vm132, %v2405, %v2406
    %v2412 = vsel %vm132, %v2408, %v2405
    %v2413 = vsel %vm137, 0.0, %v2411
    %v2414 = vsel %vm138, 0.0, %v2410
    %v2415 = vsel %vm139, 0.0, %v2409
    %v2416 = vsel %vm140, 0.0, %v2412
    %v2417 = vld [vmem:[#allocation2 + $0xa00] sm:$0xff]
    %v2418 = vld [vmem:[#allocation2 + $0xa08] sm:$0xff]
    %v2419 = vld [vmem:[#allocation2 + $0xa10] sm:$0xff]
    %v2420 = vld [vmem:[#allocation2 + $0xa18] sm:$0xff]
    %v2421 = vld [vmem:[#allocation2 + $0xa20] sm:$0xff]
    %v2422 = vld [vmem:[#allocation2 + $0xa28] sm:$0xff]
    %v2423 = vld [vmem:[#allocation2 + $0xa30] sm:$0xff]
    %v2424 = vld [vmem:[#allocation2 + $0xa38] sm:$0xff]
    %v2425 = vld [vmem:[#allocation2 + $0xa40] sm:$0xff]
    %v2426 = vld [vmem:[#allocation2 + $0xa48] sm:$0xff]
    %v2427 = vld [vmem:[#allocation2 + $0xa50] sm:$0xff]
    %v2428 = vld [vmem:[#allocation2 + $0xa58] sm:$0xff]
    %v2429 = vld [vmem:[#allocation2 + $0xa60] sm:$0xff]
    %v2430 = vld [vmem:[#allocation2 + $0xa68] sm:$0xff]
    %v2431 = vld [vmem:[#allocation2 + $0xa70] sm:$0xff]
    %v2432 = vld [vmem:[#allocation2 + $0xa78] sm:$0xff]
    %v2433 = vld [vmem:[#allocation2 + $0xa80] sm:$0xff]
    %v2434 = vld [vmem:[#allocation2 + $0xa88] sm:$0xff]
    %v2435 = vld [vmem:[#allocation2 + $0xa90] sm:$0xff]
    %v2436 = vld [vmem:[#allocation2 + $0xa98] sm:$0xff]
    %v2437 = vld [vmem:[#allocation2 + $0xaa0] sm:$0xff]
    %v2438 = vld [vmem:[#allocation2 + $0xaa8] sm:$0xff]
    %v2439 = vld [vmem:[#allocation2 + $0xab0] sm:$0xff]
    %v2440 = vld [vmem:[#allocation2 + $0xab8] sm:$0xff]
    %v2441 = vld [vmem:[#allocation2 + $0xac0] sm:$0xff]
    %v2442 = vld [vmem:[#allocation2 + $0xac8] sm:$0xff]
    %v2443 = vld [vmem:[#allocation2 + $0xad0] sm:$0xff]
    %v2444 = vld [vmem:[#allocation2 + $0xad8] sm:$0xff]
    %v2445 = vld [vmem:[#allocation2 + $0xae0] sm:$0xff]
    %v2446 = vld [vmem:[#allocation2 + $0xae8] sm:$0xff]
    %v2447 = vld [vmem:[#allocation2 + $0xaf0] sm:$0xff]
    %v2448 = vld [vmem:[#allocation2 + $0xaf8] sm:$0xff]
    %v2449 = vld [vmem:[#allocation2 + $0xb00] sm:$0xff]
    %v2450 = vld [vmem:[#allocation2 + $0xb08] sm:$0xff]
    %v2451 = vld [vmem:[#allocation2 + $0xb10] sm:$0xff]
    %v2452 = vld [vmem:[#allocation2 + $0xb18] sm:$0xff]
    %v2453 = vld [vmem:[#allocation2 + $0xb20] sm:$0xff]
    %v2454 = vld [vmem:[#allocation2 + $0xb28] sm:$0xff]
    %v2455 = vld [vmem:[#allocation2 + $0xb30] sm:$0xff]
    %v2456 = vld [vmem:[#allocation2 + $0xb38] sm:$0xff]
    %v2457 = vld [vmem:[#allocation2 + $0xb40] sm:$0xff]
    %v2458 = vld [vmem:[#allocation2 + $0xb48] sm:$0xff]
    %v2459 = vld [vmem:[#allocation2 + $0xb50] sm:$0xff]
    %v2460 = vld [vmem:[#allocation2 + $0xb58] sm:$0xff]
    %v2461 = vld [vmem:[#allocation2 + $0xb60] sm:$0xff]
    %v2462 = vld [vmem:[#allocation2 + $0xb68] sm:$0xff]
    %v2463 = vld [vmem:[#allocation2 + $0xb70] sm:$0xff]
    %v2464 = vld [vmem:[#allocation2 + $0xb78] sm:$0xff]
    %v2465 = vld [vmem:[#allocation4 + $0x7] sm:$0x1]
    %v2466 = vlaneseq
    %v2467 = vshrl.u32 %v2466, 7
    %v2468 = vsub.s32 0, %v2467
    %v2469 = vrot.slane %v2465, %v2468
    %2470 = vmatprep.subr.mxu0 0.0
    %2471 = vmatpush1.msra.mxu0 %v2432
    %2472 = vmatprep.subr.mxu0 0.0
    %2473 = vmatpush1.msra.mxu0 %v2431
    %2474 = vmatprep.subr.mxu0 0.0
    %2475 = vmatpush1.msra.mxu0 %v2430
    %2476 = vmatprep.subr.mxu0 0.0
    %2477 = vmatpush1.msra.mxu0 %v2429
    %2478 = vmatprep.subr.mxu0 0.0
    %2479 = vmatpush1.msra.mxu0 %v2428
    %2480 = vmatprep.subr.mxu0 0.0
    %2481 = vmatpush1.msra.mxu0 %v2427
    %2482 = vmatprep.subr.mxu0 0.0
    %2483 = vmatpush1.msra.mxu0 %v2426
    %2484 = vmatprep.subr.mxu0 0.0
    %2485 = vmatpush1.msra.mxu0 %v2425
    %2486 = vmatprep.subr.mxu0 0.0
    %2487 = vmatpush1.msra.mxu0 %v2424
    %2488 = vmatprep.subr.mxu0 0.0
    %2489 = vmatpush1.msra.mxu0 %v2423
    %2490 = vmatprep.subr.mxu0 0.0
    %2491 = vmatpush1.msra.mxu0 %v2422
    %2492 = vmatprep.subr.mxu0 0.0
    %2493 = vmatpush1.msra.mxu0 %v2421
    %2494 = vmatprep.subr.mxu0 0.0
    %2495 = vmatpush1.msra.mxu0 %v2420
    %2496 = vmatprep.subr.mxu0 0.0
    %2497 = vmatpush1.msra.mxu0 %v2419
    %2498 = vmatprep.subr.mxu0 0.0
    %2499 = vmatpush1.msra.mxu0 %v2418
    %2500 = vmatprep.subr.mxu0 0.0
    %2501 = vmatpush1.msra.mxu0 %v2417
    %2502 = vmatprep.subr.mxu0 0.0
    %2503 = vmatpush2.msra.mxu0 %v2448
    %2504 = vmatprep.subr.mxu0 0.0
    %2505 = vmatpush2.msra.mxu0 %v2447
    %2506 = vmatprep.subr.mxu0 0.0
    %2507 = vmatpush2.msra.mxu0 %v2446
    %2508 = vmatprep.subr.mxu0 0.0
    %2509 = vmatpush2.msra.mxu0 %v2445
    %2510 = vmatprep.subr.mxu0 0.0
    %2511 = vmatpush2.msra.mxu0 %v2444
    %2512 = vmatprep.subr.mxu0 0.0
    %2513 = vmatpush2.msra.mxu0 %v2443
    %2514 = vmatprep.subr.mxu0 0.0
    %2515 = vmatpush2.msra.mxu0 %v2442
    %2516 = vmatprep.subr.mxu0 0.0
    %2517 = vmatpush2.msra.mxu0 %v2441
    %2518 = vmatprep.subr.mxu0 0.0
    %2519 = vmatpush2.msra.mxu0 %v2440
    %2520 = vmatprep.subr.mxu0 0.0
    %2521 = vmatpush2.msra.mxu0 %v2439
    %2522 = vmatprep.subr.mxu0 0.0
    %2523 = vmatpush2.msra.mxu0 %v2438
    %2524 = vmatprep.subr.mxu0 0.0
    %2525 = vmatpush2.msra.mxu0 %v2437
    %2526 = vmatprep.subr.mxu0 0.0
    %2527 = vmatpush2.msra.mxu0 %v2436
    %2528 = vmatprep.subr.mxu0 0.0
    %2529 = vmatpush2.msra.mxu0 %v2435
    %2530 = vmatprep.subr.mxu0 0.0
    %2531 = vmatpush2.msra.mxu0 %v2434
    %2532 = vmatprep.subr.mxu0 0.0
    %2533 = vmatpush2.msra.mxu0 %v2433
    %2534 = vmatprep.mubr.f32.mxu0 %v2389
    %2535 = vmatmul.mubr.f32.gmra.mxu0 %v2401
    %v2536 = vpop.f32.mrf.mxu0
    %v2537 = vadd.f32 %v2469, %v2536
    %v2538 = vpop.f32.mrf.mxu0
    %2539 = vmatprep.mubr.f32.mxu0 %v2390
    %2540 = vmatmul.mubr.f32.gmra.mxu0 %v2402
    %v2541 = vpop.f32.mrf.mxu0
    %v2542 = vadd.f32 %v2469, %v2541
    %v2543 = vpop.f32.mrf.mxu0
    %2544 = vmatprep.mubr.f32.mxu0 %v2391
    %2545 = vmatmul.mubr.f32.gmra.mxu0 %v2403
    %v2546 = vpop.f32.mrf.mxu0
    %v2547 = vadd.f32 %v2469, %v2546
    %v2548 = vpop.f32.mrf.mxu0
    %2549 = vmatprep.mubr.f32.mxu0 %v2392
    %2550 = vmatmul.mubr.f32.gmra.mxu0 %v2404
    %v2551 = vpop.f32.mrf.mxu0
    %v2552 = vadd.f32 %v2469, %v2551
    %v2553 = vpop.f32.mrf.mxu0
    %2554 = vdwg.mxu0
    %2555 = vmatprep.subr.mxu0 0.0
    %2556 = vmatpush1.msra.mxu0 %v2464
    %2557 = vmatprep.subr.mxu0 0.0
    %2558 = vmatpush1.msra.mxu0 %v2463
    %2559 = vmatprep.subr.mxu0 0.0
    %2560 = vmatpush1.msra.mxu0 %v2462
    %2561 = vmatprep.subr.mxu0 0.0
    %2562 = vmatpush1.msra.mxu0 %v2461
    %2563 = vmatprep.subr.mxu0 0.0
    %2564 = vmatpush1.msra.mxu0 %v2460
    %2565 = vmatprep.subr.mxu0 0.0
    %2566 = vmatpush1.msra.mxu0 %v2459
    %2567 = vmatprep.subr.mxu0 0.0
    %2568 = vmatpush1.msra.mxu0 %v2458
    %2569 = vmatprep.subr.mxu0 0.0
    %2570 = vmatpush1.msra.mxu0 %v2457
    %2571 = vmatprep.subr.mxu0 0.0
    %2572 = vmatpush1.msra.mxu0 %v2456
    %2573 = vmatprep.subr.mxu0 0.0
    %2574 = vmatpush1.msra.mxu0 %v2455
    %2575 = vmatprep.subr.mxu0 0.0
    %2576 = vmatpush1.msra.mxu0 %v2454
    %2577 = vmatprep.subr.mxu0 0.0
    %2578 = vmatpush1.msra.mxu0 %v2453
    %2579 = vmatprep.subr.mxu0 0.0
    %2580 = vmatpush1.msra.mxu0 %v2452
    %2581 = vmatprep.subr.mxu0 0.0
    %2582 = vmatpush1.msra.mxu0 %v2451
    %2583 = vmatprep.subr.mxu0 0.0
    %2584 = vmatpush1.msra.mxu0 %v2450
    %2585 = vmatprep.subr.mxu0 0.0
    %2586 = vmatpush1.msra.mxu0 %v2449
    %2587 = vmatprep.subr.mxu0 0.0
    %2588 = vmatpush2.msra.mxu0 0.0
    %2589 = vmatprep.subr.mxu0 0.0
    %2590 = vmatpush2.msra.mxu0 0.0
    %2591 = vmatprep.subr.mxu0 0.0
    %2592 = vmatpush2.msra.mxu0 0.0
    %2593 = vmatprep.subr.mxu0 0.0
    %2594 = vmatpush2.msra.mxu0 0.0
    %2595 = vmatprep.subr.mxu0 0.0
    %2596 = vmatpush2.msra.mxu0 0.0
    %2597 = vmatprep.subr.mxu0 0.0
    %2598 = vmatpush2.msra.mxu0 0.0
    %2599 = vmatprep.subr.mxu0 0.0
    %2600 = vmatpush2.msra.mxu0 0.0
    %2601 = vmatprep.subr.mxu0 0.0
    %2602 = vmatpush2.msra.mxu0 0.0
    %2603 = vmatprep.subr.mxu0 0.0
    %2604 = vmatpush2.msra.mxu0 0.0
    %2605 = vmatprep.subr.mxu0 0.0
    %2606 = vmatpush2.msra.mxu0 0.0
    %2607 = vmatprep.subr.mxu0 0.0
    %2608 = vmatpush2.msra.mxu0 0.0
    %2609 = vmatprep.subr.mxu0 0.0
    %2610 = vmatpush2.msra.mxu0 0.0
    %2611 = vmatprep.subr.mxu0 0.0
    %2612 = vmatpush2.msra.mxu0 0.0
    %2613 = vmatprep.subr.mxu0 0.0
    %2614 = vmatpush2.msra.mxu0 0.0
    %2615 = vmatprep.subr.mxu0 0.0
    %2616 = vmatpush2.msra.mxu0 0.0
    %2617 = vmatprep.subr.mxu0 0.0
    %2618 = vmatpush2.msra.mxu0 0.0
    %2619 = vmatprep.mubr.f32.mxu0 0.0
    %2620 = vmatmul.mubr.f32.gmra.mxu0 %v2413
    %v2621 = vpop.f32.mrf.mxu0
    %v2622 = vadd.f32 %v2537, %v2621
    %v2623 = vpop.f32.mrf.mxu0
    %2624 = vmatprep.mubr.f32.mxu0 0.0
    %2625 = vmatmul.mubr.f32.gmra.mxu0 %v2414
    %v2626 = vpop.f32.mrf.mxu0
    %v2627 = vadd.f32 %v2542, %v2626
    %v2628 = vpop.f32.mrf.mxu0
    %2629 = vmatprep.mubr.f32.mxu0 0.0
    %2630 = vmatmul.mubr.f32.gmra.mxu0 %v2415
    %v2631 = vpop.f32.mrf.mxu0
    %v2632 = vadd.f32 %v2547, %v2631
    %v2633 = vpop.f32.mrf.mxu0
    %2634 = vmatprep.mubr.f32.mxu0 0.0
    %2635 = vmatmul.mubr.f32.gmra.mxu0 %v2416
    %v2636 = vpop.f32.mrf.mxu0
    %v2637 = vadd.f32 %v2552, %v2636
    %v2638 = vpop.f32.mrf.mxu0
    %2639 = vdwg.mxu0
    %v2640 = vmax.f32 %v2622, 0.0
    %v2641 = vmax.f32 %v2627, 0.0
    %v2642 = vmax.f32 %v2632, 0.0
    %v2643 = vmax.f32 %v2637, 0.0
    %v2644 = vld [vmem:[%s5] sm:$0xff]
    %v2645 = vld [vmem:[%s5 + $0x8] sm:$0xff]
    %v2646 = vld [vmem:[%s5 + $0x10] sm:$0xff]
    %v2647 = vld [vmem:[%s5 + $0x18] sm:$0xff]
    %v2648 = vld [vmem:[%s5 + $0x20] sm:$0xff]
    %v2649 = vld [vmem:[%s5 + $0x28] sm:$0xff]
    %v2651 = vsel %vm639, %v2644, 0
    %v2654 = vsel %vm639, %v2645, 0
    %v2657 = vsel %vm639, %v2646, 0
    %v2660 = vsel %vm639, %v2647, 0
    %v2663 = vsel %vm639, %v2648, 0
    %v2666 = vsel %vm639, %v2649, 0
    %2668 = vmatprep.subr.mxu0 0.0
    %2669 = vmatpush1.msra.mxu0 0.0
    %2670 = vmatprep.subr.mxu0 0.0
    %2671 = vmatpush1.msra.mxu0 0.0
    %2672 = vmatprep.subr.mxu0 0.0
    %2673 = vmatpush1.msra.mxu0 0.0
    %2674 = vmatprep.subr.mxu0 0.0
    %2675 = vmatpush1.msra.mxu0 0.0
    %2676 = vmatprep.subr.mxu0 0.0
    %2677 = vmatpush1.msra.mxu0 0.0
    %2678 = vmatprep.subr.mxu0 0.0
    %2679 = vmatpush1.msra.mxu0 0.0
    %2680 = vmatprep.subr.mxu0 0.0
    %2681 = vmatpush1.msra.mxu0 0.0
    %2682 = vmatprep.subr.mxu0 0.0
    %2683 = vmatpush1.msra.mxu0 0.0
    %2684 = vmatprep.subr.mxu0 0.0
    %2685 = vmatpush1.msra.mxu0 0.0
    %2686 = vmatprep.subr.mxu0 0.0
    %2687 = vmatpush1.msra.mxu0 0.0
    %2688 = vmatprep.subr.mxu0 0.0
    %2689 = vmatpush1.msra.mxu0 0.0
    %2690 = vmatprep.subr.mxu0 0.0
    %2691 = vmatpush1.msra.mxu0 0.0
    %2692 = vmatprep.subr.mxu0 0.0
    %2693 = vmatpush1.msra.mxu0 %v2643
    %2694 = vmatprep.subr.mxu0 0.0
    %2695 = vmatpush1.msra.mxu0 %v2642
    %2696 = vmatprep.subr.mxu0 0.0
    %2697 = vmatpush1.msra.mxu0 %v2641
    %2698 = vmatprep.subr.mxu0 0.0
    %2699 = vmatpush1.msra.mxu0 %v2640
    %2700 = vmatprep.subr.mxu0 0.0
    %2701 = vmatpush2.msra.mxu0 0.0
    %2702 = vmatprep.subr.mxu0 0.0
    %2703 = vmatpush2.msra.mxu0 0.0
    %2704 = vmatprep.subr.mxu0 0.0
    %2705 = vmatpush2.msra.mxu0 0.0
    %2706 = vmatprep.subr.mxu0 0.0
    %2707 = vmatpush2.msra.mxu0 0.0
    %2708 = vmatprep.subr.mxu0 0.0
    %2709 = vmatpush2.msra.mxu0 0.0
    %2710 = vmatprep.subr.mxu0 0.0
    %2711 = vmatpush2.msra.mxu0 0.0
    %2712 = vmatprep.subr.mxu0 0.0
    %2713 = vmatpush2.msra.mxu0 0.0
    %2714 = vmatprep.subr.mxu0 0.0
    %2715 = vmatpush2.msra.mxu0 0.0
    %2716 = vmatprep.subr.mxu0 0.0
    %2717 = vmatpush2.msra.mxu0 0.0
    %2718 = vmatprep.subr.mxu0 0.0
    %2719 = vmatpush2.msra.mxu0 0.0
    %2720 = vmatprep.subr.mxu0 0.0
    %2721 = vmatpush2.msra.mxu0 0.0
    %2722 = vmatprep.subr.mxu0 0.0
    %2723 = vmatpush2.msra.mxu0 0.0
    %2724 = vmatprep.subr.mxu0 0.0
    %2725 = vmatpush2.msra.mxu0 0.0
    %2726 = vmatprep.subr.mxu0 0.0
    %2727 = vmatpush2.msra.mxu0 0.0
    %2728 = vmatprep.subr.mxu0 0.0
    %2729 = vmatpush2.msra.mxu0 0.0
    %2730 = vmatprep.subr.mxu0 0.0
    %2731 = vmatpush2.msra.mxu0 0.0
    %2732 = vmatprep.mubr.f32.mxu0 0.0
    %2733 = vmatmul.mubr.f32.gmra.mxu0 %v2651
    %v2734 = vpop.f32.mrf.mxu0
    %v2735 = vadd.f32 0.0, %v2734
    %v2736 = vpop.f32.mrf.mxu0
    %2737 = vmatprep.mubr.f32.mxu0 0.0
    %2738 = vmatmul.mubr.f32.gmra.mxu0 %v2654
    %v2739 = vpop.f32.mrf.mxu0
    %v2740 = vadd.f32 0.0, %v2739
    %v2741 = vpop.f32.mrf.mxu0
    %2742 = vmatprep.mubr.f32.mxu0 0.0
    %2743 = vmatmul.mubr.f32.gmra.mxu0 %v2657
    %v2744 = vpop.f32.mrf.mxu0
    %v2745 = vadd.f32 0.0, %v2744
    %v2746 = vpop.f32.mrf.mxu0
    %2747 = vmatprep.mubr.f32.mxu0 0.0
    %2748 = vmatmul.mubr.f32.gmra.mxu0 %v2660
    %v2749 = vpop.f32.mrf.mxu0
    %v2750 = vadd.f32 0.0, %v2749
    %v2751 = vpop.f32.mrf.mxu0
    %2752 = vmatprep.mubr.f32.mxu0 0.0
    %2753 = vmatmul.mubr.f32.gmra.mxu0 %v2663
    %v2754 = vpop.f32.mrf.mxu0
    %v2755 = vadd.f32 0.0, %v2754
    %v2756 = vpop.f32.mrf.mxu0
    %2757 = vmatprep.mubr.f32.mxu0 0.0
    %2758 = vmatmul.mubr.f32.gmra.mxu0 %v2666
    %v2759 = vpop.f32.mrf.mxu0
    %v2760 = vadd.f32 0.0, %v2759
    %v2761 = vpop.f32.mrf.mxu0
    %2762 = vdwg.mxu0
    %v2763 = vld [vmem:[#allocation2 + $0xb80] sm:$0xff]
    %v2764 = vld [vmem:[#allocation2 + $0xb88] sm:$0xff]
    %v2765 = vld [vmem:[#allocation2 + $0xb90] sm:$0xff]
    %v2766 = vld [vmem:[#allocation2 + $0xb98] sm:$0xff]
    %v2767 = vld [vmem:[#allocation2 + $0xba0] sm:$0xff]
    %v2768 = vld [vmem:[#allocation2 + $0xba8] sm:$0xff]
    %v2769 = vld [vmem:[#allocation2 + $0xbb0] sm:$0xff]
    %v2770 = vld [vmem:[#allocation2 + $0xbb8] sm:$0xff]
    %v2771 = vld [vmem:[#allocation2 + $0xbc0] sm:$0xff]
    %v2772 = vld [vmem:[#allocation2 + $0xbc8] sm:$0xff]
    %v2773 = vld [vmem:[#allocation2 + $0xbd0] sm:$0xff]
    %v2774 = vld [vmem:[#allocation2 + $0xbd8] sm:$0xff]
    %v2775 = vld [vmem:[#allocation2 + $0xbe0] sm:$0xff]
    %v2776 = vld [vmem:[#allocation2 + $0xbe8] sm:$0xff]
    %v2777 = vld [vmem:[#allocation2 + $0xbf0] sm:$0xff]
    %v2778 = vld [vmem:[#allocation2 + $0xbf8] sm:$0xff]
    %v2779 = vld [vmem:[#allocation2 + $0xc00] sm:$0xff]
    %v2780 = vld [vmem:[#allocation2 + $0xc08] sm:$0xff]
    %v2781 = vld [vmem:[#allocation2 + $0xc10] sm:$0xff]
    %v2782 = vld [vmem:[#allocation2 + $0xc18] sm:$0xff]
    %v2783 = vld [vmem:[#allocation2 + $0xc20] sm:$0xff]
    %v2784 = vld [vmem:[#allocation2 + $0xc28] sm:$0xff]
    %v2785 = vld [vmem:[#allocation2 + $0xc30] sm:$0xff]
    %v2786 = vld [vmem:[#allocation2 + $0xc38] sm:$0xff]
    %v2787 = vld [vmem:[#allocation2 + $0xc40] sm:$0xff]
    %v2788 = vld [vmem:[#allocation2 + $0xc48] sm:$0xff]
    %v2789 = vld [vmem:[#allocation2 + $0xc50] sm:$0xff]
    %v2790 = vld [vmem:[#allocation2 + $0xc58] sm:$0xff]
    %v2791 = vld [vmem:[#allocation2 + $0xc60] sm:$0xff]
    %v2792 = vld [vmem:[#allocation2 + $0xc68] sm:$0xff]
    %v2793 = vld [vmem:[#allocation2 + $0xc70] sm:$0xff]
    %v2794 = vld [vmem:[#allocation2 + $0xc78] sm:$0xff]
    %v2795 = vld [vmem:[#allocation2 + $0xc80] sm:$0xff]
    %v2796 = vld [vmem:[#allocation2 + $0xc88] sm:$0xff]
    %v2797 = vld [vmem:[#allocation2 + $0xc90] sm:$0xff]
    %v2798 = vld [vmem:[#allocation2 + $0xc98] sm:$0xff]
    %v2799 = vld [vmem:[#allocation2 + $0xca0] sm:$0xff]
    %v2800 = vld [vmem:[#allocation2 + $0xca8] sm:$0xff]
    %v2801 = vld [vmem:[#allocation2 + $0xcb0] sm:$0xff]
    %v2802 = vld [vmem:[#allocation2 + $0xcb8] sm:$0xff]
    %v2803 = vld [vmem:[#allocation2 + $0xcc0] sm:$0xff]
    %v2804 = vld [vmem:[#allocation2 + $0xcc8] sm:$0xff]
    %v2805 = vld [vmem:[#allocation2 + $0xcd0] sm:$0xff]
    %v2806 = vld [vmem:[#allocation2 + $0xcd8] sm:$0xff]
    %v2807 = vld [vmem:[#allocation2 + $0xce0] sm:$0xff]
    %v2808 = vld [vmem:[#allocation2 + $0xce8] sm:$0xff]
    %v2809 = vld [vmem:[#allocation2 + $0xcf0] sm:$0xff]
    %v2810 = vld [vmem:[#allocation2 + $0xcf8] sm:$0xff]
    %v2811 = vld [vmem:[#allocation4 + $0x8] sm:$0x1]
    %v2812 = vlaneseq
    %v2813 = vshrl.u32 %v2812, 7
    %v2814 = vsub.s32 0, %v2813
    %v2815 = vrot.slane %v2811, %v2814
    %2816 = vmatprep.subr.mxu0 0.0
    %2817 = vmatpush1.msra.mxu0 %v2778
    %2818 = vmatprep.subr.mxu0 0.0
    %2819 = vmatpush1.msra.mxu0 %v2777
    %2820 = vmatprep.subr.mxu0 0.0
    %2821 = vmatpush1.msra.mxu0 %v2776
    %2822 = vmatprep.subr.mxu0 0.0
    %2823 = vmatpush1.msra.mxu0 %v2775
    %2824 = vmatprep.subr.mxu0 0.0
    %2825 = vmatpush1.msra.mxu0 %v2774
    %2826 = vmatprep.subr.mxu0 0.0
    %2827 = vmatpush1.msra.mxu0 %v2773
    %2828 = vmatprep.subr.mxu0 0.0
    %2829 = vmatpush1.msra.mxu0 %v2772
    %2830 = vmatprep.subr.mxu0 0.0
    %2831 = vmatpush1.msra.mxu0 %v2771
    %2832 = vmatprep.subr.mxu0 0.0
    %2833 = vmatpush1.msra.mxu0 %v2770
    %2834 = vmatprep.subr.mxu0 0.0
    %2835 = vmatpush1.msra.mxu0 %v2769
    %2836 = vmatprep.subr.mxu0 0.0
    %2837 = vmatpush1.msra.mxu0 %v2768
    %2838 = vmatprep.subr.mxu0 0.0
    %2839 = vmatpush1.msra.mxu0 %v2767
    %2840 = vmatprep.subr.mxu0 0.0
    %2841 = vmatpush1.msra.mxu0 %v2766
    %2842 = vmatprep.subr.mxu0 0.0
    %2843 = vmatpush1.msra.mxu0 %v2765
    %2844 = vmatprep.subr.mxu0 0.0
    %2845 = vmatpush1.msra.mxu0 %v2764
    %2846 = vmatprep.subr.mxu0 0.0
    %2847 = vmatpush1.msra.mxu0 %v2763
    %2848 = vmatprep.subr.mxu0 0.0
    %2849 = vmatpush2.msra.mxu0 %v2794
    %2850 = vmatprep.subr.mxu0 0.0
    %2851 = vmatpush2.msra.mxu0 %v2793
    %2852 = vmatprep.subr.mxu0 0.0
    %2853 = vmatpush2.msra.mxu0 %v2792
    %2854 = vmatprep.subr.mxu0 0.0
    %2855 = vmatpush2.msra.mxu0 %v2791
    %2856 = vmatprep.subr.mxu0 0.0
    %2857 = vmatpush2.msra.mxu0 %v2790
    %2858 = vmatprep.subr.mxu0 0.0
    %2859 = vmatpush2.msra.mxu0 %v2789
    %2860 = vmatprep.subr.mxu0 0.0
    %2861 = vmatpush2.msra.mxu0 %v2788
    %2862 = vmatprep.subr.mxu0 0.0
    %2863 = vmatpush2.msra.mxu0 %v2787
    %2864 = vmatprep.subr.mxu0 0.0
    %2865 = vmatpush2.msra.mxu0 %v2786
    %2866 = vmatprep.subr.mxu0 0.0
    %2867 = vmatpush2.msra.mxu0 %v2785
    %2868 = vmatprep.subr.mxu0 0.0
    %2869 = vmatpush2.msra.mxu0 %v2784
    %2870 = vmatprep.subr.mxu0 0.0
    %2871 = vmatpush2.msra.mxu0 %v2783
    %2872 = vmatprep.subr.mxu0 0.0
    %2873 = vmatpush2.msra.mxu0 %v2782
    %2874 = vmatprep.subr.mxu0 0.0
    %2875 = vmatpush2.msra.mxu0 %v2781
    %2876 = vmatprep.subr.mxu0 0.0
    %2877 = vmatpush2.msra.mxu0 %v2780
    %2878 = vmatprep.subr.mxu0 0.0
    %2879 = vmatpush2.msra.mxu0 %v2779
    %2880 = vmatprep.mubr.f32.mxu0 %v2745
    %2881 = vmatmul.mubr.f32.gmra.mxu0 %v2735
    %v2882 = vpop.f32.mrf.mxu0
    %v2883 = vadd.f32 %v2815, %v2882
    %v2884 = vpop.f32.mrf.mxu0
    %2885 = vmatprep.mubr.f32.mxu0 %v2750
    %2886 = vmatmul.mubr.f32.gmra.mxu0 %v2740
    %v2887 = vpop.f32.mrf.mxu0
    %v2888 = vadd.f32 %v2815, %v2887
    %v2889 = vpop.f32.mrf.mxu0
    %2890 = vdwg.mxu0
    %2891 = vmatprep.subr.mxu0 0.0
    %2892 = vmatpush1.msra.mxu0 %v2810
    %2893 = vmatprep.subr.mxu0 0.0
    %2894 = vmatpush1.msra.mxu0 %v2809
    %2895 = vmatprep.subr.mxu0 0.0
    %2896 = vmatpush1.msra.mxu0 %v2808
    %2897 = vmatprep.subr.mxu0 0.0
    %2898 = vmatpush1.msra.mxu0 %v2807
    %2899 = vmatprep.subr.mxu0 0.0
    %2900 = vmatpush1.msra.mxu0 %v2806
    %2901 = vmatprep.subr.mxu0 0.0
    %2902 = vmatpush1.msra.mxu0 %v2805
    %2903 = vmatprep.subr.mxu0 0.0
    %2904 = vmatpush1.msra.mxu0 %v2804
    %2905 = vmatprep.subr.mxu0 0.0
    %2906 = vmatpush1.msra.mxu0 %v2803
    %2907 = vmatprep.subr.mxu0 0.0
    %2908 = vmatpush1.msra.mxu0 %v2802
    %2909 = vmatprep.subr.mxu0 0.0
    %2910 = vmatpush1.msra.mxu0 %v2801
    %2911 = vmatprep.subr.mxu0 0.0
    %2912 = vmatpush1.msra.mxu0 %v2800
    %2913 = vmatprep.subr.mxu0 0.0
    %2914 = vmatpush1.msra.mxu0 %v2799
    %2915 = vmatprep.subr.mxu0 0.0
    %2916 = vmatpush1.msra.mxu0 %v2798
    %2917 = vmatprep.subr.mxu0 0.0
    %2918 = vmatpush1.msra.mxu0 %v2797
    %2919 = vmatprep.subr.mxu0 0.0
    %2920 = vmatpush1.msra.mxu0 %v2796
    %2921 = vmatprep.subr.mxu0 0.0
    %2922 = vmatpush1.msra.mxu0 %v2795
    %2923 = vmatprep.subr.mxu0 0.0
    %2924 = vmatpush2.msra.mxu0 0.0
    %2925 = vmatprep.subr.mxu0 0.0
    %2926 = vmatpush2.msra.mxu0 0.0
    %2927 = vmatprep.subr.mxu0 0.0
    %2928 = vmatpush2.msra.mxu0 0.0
    %2929 = vmatprep.subr.mxu0 0.0
    %2930 = vmatpush2.msra.mxu0 0.0
    %2931 = vmatprep.subr.mxu0 0.0
    %2932 = vmatpush2.msra.mxu0 0.0
    %2933 = vmatprep.subr.mxu0 0.0
    %2934 = vmatpush2.msra.mxu0 0.0
    %2935 = vmatprep.subr.mxu0 0.0
    %2936 = vmatpush2.msra.mxu0 0.0
    %2937 = vmatprep.subr.mxu0 0.0
    %2938 = vmatpush2.msra.mxu0 0.0
    %2939 = vmatprep.subr.mxu0 0.0
    %2940 = vmatpush2.msra.mxu0 0.0
    %2941 = vmatprep.subr.mxu0 0.0
    %2942 = vmatpush2.msra.mxu0 0.0
    %2943 = vmatprep.subr.mxu0 0.0
    %2944 = vmatpush2.msra.mxu0 0.0
    %2945 = vmatprep.subr.mxu0 0.0
    %2946 = vmatpush2.msra.mxu0 0.0
    %2947 = vmatprep.subr.mxu0 0.0
    %2948 = vmatpush2.msra.mxu0 0.0
    %2949 = vmatprep.subr.mxu0 0.0
    %2950 = vmatpush2.msra.mxu0 0.0
    %2951 = vmatprep.subr.mxu0 0.0
    %2952 = vmatpush2.msra.mxu0 0.0
    %2953 = vmatprep.subr.mxu0 0.0
    %2954 = vmatpush2.msra.mxu0 0.0
    %2955 = vmatprep.mubr.f32.mxu0 0.0
    %2956 = vmatmul.mubr.f32.gmra.mxu0 %v2755
    %v2957 = vpop.f32.mrf.mxu0
    %v2958 = vadd.f32 %v2883, %v2957
    %v2959 = vpop.f32.mrf.mxu0
    %2960 = vmatprep.mubr.f32.mxu0 0.0
    %2961 = vmatmul.mubr.f32.gmra.mxu0 %v2760
    %v2962 = vpop.f32.mrf.mxu0
    %v2963 = vadd.f32 %v2888, %v2962
    %v2964 = vpop.f32.mrf.mxu0
    %2965 = vdwg.mxu0
    %v2966 = vmax.f32 %v2958, 0.0
    %v2967 = vmax.f32 %v2963, 0.0
    %v2968 = vrot.slane %v2966, 7
    %v2969 = vrot.slane %v2967, 7
    %v2970 = vsel %vm64, %v2968, %v2969
    %v2971 = vsel %vm64, %v2969, %v2968
    %vm2972 = vcmp.lt.s32.totalorder %v63, 0
    %v2973 = vsub.s32 0, %v63
    %v2974 = vsel %vm2972, %v2973, %v63
    %v2975 = vshrl.u32 %v2974, 3
    %v2976 = vand.u32 %v2974, 7
    %v2977 = vsub.s32 0, %v2976
    %v2978 = vsel %vm2972, %v2977, %v2976
    %vm2979 = vcmp.lt.s32.totalorder %v69, 0
    %v2980 = vsub.s32 0, %v69
    %v2981 = vsel %vm2979, %v2980, %v69
    %v2982 = vshrl.u32 %v2981, 3
    %v2983 = vand.u32 %v2981, 7
    %v2984 = vsub.s32 0, %v2983
    %v2985 = vsel %vm2979, %v2984, %v2983
    %vm2986 = vcmp.ne.s32.totalorder %v2978, 0
    %vm2987 = vcmp.ne.s32.totalorder %v2985, 0
    %vm2988 = vcmp.lt.s32.totalorder %v2978, 0
    %vm2989 = vcmp.lt.s32.totalorder %v2985, 0
    %vm2990 = vmand %vm2988, %vm2986
    %vm2991 = vmand %vm2989, %vm2987
    %v2992 = vadd.s32 %v2978, 8
    %v2993 = vadd.s32 %v2985, 8
    %v2994 = vsel %vm2990, %v2992, %v2978
    %v2995 = vsel %vm2991, %v2993, %v2985
    %vm2996 = vcmp.eq.s32.totalorder %v2994, 0
    %vm2997 = vcmp.eq.s32.totalorder %v2995, 0
    %v2998 = vsel %vm2996, 0.0, %v2971
    %v2999 = vsel %vm2997, 0.0, %v2970
    %v3000 = vrot.slane %v2966, 1
    %v3001 = vrot.slane %v2967, 1
    %v3002 = vsel %vm132, %v3000, %v3001
    %v3003 = vsel %vm132, %v3001, %v3000
    %vm3004 = vcmp.eq.s32.totalorder %v2994, 7
    %vm3005 = vcmp.eq.s32.totalorder %v2995, 7
    %v3006 = vsel %vm3004, 0.0, %v3002
    %v3007 = vsel %vm3005, 0.0, %v3003
    %v3008 = vld [vmem:[#allocation2 + $0xd00] sm:$0xff]
    %v3009 = vld [vmem:[#allocation2 + $0xd08] sm:$0xff]
    %v3010 = vld [vmem:[#allocation2 + $0xd10] sm:$0xff]
    %v3011 = vld [vmem:[#allocation2 + $0xd18] sm:$0xff]
    %v3012 = vld [vmem:[#allocation2 + $0xd20] sm:$0xff]
    %v3013 = vld [vmem:[#allocation2 + $0xd28] sm:$0xff]
    %v3014 = vld [vmem:[#allocation2 + $0xd30] sm:$0xff]
    %v3015 = vld [vmem:[#allocation2 + $0xd38] sm:$0xff]
    %v3016 = vld [vmem:[#allocation2 + $0xd40] sm:$0xff]
    %v3017 = vld [vmem:[#allocation2 + $0xd48] sm:$0xff]
    %v3018 = vld [vmem:[#allocation2 + $0xd50] sm:$0xff]
    %v3019 = vld [vmem:[#allocation2 + $0xd58] sm:$0xff]
    %v3020 = vld [vmem:[#allocation2 + $0xd60] sm:$0xff]
    %v3021 = vld [vmem:[#allocation2 + $0xd68] sm:$0xff]
    %v3022 = vld [vmem:[#allocation2 + $0xd70] sm:$0xff]
    %v3023 = vld [vmem:[#allocation2 + $0xd78] sm:$0xff]
    %v3024 = vld [vmem:[#allocation2 + $0xd80] sm:$0xff]
    %v3025 = vld [vmem:[#allocation2 + $0xd88] sm:$0xff]
    %v3026 = vld [vmem:[#allocation2 + $0xd90] sm:$0xff]
    %v3027 = vld [vmem:[#allocation2 + $0xd98] sm:$0xff]
    %v3028 = vld [vmem:[#allocation2 + $0xda0] sm:$0xff]
    %v3029 = vld [vmem:[#allocation2 + $0xda8] sm:$0xff]
    %v3030 = vld [vmem:[#allocation2 + $0xdb0] sm:$0xff]
    %v3031 = vld [vmem:[#allocation2 + $0xdb8] sm:$0xff]
    %v3032 = vld [vmem:[#allocation2 + $0xdc0] sm:$0xff]
    %v3033 = vld [vmem:[#allocation2 + $0xdc8] sm:$0xff]
    %v3034 = vld [vmem:[#allocation2 + $0xdd0] sm:$0xff]
    %v3035 = vld [vmem:[#allocation2 + $0xdd8] sm:$0xff]
    %v3036 = vld [vmem:[#allocation2 + $0xde0] sm:$0xff]
    %v3037 = vld [vmem:[#allocation2 + $0xde8] sm:$0xff]
    %v3038 = vld [vmem:[#allocation2 + $0xdf0] sm:$0xff]
    %v3039 = vld [vmem:[#allocation2 + $0xdf8] sm:$0xff]
    %v3040 = vld [vmem:[#allocation2 + $0xe00] sm:$0xff]
    %v3041 = vld [vmem:[#allocation2 + $0xe08] sm:$0xff]
    %v3042 = vld [vmem:[#allocation2 + $0xe10] sm:$0xff]
    %v3043 = vld [vmem:[#allocation2 + $0xe18] sm:$0xff]
    %v3044 = vld [vmem:[#allocation2 + $0xe20] sm:$0xff]
    %v3045 = vld [vmem:[#allocation2 + $0xe28] sm:$0xff]
    %v3046 = vld [vmem:[#allocation2 + $0xe30] sm:$0xff]
    %v3047 = vld [vmem:[#allocation2 + $0xe38] sm:$0xff]
    %v3048 = vld [vmem:[#allocation2 + $0xe40] sm:$0xff]
    %v3049 = vld [vmem:[#allocation2 + $0xe48] sm:$0xff]
    %v3050 = vld [vmem:[#allocation2 + $0xe50] sm:$0xff]
    %v3051 = vld [vmem:[#allocation2 + $0xe58] sm:$0xff]
    %v3052 = vld [vmem:[#allocation2 + $0xe60] sm:$0xff]
    %v3053 = vld [vmem:[#allocation2 + $0xe68] sm:$0xff]
    %v3054 = vld [vmem:[#allocation2 + $0xe70] sm:$0xff]
    %v3055 = vld [vmem:[#allocation2 + $0xe78] sm:$0xff]
    %v3056 = vld [vmem:[#allocation4 + $0x9] sm:$0x1]
    %v3057 = vlaneseq
    %v3058 = vshrl.u32 %v3057, 7
    %v3059 = vsub.s32 0, %v3058
    %v3060 = vrot.slane %v3056, %v3059
    %3061 = vmatprep.subr.mxu0 0.0
    %3062 = vmatpush1.msra.mxu0 %v3023
    %3063 = vmatprep.subr.mxu0 0.0
    %3064 = vmatpush1.msra.mxu0 %v3022
    %3065 = vmatprep.subr.mxu0 0.0
    %3066 = vmatpush1.msra.mxu0 %v3021
    %3067 = vmatprep.subr.mxu0 0.0
    %3068 = vmatpush1.msra.mxu0 %v3020
    %3069 = vmatprep.subr.mxu0 0.0
    %3070 = vmatpush1.msra.mxu0 %v3019
    %3071 = vmatprep.subr.mxu0 0.0
    %3072 = vmatpush1.msra.mxu0 %v3018
    %3073 = vmatprep.subr.mxu0 0.0
    %3074 = vmatpush1.msra.mxu0 %v3017
    %3075 = vmatprep.subr.mxu0 0.0
    %3076 = vmatpush1.msra.mxu0 %v3016
    %3077 = vmatprep.subr.mxu0 0.0
    %3078 = vmatpush1.msra.mxu0 %v3015
    %3079 = vmatprep.subr.mxu0 0.0
    %3080 = vmatpush1.msra.mxu0 %v3014
    %3081 = vmatprep.subr.mxu0 0.0
    %3082 = vmatpush1.msra.mxu0 %v3013
    %3083 = vmatprep.subr.mxu0 0.0
    %3084 = vmatpush1.msra.mxu0 %v3012
    %3085 = vmatprep.subr.mxu0 0.0
    %3086 = vmatpush1.msra.mxu0 %v3011
    %3087 = vmatprep.subr.mxu0 0.0
    %3088 = vmatpush1.msra.mxu0 %v3010
    %3089 = vmatprep.subr.mxu0 0.0
    %3090 = vmatpush1.msra.mxu0 %v3009
    %3091 = vmatprep.subr.mxu0 0.0
    %3092 = vmatpush1.msra.mxu0 %v3008
    %3093 = vmatprep.subr.mxu0 0.0
    %3094 = vmatpush2.msra.mxu0 %v3039
    %3095 = vmatprep.subr.mxu0 0.0
    %3096 = vmatpush2.msra.mxu0 %v3038
    %3097 = vmatprep.subr.mxu0 0.0
    %3098 = vmatpush2.msra.mxu0 %v3037
    %3099 = vmatprep.subr.mxu0 0.0
    %3100 = vmatpush2.msra.mxu0 %v3036
    %3101 = vmatprep.subr.mxu0 0.0
    %3102 = vmatpush2.msra.mxu0 %v3035
    %3103 = vmatprep.subr.mxu0 0.0
    %3104 = vmatpush2.msra.mxu0 %v3034
    %3105 = vmatprep.subr.mxu0 0.0
    %3106 = vmatpush2.msra.mxu0 %v3033
    %3107 = vmatprep.subr.mxu0 0.0
    %3108 = vmatpush2.msra.mxu0 %v3032
    %3109 = vmatprep.subr.mxu0 0.0
    %3110 = vmatpush2.msra.mxu0 %v3031
    %3111 = vmatprep.subr.mxu0 0.0
    %3112 = vmatpush2.msra.mxu0 %v3030
    %3113 = vmatprep.subr.mxu0 0.0
    %3114 = vmatpush2.msra.mxu0 %v3029
    %3115 = vmatprep.subr.mxu0 0.0
    %3116 = vmatpush2.msra.mxu0 %v3028
    %3117 = vmatprep.subr.mxu0 0.0
    %3118 = vmatpush2.msra.mxu0 %v3027
    %3119 = vmatprep.subr.mxu0 0.0
    %3120 = vmatpush2.msra.mxu0 %v3026
    %3121 = vmatprep.subr.mxu0 0.0
    %3122 = vmatpush2.msra.mxu0 %v3025
    %3123 = vmatprep.subr.mxu0 0.0
    %3124 = vmatpush2.msra.mxu0 %v3024
    %3125 = vmatprep.mubr.f32.mxu0 %v2966
    %3126 = vmatmul.mubr.f32.gmra.mxu0 %v2998
    %v3127 = vpop.f32.mrf.mxu0
    %v3128 = vadd.f32 %v3060, %v3127
    %v3129 = vpop.f32.mrf.mxu0
    %3130 = vmatprep.mubr.f32.mxu0 %v2967
    %3131 = vmatmul.mubr.f32.gmra.mxu0 %v2999
    %v3132 = vpop.f32.mrf.mxu0
    %v3133 = vadd.f32 %v3060, %v3132
    %v3134 = vpop.f32.mrf.mxu0
    %3135 = vdwg.mxu0
    %3136 = vmatprep.subr.mxu0 0.0
    %3137 = vmatpush1.msra.mxu0 %v3055
    %3138 = vmatprep.subr.mxu0 0.0
    %3139 = vmatpush1.msra.mxu0 %v3054
    %3140 = vmatprep.subr.mxu0 0.0
    %3141 = vmatpush1.msra.mxu0 %v3053
    %3142 = vmatprep.subr.mxu0 0.0
    %3143 = vmatpush1.msra.mxu0 %v3052
    %3144 = vmatprep.subr.mxu0 0.0
    %3145 = vmatpush1.msra.mxu0 %v3051
    %3146 = vmatprep.subr.mxu0 0.0
    %3147 = vmatpush1.msra.mxu0 %v3050
    %3148 = vmatprep.subr.mxu0 0.0
    %3149 = vmatpush1.msra.mxu0 %v3049
    %3150 = vmatprep.subr.mxu0 0.0
    %3151 = vmatpush1.msra.mxu0 %v3048
    %3152 = vmatprep.subr.mxu0 0.0
    %3153 = vmatpush1.msra.mxu0 %v3047
    %3154 = vmatprep.subr.mxu0 0.0
    %3155 = vmatpush1.msra.mxu0 %v3046
    %3156 = vmatprep.subr.mxu0 0.0
    %3157 = vmatpush1.msra.mxu0 %v3045
    %3158 = vmatprep.subr.mxu0 0.0
    %3159 = vmatpush1.msra.mxu0 %v3044
    %3160 = vmatprep.subr.mxu0 0.0
    %3161 = vmatpush1.msra.mxu0 %v3043
    %3162 = vmatprep.subr.mxu0 0.0
    %3163 = vmatpush1.msra.mxu0 %v3042
    %3164 = vmatprep.subr.mxu0 0.0
    %3165 = vmatpush1.msra.mxu0 %v3041
    %3166 = vmatprep.subr.mxu0 0.0
    %3167 = vmatpush1.msra.mxu0 %v3040
    %3168 = vmatprep.subr.mxu0 0.0
    %3169 = vmatpush2.msra.mxu0 0.0
    %3170 = vmatprep.subr.mxu0 0.0
    %3171 = vmatpush2.msra.mxu0 0.0
    %3172 = vmatprep.subr.mxu0 0.0
    %3173 = vmatpush2.msra.mxu0 0.0
    %3174 = vmatprep.subr.mxu0 0.0
    %3175 = vmatpush2.msra.mxu0 0.0
    %3176 = vmatprep.subr.mxu0 0.0
    %3177 = vmatpush2.msra.mxu0 0.0
    %3178 = vmatprep.subr.mxu0 0.0
    %3179 = vmatpush2.msra.mxu0 0.0
    %3180 = vmatprep.subr.mxu0 0.0
    %3181 = vmatpush2.msra.mxu0 0.0
    %3182 = vmatprep.subr.mxu0 0.0
    %3183 = vmatpush2.msra.mxu0 0.0
    %3184 = vmatprep.subr.mxu0 0.0
    %3185 = vmatpush2.msra.mxu0 0.0
    %3186 = vmatprep.subr.mxu0 0.0
    %3187 = vmatpush2.msra.mxu0 0.0
    %3188 = vmatprep.subr.mxu0 0.0
    %3189 = vmatpush2.msra.mxu0 0.0
    %3190 = vmatprep.subr.mxu0 0.0
    %3191 = vmatpush2.msra.mxu0 0.0
    %3192 = vmatprep.subr.mxu0 0.0
    %3193 = vmatpush2.msra.mxu0 0.0
    %3194 = vmatprep.subr.mxu0 0.0
    %3195 = vmatpush2.msra.mxu0 0.0
    %3196 = vmatprep.subr.mxu0 0.0
    %3197 = vmatpush2.msra.mxu0 0.0
    %3198 = vmatprep.subr.mxu0 0.0
    %3199 = vmatpush2.msra.mxu0 0.0
    %3200 = vmatprep.mubr.f32.mxu0 0.0
    %3201 = vmatmul.mubr.f32.gmra.mxu0 %v3006
    %v3202 = vpop.f32.mrf.mxu0
    %v3203 = vadd.f32 %v3128, %v3202
    %v3204 = vpop.f32.mrf.mxu0
    %3205 = vmatprep.mubr.f32.mxu0 0.0
    %3206 = vmatmul.mubr.f32.gmra.mxu0 %v3007
    %v3207 = vpop.f32.mrf.mxu0
    %v3208 = vadd.f32 %v3133, %v3207
    %v3209 = vpop.f32.mrf.mxu0
    %3210 = vdwg.mxu0
    %v3211 = vmax.f32 %v3203, 0.0
    %v3212 = vmax.f32 %v3208, 0.0
    %v3213 = vrot.slane %v3211, 7
    %v3214 = vrot.slane %v3212, 7
    %v3215 = vsel %vm64, %v3213, %v3214
    %v3216 = vsel %vm64, %v3214, %v3213
    %v3217 = vsel %vm2996, 0.0, %v3216
    %v3218 = vsel %vm2997, 0.0, %v3215
    %v3219 = vrot.slane %v3211, 1
    %v3220 = vrot.slane %v3212, 1
    %v3221 = vsel %vm132, %v3219, %v3220
    %v3222 = vsel %vm132, %v3220, %v3219
    %v3223 = vsel %vm3004, 0.0, %v3221
    %v3224 = vsel %vm3005, 0.0, %v3222
    %v3225 = vld [vmem:[#allocation2 + $0xe80] sm:$0xff]
    %v3226 = vld [vmem:[#allocation2 + $0xe88] sm:$0xff]
    %v3227 = vld [vmem:[#allocation2 + $0xe90] sm:$0xff]
    %v3228 = vld [vmem:[#allocation2 + $0xe98] sm:$0xff]
    %v3229 = vld [vmem:[#allocation2 + $0xea0] sm:$0xff]
    %v3230 = vld [vmem:[#allocation2 + $0xea8] sm:$0xff]
    %v3231 = vld [vmem:[#allocation2 + $0xeb0] sm:$0xff]
    %v3232 = vld [vmem:[#allocation2 + $0xeb8] sm:$0xff]
    %v3233 = vld [vmem:[#allocation2 + $0xec0] sm:$0xff]
    %v3234 = vld [vmem:[#allocation2 + $0xec8] sm:$0xff]
    %v3235 = vld [vmem:[#allocation2 + $0xed0] sm:$0xff]
    %v3236 = vld [vmem:[#allocation2 + $0xed8] sm:$0xff]
    %v3237 = vld [vmem:[#allocation2 + $0xee0] sm:$0xff]
    %v3238 = vld [vmem:[#allocation2 + $0xee8] sm:$0xff]
    %v3239 = vld [vmem:[#allocation2 + $0xef0] sm:$0xff]
    %v3240 = vld [vmem:[#allocation2 + $0xef8] sm:$0xff]
    %v3241 = vld [vmem:[#allocation2 + $0xf00] sm:$0xff]
    %v3242 = vld [vmem:[#allocation2 + $0xf08] sm:$0xff]
    %v3243 = vld [vmem:[#allocation2 + $0xf10] sm:$0xff]
    %v3244 = vld [vmem:[#allocation2 + $0xf18] sm:$0xff]
    %v3245 = vld [vmem:[#allocation2 + $0xf20] sm:$0xff]
    %v3246 = vld [vmem:[#allocation2 + $0xf28] sm:$0xff]
    %v3247 = vld [vmem:[#allocation2 + $0xf30] sm:$0xff]
    %v3248 = vld [vmem:[#allocation2 + $0xf38] sm:$0xff]
    %v3249 = vld [vmem:[#allocation2 + $0xf40] sm:$0xff]
    %v3250 = vld [vmem:[#allocation2 + $0xf48] sm:$0xff]
    %v3251 = vld [vmem:[#allocation2 + $0xf50] sm:$0xff]
    %v3252 = vld [vmem:[#allocation2 + $0xf58] sm:$0xff]
    %v3253 = vld [vmem:[#allocation2 + $0xf60] sm:$0xff]
    %v3254 = vld [vmem:[#allocation2 + $0xf68] sm:$0xff]
    %v3255 = vld [vmem:[#allocation2 + $0xf70] sm:$0xff]
    %v3256 = vld [vmem:[#allocation2 + $0xf78] sm:$0xff]
    %v3257 = vld [vmem:[#allocation2 + $0xf80] sm:$0xff]
    %v3258 = vld [vmem:[#allocation2 + $0xf88] sm:$0xff]
    %v3259 = vld [vmem:[#allocation2 + $0xf90] sm:$0xff]
    %v3260 = vld [vmem:[#allocation2 + $0xf98] sm:$0xff]
    %v3261 = vld [vmem:[#allocation2 + $0xfa0] sm:$0xff]
    %v3262 = vld [vmem:[#allocation2 + $0xfa8] sm:$0xff]
    %v3263 = vld [vmem:[#allocation2 + $0xfb0] sm:$0xff]
    %v3264 = vld [vmem:[#allocation2 + $0xfb8] sm:$0xff]
    %v3265 = vld [vmem:[#allocation2 + $0xfc0] sm:$0xff]
    %v3266 = vld [vmem:[#allocation2 + $0xfc8] sm:$0xff]
    %v3267 = vld [vmem:[#allocation2 + $0xfd0] sm:$0xff]
    %v3268 = vld [vmem:[#allocation2 + $0xfd8] sm:$0xff]
    %v3269 = vld [vmem:[#allocation2 + $0xfe0] sm:$0xff]
    %v3270 = vld [vmem:[#allocation2 + $0xfe8] sm:$0xff]
    %v3271 = vld [vmem:[#allocation2 + $0xff0] sm:$0xff]
    %v3272 = vld [vmem:[#allocation2 + $0xff8] sm:$0xff]
    %v3273 = vld [vmem:[#allocation4 + $0xa] sm:$0x1]
    %v3274 = vlaneseq
    %v3275 = vshrl.u32 %v3274, 7
    %v3276 = vsub.s32 0, %v3275
    %v3277 = vrot.slane %v3273, %v3276
    %3278 = vmatprep.subr.mxu0 0.0
    %3279 = vmatpush1.msra.mxu0 %v3240
    %3280 = vmatprep.subr.mxu0 0.0
    %3281 = vmatpush1.msra.mxu0 %v3239
    %3282 = vmatprep.subr.mxu0 0.0
    %3283 = vmatpush1.msra.mxu0 %v3238
    %3284 = vmatprep.subr.mxu0 0.0
    %3285 = vmatpush1.msra.mxu0 %v3237
    %3286 = vmatprep.subr.mxu0 0.0
    %3287 = vmatpush1.msra.mxu0 %v3236
    %3288 = vmatprep.subr.mxu0 0.0
    %3289 = vmatpush1.msra.mxu0 %v3235
    %3290 = vmatprep.subr.mxu0 0.0
    %3291 = vmatpush1.msra.mxu0 %v3234
    %3292 = vmatprep.subr.mxu0 0.0
    %3293 = vmatpush1.msra.mxu0 %v3233
    %3294 = vmatprep.subr.mxu0 0.0
    %3295 = vmatpush1.msra.mxu0 %v3232
    %3296 = vmatprep.subr.mxu0 0.0
    %3297 = vmatpush1.msra.mxu0 %v3231
    %3298 = vmatprep.subr.mxu0 0.0
    %3299 = vmatpush1.msra.mxu0 %v3230
    %3300 = vmatprep.subr.mxu0 0.0
    %3301 = vmatpush1.msra.mxu0 %v3229
    %3302 = vmatprep.subr.mxu0 0.0
    %3303 = vmatpush1.msra.mxu0 %v3228
    %3304 = vmatprep.subr.mxu0 0.0
    %3305 = vmatpush1.msra.mxu0 %v3227
    %3306 = vmatprep.subr.mxu0 0.0
    %3307 = vmatpush1.msra.mxu0 %v3226
    %3308 = vmatprep.subr.mxu0 0.0
    %3309 = vmatpush1.msra.mxu0 %v3225
    %3310 = vmatprep.subr.mxu0 0.0
    %3311 = vmatpush2.msra.mxu0 %v3256
    %3312 = vmatprep.subr.mxu0 0.0
    %3313 = vmatpush2.msra.mxu0 %v3255
    %3314 = vmatprep.subr.mxu0 0.0
    %3315 = vmatpush2.msra.mxu0 %v3254
    %3316 = vmatprep.subr.mxu0 0.0
    %3317 = vmatpush2.msra.mxu0 %v3253
    %3318 = vmatprep.subr.mxu0 0.0
    %3319 = vmatpush2.msra.mxu0 %v3252
    %3320 = vmatprep.subr.mxu0 0.0
    %3321 = vmatpush2.msra.mxu0 %v3251
    %3322 = vmatprep.subr.mxu0 0.0
    %3323 = vmatpush2.msra.mxu0 %v3250
    %3324 = vmatprep.subr.mxu0 0.0
    %3325 = vmatpush2.msra.mxu0 %v3249
    %3326 = vmatprep.subr.mxu0 0.0
    %3327 = vmatpush2.msra.mxu0 %v3248
    %3328 = vmatprep.subr.mxu0 0.0
    %3329 = vmatpush2.msra.mxu0 %v3247
    %3330 = vmatprep.subr.mxu0 0.0
    %3331 = vmatpush2.msra.mxu0 %v3246
    %3332 = vmatprep.subr.mxu0 0.0
    %3333 = vmatpush2.msra.mxu0 %v3245
    %3334 = vmatprep.subr.mxu0 0.0
    %3335 = vmatpush2.msra.mxu0 %v3244
    %3336 = vmatprep.subr.mxu0 0.0
    %3337 = vmatpush2.msra.mxu0 %v3243
    %3338 = vmatprep.subr.mxu0 0.0
    %3339 = vmatpush2.msra.mxu0 %v3242
    %3340 = vmatprep.subr.mxu0 0.0
    %3341 = vmatpush2.msra.mxu0 %v3241
    %3342 = vmatprep.mubr.f32.mxu0 %v3211
    %3343 = vmatmul.mubr.f32.gmra.mxu0 %v3217
    %v3344 = vpop.f32.mrf.mxu0
    %v3345 = vadd.f32 %v3277, %v3344
    %v3346 = vpop.f32.mrf.mxu0
    %3347 = vmatprep.mubr.f32.mxu0 %v3212
    %3348 = vmatmul.mubr.f32.gmra.mxu0 %v3218
    %v3349 = vpop.f32.mrf.mxu0
    %v3350 = vadd.f32 %v3277, %v3349
    %v3351 = vpop.f32.mrf.mxu0
    %3352 = vdwg.mxu0
    %3353 = vmatprep.subr.mxu0 0.0
    %3354 = vmatpush1.msra.mxu0 %v3272
    %3355 = vmatprep.subr.mxu0 0.0
    %3356 = vmatpush1.msra.mxu0 %v3271
    %3357 = vmatprep.subr.mxu0 0.0
    %3358 = vmatpush1.msra.mxu0 %v3270
    %3359 = vmatprep.subr.mxu0 0.0
    %3360 = vmatpush1.msra.mxu0 %v3269
    %3361 = vmatprep.subr.mxu0 0.0
    %3362 = vmatpush1.msra.mxu0 %v3268
    %3363 = vmatprep.subr.mxu0 0.0
    %3364 = vmatpush1.msra.mxu0 %v3267
    %3365 = vmatprep.subr.mxu0 0.0
    %3366 = vmatpush1.msra.mxu0 %v3266
    %3367 = vmatprep.subr.mxu0 0.0
    %3368 = vmatpush1.msra.mxu0 %v3265
    %3369 = vmatprep.subr.mxu0 0.0
    %3370 = vmatpush1.msra.mxu0 %v3264
    %3371 = vmatprep.subr.mxu0 0.0
    %3372 = vmatpush1.msra.mxu0 %v3263
    %3373 = vmatprep.subr.mxu0 0.0
    %3374 = vmatpush1.msra.mxu0 %v3262
    %3375 = vmatprep.subr.mxu0 0.0
    %3376 = vmatpush1.msra.mxu0 %v3261
    %3377 = vmatprep.subr.mxu0 0.0
    %3378 = vmatpush1.msra.mxu0 %v3260
    %3379 = vmatprep.subr.mxu0 0.0
    %3380 = vmatpush1.msra.mxu0 %v3259
    %3381 = vmatprep.subr.mxu0 0.0
    %3382 = vmatpush1.msra.mxu0 %v3258
    %3383 = vmatprep.subr.mxu0 0.0
    %3384 = vmatpush1.msra.mxu0 %v3257
    %3385 = vmatprep.subr.mxu0 0.0
    %3386 = vmatpush2.msra.mxu0 0.0
    %3387 = vmatprep.subr.mxu0 0.0
    %3388 = vmatpush2.msra.mxu0 0.0
    %3389 = vmatprep.subr.mxu0 0.0
    %3390 = vmatpush2.msra.mxu0 0.0
    %3391 = vmatprep.subr.mxu0 0.0
    %3392 = vmatpush2.msra.mxu0 0.0
    %3393 = vmatprep.subr.mxu0 0.0
    %3394 = vmatpush2.msra.mxu0 0.0
    %3395 = vmatprep.subr.mxu0 0.0
    %3396 = vmatpush2.msra.mxu0 0.0
    %3397 = vmatprep.subr.mxu0 0.0
    %3398 = vmatpush2.msra.mxu0 0.0
    %3399 = vmatprep.subr.mxu0 0.0
    %3400 = vmatpush2.msra.mxu0 0.0
    %3401 = vmatprep.subr.mxu0 0.0
    %3402 = vmatpush2.msra.mxu0 0.0
    %3403 = vmatprep.subr.mxu0 0.0
    %3404 = vmatpush2.msra.mxu0 0.0
    %3405 = vmatprep.subr.mxu0 0.0
    %3406 = vmatpush2.msra.mxu0 0.0
    %3407 = vmatprep.subr.mxu0 0.0
    %3408 = vmatpush2.msra.mxu0 0.0
    %3409 = vmatprep.subr.mxu0 0.0
    %3410 = vmatpush2.msra.mxu0 0.0
    %3411 = vmatprep.subr.mxu0 0.0
    %3412 = vmatpush2.msra.mxu0 0.0
    %3413 = vmatprep.subr.mxu0 0.0
    %3414 = vmatpush2.msra.mxu0 0.0
    %3415 = vmatprep.subr.mxu0 0.0
    %3416 = vmatpush2.msra.mxu0 0.0
    %3417 = vmatprep.mubr.f32.mxu0 0.0
    %3418 = vmatmul.mubr.f32.gmra.mxu0 %v3223
    %v3419 = vpop.f32.mrf.mxu0
    %v3420 = vadd.f32 %v3345, %v3419
    %v3421 = vpop.f32.mrf.mxu0
    %3422 = vmatprep.mubr.f32.mxu0 0.0
    %3423 = vmatmul.mubr.f32.gmra.mxu0 %v3224
    %v3424 = vpop.f32.mrf.mxu0
    %v3425 = vadd.f32 %v3350, %v3424
    %v3426 = vpop.f32.mrf.mxu0
    %3427 = vdwg.mxu0
    %v3428 = vmax.f32 %v3420, 0.0
    %v3429 = vmax.f32 %v3425, 0.0
    %v3430 = vld [vmem:[%s6] sm:$0xff]
    %v3431 = vld [vmem:[%s6 + $0x8] sm:$0xff]
    %v3432 = vld [vmem:[%s6 + $0x10] sm:$0xff]
    %v3433 = vld [vmem:[%s6 + $0x18] sm:$0xff]
    %v3434 = vld [vmem:[%s6 + $0x20] sm:$0xff]
    %v3435 = vld [vmem:[%s6 + $0x28] sm:$0xff]
    %v3436 = vld [vmem:[%s6 + $0x30] sm:$0xff]
    %v3437 = vld [vmem:[%s6 + $0x38] sm:$0xff]
    %vm3438 = vcmask 130048
    %v3440 = vsel %vm3438, %v3430, 0
    %v3443 = vsel %vm3438, %v3431, 0
    %v3446 = vsel %vm3438, %v3432, 0
    %v3449 = vsel %vm3438, %v3433, 0
    %v3452 = vsel %vm3438, %v3434, 0
    %v3455 = vsel %vm3438, %v3435, 0
    %v3458 = vsel %vm3438, %v3436, 0
    %v3461 = vsel %vm3438, %v3437, 0
    %3463 = vmatprep.subr.mxu0 0.0
    %3464 = vmatpush1.msra.mxu0 0.0
    %3465 = vmatprep.subr.mxu0 0.0
    %3466 = vmatpush1.msra.mxu0 0.0
    %3467 = vmatprep.subr.mxu0 0.0
    %3468 = vmatpush1.msra.mxu0 0.0
    %3469 = vmatprep.subr.mxu0 0.0
    %3470 = vmatpush1.msra.mxu0 0.0
    %3471 = vmatprep.subr.mxu0 0.0
    %3472 = vmatpush1.msra.mxu0 0.0
    %3473 = vmatprep.subr.mxu0 0.0
    %3474 = vmatpush1.msra.mxu0 0.0
    %3475 = vmatprep.subr.mxu0 0.0
    %3476 = vmatpush1.msra.mxu0 0.0
    %3477 = vmatprep.subr.mxu0 0.0
    %3478 = vmatpush1.msra.mxu0 0.0
    %3479 = vmatprep.subr.mxu0 0.0
    %3480 = vmatpush1.msra.mxu0 0.0
    %3481 = vmatprep.subr.mxu0 0.0
    %3482 = vmatpush1.msra.mxu0 0.0
    %3483 = vmatprep.subr.mxu0 0.0
    %3484 = vmatpush1.msra.mxu0 0.0
    %3485 = vmatprep.subr.mxu0 0.0
    %3486 = vmatpush1.msra.mxu0 0.0
    %3487 = vmatprep.subr.mxu0 0.0
    %3488 = vmatpush1.msra.mxu0 0.0
    %3489 = vmatprep.subr.mxu0 0.0
    %3490 = vmatpush1.msra.mxu0 0.0
    %3491 = vmatprep.subr.mxu0 0.0
    %3492 = vmatpush1.msra.mxu0 %v3429
    %3493 = vmatprep.subr.mxu0 0.0
    %3494 = vmatpush1.msra.mxu0 %v3428
    %3495 = vmatprep.subr.mxu0 0.0
    %3496 = vmatpush2.msra.mxu0 0.0
    %3497 = vmatprep.subr.mxu0 0.0
    %3498 = vmatpush2.msra.mxu0 0.0
    %3499 = vmatprep.subr.mxu0 0.0
    %3500 = vmatpush2.msra.mxu0 0.0
    %3501 = vmatprep.subr.mxu0 0.0
    %3502 = vmatpush2.msra.mxu0 0.0
    %3503 = vmatprep.subr.mxu0 0.0
    %3504 = vmatpush2.msra.mxu0 0.0
    %3505 = vmatprep.subr.mxu0 0.0
    %3506 = vmatpush2.msra.mxu0 0.0
    %3507 = vmatprep.subr.mxu0 0.0
    %3508 = vmatpush2.msra.mxu0 0.0
    %3509 = vmatprep.subr.mxu0 0.0
    %3510 = vmatpush2.msra.mxu0 0.0
    %3511 = vmatprep.subr.mxu0 0.0
    %3512 = vmatpush2.msra.mxu0 0.0
    %3513 = vmatprep.subr.mxu0 0.0
    %3514 = vmatpush2.msra.mxu0 0.0
    %3515 = vmatprep.subr.mxu0 0.0
    %3516 = vmatpush2.msra.mxu0 0.0
    %3517 = vmatprep.subr.mxu0 0.0
    %3518 = vmatpush2.msra.mxu0 0.0
    %3519 = vmatprep.subr.mxu0 0.0
    %3520 = vmatpush2.msra.mxu0 0.0
    %3521 = vmatprep.subr.mxu0 0.0
    %3522 = vmatpush2.msra.mxu0 0.0
    %3523 = vmatprep.subr.mxu0 0.0
    %3524 = vmatpush2.msra.mxu0 0.0
    %3525 = vmatprep.subr.mxu0 0.0
    %3526 = vmatpush2.msra.mxu0 0.0
    %3527 = vmatprep.mubr.f32.mxu0 0.0
    %3528 = vmatmul.mubr.f32.gmra.mxu0 %v3440
    %v3529 = vpop.f32.mrf.mxu0
    %v3530 = vadd.f32 0.0, %v3529
    %v3531 = vpop.f32.mrf.mxu0
    %3532 = vmatprep.mubr.f32.mxu0 0.0
    %3533 = vmatmul.mubr.f32.gmra.mxu0 %v3443
    %v3534 = vpop.f32.mrf.mxu0
    %v3535 = vadd.f32 0.0, %v3534
    %v3536 = vpop.f32.mrf.mxu0
    %3537 = vmatprep.mubr.f32.mxu0 0.0
    %3538 = vmatmul.mubr.f32.gmra.mxu0 %v3446
    %v3539 = vpop.f32.mrf.mxu0
    %v3540 = vadd.f32 0.0, %v3539
    %v3541 = vpop.f32.mrf.mxu0
    %3542 = vmatprep.mubr.f32.mxu0 0.0
    %3543 = vmatmul.mubr.f32.gmra.mxu0 %v3449
    %v3544 = vpop.f32.mrf.mxu0
    %v3545 = vadd.f32 0.0, %v3544
    %v3546 = vpop.f32.mrf.mxu0
    %3547 = vmatprep.mubr.f32.mxu0 0.0
    %3548 = vmatmul.mubr.f32.gmra.mxu0 %v3452
    %v3549 = vpop.f32.mrf.mxu0
    %v3550 = vadd.f32 0.0, %v3549
    %v3551 = vpop.f32.mrf.mxu0
    %3552 = vmatprep.mubr.f32.mxu0 0.0
    %3553 = vmatmul.mubr.f32.gmra.mxu0 %v3455
    %v3554 = vpop.f32.mrf.mxu0
    %v3555 = vadd.f32 0.0, %v3554
    %v3556 = vpop.f32.mrf.mxu0
    %3557 = vmatprep.mubr.f32.mxu0 0.0
    %3558 = vmatmul.mubr.f32.gmra.mxu0 %v3458
    %v3559 = vpop.f32.mrf.mxu0
    %v3560 = vadd.f32 0.0, %v3559
    %v3561 = vpop.f32.mrf.mxu0
    %3562 = vmatprep.mubr.f32.mxu0 0.0
    %3563 = vmatmul.mubr.f32.gmra.mxu0 %v3461
    %v3564 = vpop.f32.mrf.mxu0
    %v3565 = vadd.f32 0.0, %v3564
    %v3566 = vpop.f32.mrf.mxu0
    %3567 = vdwg.mxu0
    %v3568 = vld [vmem:[#allocation2 + $0x1000] sm:$0xff]
    %v3569 = vld [vmem:[#allocation2 + $0x1008] sm:$0xff]
    %v3570 = vld [vmem:[#allocation2 + $0x1010] sm:$0xff]
    %v3571 = vld [vmem:[#allocation2 + $0x1018] sm:$0xff]
    %v3572 = vld [vmem:[#allocation2 + $0x1020] sm:$0xff]
    %v3573 = vld [vmem:[#allocation2 + $0x1028] sm:$0xff]
    %v3574 = vld [vmem:[#allocation2 + $0x1030] sm:$0xff]
    %v3575 = vld [vmem:[#allocation2 + $0x1038] sm:$0xff]
    %v3576 = vld [vmem:[#allocation2 + $0x1040] sm:$0xff]
    %v3577 = vld [vmem:[#allocation2 + $0x1048] sm:$0xff]
    %v3578 = vld [vmem:[#allocation2 + $0x1050] sm:$0xff]
    %v3579 = vld [vmem:[#allocation2 + $0x1058] sm:$0xff]
    %v3580 = vld [vmem:[#allocation2 + $0x1060] sm:$0xff]
    %v3581 = vld [vmem:[#allocation2 + $0x1068] sm:$0xff]
    %v3582 = vld [vmem:[#allocation2 + $0x1070] sm:$0xff]
    %v3583 = vld [vmem:[#allocation2 + $0x1078] sm:$0xff]
    %v3584 = vld [vmem:[#allocation2 + $0x1080] sm:$0xff]
    %v3585 = vld [vmem:[#allocation2 + $0x1088] sm:$0xff]
    %v3586 = vld [vmem:[#allocation2 + $0x1090] sm:$0xff]
    %v3587 = vld [vmem:[#allocation2 + $0x1098] sm:$0xff]
    %v3588 = vld [vmem:[#allocation2 + $0x10a0] sm:$0xff]
    %v3589 = vld [vmem:[#allocation2 + $0x10a8] sm:$0xff]
    %v3590 = vld [vmem:[#allocation2 + $0x10b0] sm:$0xff]
    %v3591 = vld [vmem:[#allocation2 + $0x10b8] sm:$0xff]
    %v3592 = vld [vmem:[#allocation2 + $0x10c0] sm:$0xff]
    %v3593 = vld [vmem:[#allocation2 + $0x10c8] sm:$0xff]
    %v3594 = vld [vmem:[#allocation2 + $0x10d0] sm:$0xff]
    %v3595 = vld [vmem:[#allocation2 + $0x10d8] sm:$0xff]
    %v3596 = vld [vmem:[#allocation2 + $0x10e0] sm:$0xff]
    %v3597 = vld [vmem:[#allocation2 + $0x10e8] sm:$0xff]
    %v3598 = vld [vmem:[#allocation2 + $0x10f0] sm:$0xff]
    %v3599 = vld [vmem:[#allocation2 + $0x10f8] sm:$0xff]
    %v3600 = vld [vmem:[#allocation4 + $0xb] sm:$0x1]
    %v3601 = vlaneseq
    %v3602 = vshrl.u32 %v3601, 7
    %v3603 = vsub.s32 0, %v3602
    %v3604 = vrot.slane %v3600, %v3603
    %3605 = vmatprep.subr.mxu0 0.0
    %3606 = vmatpush1.msra.mxu0 %v3583
    %3607 = vmatprep.subr.mxu0 0.0
    %3608 = vmatpush1.msra.mxu0 %v3582
    %3609 = vmatprep.subr.mxu0 0.0
    %3610 = vmatpush1.msra.mxu0 %v3581
    %3611 = vmatprep.subr.mxu0 0.0
    %3612 = vmatpush1.msra.mxu0 %v3580
    %3613 = vmatprep.subr.mxu0 0.0
    %3614 = vmatpush1.msra.mxu0 %v3579
    %3615 = vmatprep.subr.mxu0 0.0
    %3616 = vmatpush1.msra.mxu0 %v3578
    %3617 = vmatprep.subr.mxu0 0.0
    %3618 = vmatpush1.msra.mxu0 %v3577
    %3619 = vmatprep.subr.mxu0 0.0
    %3620 = vmatpush1.msra.mxu0 %v3576
    %3621 = vmatprep.subr.mxu0 0.0
    %3622 = vmatpush1.msra.mxu0 %v3575
    %3623 = vmatprep.subr.mxu0 0.0
    %3624 = vmatpush1.msra.mxu0 %v3574
    %3625 = vmatprep.subr.mxu0 0.0
    %3626 = vmatpush1.msra.mxu0 %v3573
    %3627 = vmatprep.subr.mxu0 0.0
    %3628 = vmatpush1.msra.mxu0 %v3572
    %3629 = vmatprep.subr.mxu0 0.0
    %3630 = vmatpush1.msra.mxu0 %v3571
    %3631 = vmatprep.subr.mxu0 0.0
    %3632 = vmatpush1.msra.mxu0 %v3570
    %3633 = vmatprep.subr.mxu0 0.0
    %3634 = vmatpush1.msra.mxu0 %v3569
    %3635 = vmatprep.subr.mxu0 0.0
    %3636 = vmatpush1.msra.mxu0 %v3568
    %3637 = vmatprep.subr.mxu0 0.0
    %3638 = vmatpush2.msra.mxu0 %v3599
    %3639 = vmatprep.subr.mxu0 0.0
    %3640 = vmatpush2.msra.mxu0 %v3598
    %3641 = vmatprep.subr.mxu0 0.0
    %3642 = vmatpush2.msra.mxu0 %v3597
    %3643 = vmatprep.subr.mxu0 0.0
    %3644 = vmatpush2.msra.mxu0 %v3596
    %3645 = vmatprep.subr.mxu0 0.0
    %3646 = vmatpush2.msra.mxu0 %v3595
    %3647 = vmatprep.subr.mxu0 0.0
    %3648 = vmatpush2.msra.mxu0 %v3594
    %3649 = vmatprep.subr.mxu0 0.0
    %3650 = vmatpush2.msra.mxu0 %v3593
    %3651 = vmatprep.subr.mxu0 0.0
    %3652 = vmatpush2.msra.mxu0 %v3592
    %3653 = vmatprep.subr.mxu0 0.0
    %3654 = vmatpush2.msra.mxu0 %v3591
    %3655 = vmatprep.subr.mxu0 0.0
    %3656 = vmatpush2.msra.mxu0 %v3590
    %3657 = vmatprep.subr.mxu0 0.0
    %3658 = vmatpush2.msra.mxu0 %v3589
    %3659 = vmatprep.subr.mxu0 0.0
    %3660 = vmatpush2.msra.mxu0 %v3588
    %3661 = vmatprep.subr.mxu0 0.0
    %3662 = vmatpush2.msra.mxu0 %v3587
    %3663 = vmatprep.subr.mxu0 0.0
    %3664 = vmatpush2.msra.mxu0 %v3586
    %3665 = vmatprep.subr.mxu0 0.0
    %3666 = vmatpush2.msra.mxu0 %v3585
    %3667 = vmatprep.subr.mxu0 0.0
    %3668 = vmatpush2.msra.mxu0 %v3584
    %3669 = vmatprep.mubr.f32.mxu0 %v3550
    %3670 = vmatmul.mubr.f32.gmra.mxu0 %v3530
    %v3671 = vpop.f32.mrf.mxu0
    %v3672 = vadd.f32 %v3604, %v3671
    %v3673 = vpop.f32.mrf.mxu0
    %3674 = vmatprep.mubr.f32.mxu0 %v3555
    %3675 = vmatmul.mubr.f32.gmra.mxu0 %v3535
    %v3676 = vpop.f32.mrf.mxu0
    %v3677 = vadd.f32 %v3604, %v3676
    %v3678 = vpop.f32.mrf.mxu0
    %3679 = vmatprep.mubr.f32.mxu0 %v3560
    %3680 = vmatmul.mubr.f32.gmra.mxu0 %v3540
    %v3681 = vpop.f32.mrf.mxu0
    %v3682 = vadd.f32 %v3604, %v3681
    %v3683 = vpop.f32.mrf.mxu0
    %3684 = vmatprep.mubr.f32.mxu0 %v3565
    %3685 = vmatmul.mubr.f32.gmra.mxu0 %v3545
    %v3686 = vpop.f32.mrf.mxu0
    %v3687 = vadd.f32 %v3604, %v3686
    %v3688 = vpop.f32.mrf.mxu0
    %3689 = vdwg.mxu0
    %v3690 = vmax.f32 %v3672, 0.0
    %v3691 = vmax.f32 %v3677, 0.0
    %v3692 = vmax.f32 %v3682, 0.0
    %v3693 = vmax.f32 %v3687, 0.0
    %v3694 = vmul.f32 %v2640, %v3690
    %v3695 = vmul.f32 %v2641, %v3691
    %v3696 = vmul.f32 %v2642, %v3692
    %v3697 = vmul.f32 %v2643, %v3693
    %v3698 = vld [vmem:[#allocation2 + $0x1100] sm:$0xff]
    %v3699 = vld [vmem:[#allocation2 + $0x1108] sm:$0xff]
    %v3700 = vld [vmem:[#allocation2 + $0x1110] sm:$0xff]
    %v3701 = vld [vmem:[#allocation2 + $0x1118] sm:$0xff]
    %v3702 = vld [vmem:[#allocation2 + $0x1120] sm:$0xff]
    %v3703 = vld [vmem:[#allocation2 + $0x1128] sm:$0xff]
    %v3704 = vld [vmem:[#allocation2 + $0x1130] sm:$0xff]
    %v3705 = vld [vmem:[#allocation2 + $0x1138] sm:$0xff]
    %v3706 = vld [vmem:[#allocation2 + $0x1140] sm:$0xff]
    %v3707 = vld [vmem:[#allocation2 + $0x1148] sm:$0xff]
    %v3708 = vld [vmem:[#allocation2 + $0x1150] sm:$0xff]
    %v3709 = vld [vmem:[#allocation2 + $0x1158] sm:$0xff]
    %v3710 = vld [vmem:[#allocation2 + $0x1160] sm:$0xff]
    %v3711 = vld [vmem:[#allocation2 + $0x1168] sm:$0xff]
    %v3712 = vld [vmem:[#allocation2 + $0x1170] sm:$0xff]
    %v3713 = vld [vmem:[#allocation2 + $0x1178] sm:$0xff]
    %v3714 = vld [vmem:[#allocation4 + $0xc] sm:$0x1]
    %v3715 = vlaneseq
    %v3716 = vshrl.u32 %v3715, 7
    %v3717 = vsub.s32 0, %v3716
    %v3718 = vrot.slane %v3714, %v3717
    %3719 = vmatprep.subr.mxu0 0.0
    %3720 = vmatpush1.msra.mxu0 %v3713
    %3721 = vmatprep.subr.mxu0 0.0
    %3722 = vmatpush1.msra.mxu0 %v3712
    %3723 = vmatprep.subr.mxu0 0.0
    %3724 = vmatpush1.msra.mxu0 %v3711
    %3725 = vmatprep.subr.mxu0 0.0
    %3726 = vmatpush1.msra.mxu0 %v3710
    %3727 = vmatprep.subr.mxu0 0.0
    %3728 = vmatpush1.msra.mxu0 %v3709
    %3729 = vmatprep.subr.mxu0 0.0
    %3730 = vmatpush1.msra.mxu0 %v3708
    %3731 = vmatprep.subr.mxu0 0.0
    %3732 = vmatpush1.msra.mxu0 %v3707
    %3733 = vmatprep.subr.mxu0 0.0
    %3734 = vmatpush1.msra.mxu0 %v3706
    %3735 = vmatprep.subr.mxu0 0.0
    %3736 = vmatpush1.msra.mxu0 %v3705
    %3737 = vmatprep.subr.mxu0 0.0
    %3738 = vmatpush1.msra.mxu0 %v3704
    %3739 = vmatprep.subr.mxu0 0.0
    %3740 = vmatpush1.msra.mxu0 %v3703
    %3741 = vmatprep.subr.mxu0 0.0
    %3742 = vmatpush1.msra.mxu0 %v3702
    %3743 = vmatprep.subr.mxu0 0.0
    %3744 = vmatpush1.msra.mxu0 %v3701
    %3745 = vmatprep.subr.mxu0 0.0
    %3746 = vmatpush1.msra.mxu0 %v3700
    %3747 = vmatprep.subr.mxu0 0.0
    %3748 = vmatpush1.msra.mxu0 %v3699
    %3749 = vmatprep.subr.mxu0 0.0
    %3750 = vmatpush1.msra.mxu0 %v3698
    %3751 = vmatprep.subr.mxu0 0.0
    %3752 = vmatpush2.msra.mxu0 0.0
    %3753 = vmatprep.subr.mxu0 0.0
    %3754 = vmatpush2.msra.mxu0 0.0
    %3755 = vmatprep.subr.mxu0 0.0
    %3756 = vmatpush2.msra.mxu0 0.0
    %3757 = vmatprep.subr.mxu0 0.0
    %3758 = vmatpush2.msra.mxu0 0.0
    %3759 = vmatprep.subr.mxu0 0.0
    %3760 = vmatpush2.msra.mxu0 0.0
    %3761 = vmatprep.subr.mxu0 0.0
    %3762 = vmatpush2.msra.mxu0 0.0
    %3763 = vmatprep.subr.mxu0 0.0
    %3764 = vmatpush2.msra.mxu0 0.0
    %3765 = vmatprep.subr.mxu0 0.0
    %3766 = vmatpush2.msra.mxu0 0.0
    %3767 = vmatprep.subr.mxu0 0.0
    %3768 = vmatpush2.msra.mxu0 0.0
    %3769 = vmatprep.subr.mxu0 0.0
    %3770 = vmatpush2.msra.mxu0 0.0
    %3771 = vmatprep.subr.mxu0 0.0
    %3772 = vmatpush2.msra.mxu0 0.0
    %3773 = vmatprep.subr.mxu0 0.0
    %3774 = vmatpush2.msra.mxu0 0.0
    %3775 = vmatprep.subr.mxu0 0.0
    %3776 = vmatpush2.msra.mxu0 0.0
    %3777 = vmatprep.subr.mxu0 0.0
    %3778 = vmatpush2.msra.mxu0 0.0
    %3779 = vmatprep.subr.mxu0 0.0
    %3780 = vmatpush2.msra.mxu0 0.0
    %3781 = vmatprep.subr.mxu0 0.0
    %3782 = vmatpush2.msra.mxu0 0.0
    %3783 = vmatprep.mubr.f32.mxu0 0.0
    %3784 = vmatmul.mubr.f32.gmra.mxu0 %v3694
    %v3785 = vpop.f32.mrf.mxu0
    %v3786 = vadd.f32 %v3718, %v3785
    %v3787 = vpop.f32.mrf.mxu0
    %3788 = vmatprep.mubr.f32.mxu0 0.0
    %3789 = vmatmul.mubr.f32.gmra.mxu0 %v3695
    %v3790 = vpop.f32.mrf.mxu0
    %v3791 = vadd.f32 %v3718, %v3790
    %v3792 = vpop.f32.mrf.mxu0
    %3793 = vmatprep.mubr.f32.mxu0 0.0
    %3794 = vmatmul.mubr.f32.gmra.mxu0 %v3696
    %v3795 = vpop.f32.mrf.mxu0
    %v3796 = vadd.f32 %v3718, %v3795
    %v3797 = vpop.f32.mrf.mxu0
    %3798 = vmatprep.mubr.f32.mxu0 0.0
    %3799 = vmatmul.mubr.f32.gmra.mxu0 %v3697
    %v3800 = vpop.f32.mrf.mxu0
    %v3801 = vadd.f32 %v3718, %v3800
    %v3802 = vpop.f32.mrf.mxu0
    %3803 = vdwg.mxu0
    %3804 = vst [vmem:[%s7] sm:$0xff] %v3786
    %3805 = vst [vmem:[%s7 + $0x8] sm:$0xff] %v3791
    %3806 = vst [vmem:[%s7 + $0x10] sm:$0xff] %v3796
    %3807 = vst [vmem:[%s7 + $0x18] sm:$0xff] %v3801
    // Predicated region
    $region38: #{forward.1} parent=1 // pred_check
      _
    $region39: #{forward.1} parent=1 // pred_check_branch
      %3809 = sbr.rel (0) target = $region41
    $region40: #{forward.1} parent=1 // pred_region
      _
    $region41: #{forward.1} parent=1 // pred_fallthru
      _
    // Predicated region
    $region42: #{forward.1} parent=1 // pred_check
      _
    $region43: #{forward.1} parent=1 // pred_check_branch
      %3811 = sbr.rel (0) target = $region45
    $region44: #{forward.1} parent=1 // pred_region
      _
    $region45: #{forward.1} parent=1 // pred_fallthru
      _
    %3812 = vsyncpa [#allocation3], 1
    %3813 = vsyncpa [#allocation5], 1

</llo_original>
